<compile_context>
chip_gen: v7x
topology: tpu7x:2x2x1
jax: 0.10.0
libtpu: 0.0.40
codegen_flags: <defaults>
</compile_context>

<pallas_src>
import math

import jax
import jax.numpy as jnp
from jax.experimental import pallas as pl
from jax.experimental.pallas import tpu as pltpu

_LANE = 128
_SUBLANE = 8
_ROWS_CAP = 512          # cap on matmul M (rows per grid step)


def _round_up(x, m):
    return (x + m - 1) // m * m


def _cdiv(a, b):
    return -(-a // b)


def _vmem_capacity_bytes():
    try:
        return int(pltpu.get_tpu_info().vmem_capacity_bytes)
    except Exception:
        return 64 * 1024 * 1024      # conservative fallback (v7x per-TC VMEM)


def _space_to_depth(x, s):
    """(N,H,W,C) -> (N,H//s,W//s,s*s*C); new channel index = (di*s+dj)*C + c."""
    if s == 1:
        return x
    n, h, w, c = x.shape
    x = x.reshape(n, h // s, s, w // s, s, c)
    x = jnp.transpose(x, (0, 1, 3, 2, 4, 5))
    return x.reshape(n, h // s, w // s, s * s * c)


def _pack_weight(w_oihw, stride):
    """(Cout,Cin,k,k) -> (kk*kk*s^2*cin_p, cout_p) bf16, matching the in-kernel
    tap order (a,b) and the space-to-depth channel order (di,dj,c)."""
    cout, cin, k, _ = w_oihw.shape
    s = stride
    kk = _cdiv(k, s)
    cin_p = _round_up(cin, _SUBLANE)
    cout_p = _round_up(cout, _LANE)
    w = jnp.pad(w_oihw, ((0, 0), (0, cin_p - cin),
                         (0, kk * s - k), (0, kk * s - k)))
    w = jnp.transpose(w, (2, 3, 1, 0))               # (kh, kw, cin_p, cout)
    w = w.reshape(kk, s, kk, s, cin_p, cout)         # (a, di, b, dj, c, co)
    w = jnp.transpose(w, (0, 2, 1, 3, 4, 5))         # (a, b, di, dj, c, co)
    w = w.reshape(kk * kk * s * s * cin_p, cout)
    w = jnp.pad(w, ((0, 0), (0, cout_p - cout)))
    return w.astype(jnp.bfloat16)


# ----------------------------------------------------------------------------
# Pallas kernel: in-VMEM im2col tile + ONE fused MXU matmul per grid step
# ----------------------------------------------------------------------------
def _make_conv_kernel(th, wop, kk, cin_tap, cout_pad, relu_output):
    kwin = th + kk - 1
    rows = th * wop

    def kernel(x_ref, w_ref, b_ref, o_ref):
        it = pl.program_id(1)
        r0 = it * th
        # bf16 window of the resident s2d image: (kwin, ws, cin_tap)
        win = x_ref[0, pl.ds(r0, kwin), :, :]
        # Hoist the column shift: kk sublane relayouts instead of kk*kk.
        cols = [win[:, b:b + wop, :] for b in range(kk)]
        taps = []
        for a in range(kk):
            for b in range(kk):
                # leading-axis slice (free) + layout-preserving reshape
                taps.append(cols[b][a:a + th].reshape(rows, cin_tap))
        patch = jnp.concatenate(taps, axis=-1)       # (rows, kk*kk*cin_tap)
        # Single fused matmul over the full K (no per-tap acc round-trips).
        acc = jnp.dot(patch, w_ref[...], preferred_element_type=jnp.float32)
        acc = acc + b_ref[...]                       # (1, cout_pad) broadcast
        if relu_output:
            acc = jnp.maximum(acc, 0.0)              # fused ReLU
        o_ref[...] = acc.reshape(1, th, wop, cout_pad).astype(o_ref.dtype)

    return kernel


def _pick_row_tile(n, ho, wop, ws, kk, cin_tap, cout_pad, k_total,
                   out_item, budget):
    """Largest row tile whose working set fits `budget`, rows capped ~512."""
    limit = max(1, min(ho, _ROWS_CAP // max(wop, 1)))
    th_max = 1
    for th in range(1, limit + 1):
        steps = _cdiv(ho, th)
        rows = th * wop
        kwin = th + kk - 1
        hs_rows = steps * th + kk - 1
        vmem = (hs_rows * ws * cin_tap * 2 * 2        # bf16 image, dbl-buffered
                + k_total * cout_pad * 2 * 2          # bf16 weight, dbl-buffered
                + cout_pad * 4 * 2                    # bias
                + kwin * ws * cin_tap * 2             # window slice value
                + kk * kwin * wop * cin_tap * 2       # kk column-shifted windows
                + rows * k_total * 2                  # im2col patch (bf16)
                + rows * cout_pad * 4                 # f32 matmul result
                + rows * cout_pad * out_item * 2)     # output tile, dbl-buffered
        if vmem <= budget:
            th_max = th
    steps = _cdiv(ho, th_max)
    th = _cdiv(ho, steps)                             # same #steps, minimal row padding
    if n * _cdiv(ho, th) < 2 and ho >= 2:             # keep both v7x TCs busy
        th = _cdiv(ho, 2)
    return th, _cdiv(ho, th)


# ----------------------------------------------------------------------------
# One Conv2d (+ optional fused |.| and ReLU), NHWC activations
# ----------------------------------------------------------------------------
def conv2d_pallas(x_nhwc, w_mat, bias, *, kernel_size, stride, pad,
                  abs_input=False, relu_output=False, out_dtype=None):
    """Conv2d with a pre-packed weight matrix `w_mat` (see _pack_weight).
    Returns (n, ho, wo, cout) with real (unpadded) channel count."""
    n, h, w, c = x_nhwc.shape
    s = stride
    k = kernel_size
    kk = _cdiv(k, s)
    k_total, cout_p = w_mat.shape
    cout = bias.shape[0]
    cin_tap = k_total // (kk * kk)
    cin_p = cin_tap // (s * s)
    out_dtype = out_dtype or x_nhwc.dtype

    ho = (h + 2 * pad - k) // s + 1
    wo = (w + 2 * pad - k) // s + 1
    wop = _round_up(wo, _SUBLANE)                    # sublane-aligned output width

    # ---- HBM prep: |x| + bf16 cast + channel fit + pad + space-to-depth ----
    x = x_nhwc
    if abs_input:
        x = jnp.abs(x)                               # fused into the prep pass
    x = x.astype(jnp.bfloat16)                       # bf16 resident image
    if c > cin_p:                                    # never carry lane padding into K
        x = x[..., :cin_p]
    elif c < cin_p:
        x = jnp.pad(x, ((0, 0), (0, 0), (0, 0), (0, cin_p - c)))
    hp = _round_up(h + 2 * pad, s)
    wp = _round_up(w + 2 * pad, s)
    x = jnp.pad(x, ((0, 0), (pad, hp - h - pad), (pad, wp - w - pad), (0, 0)))
    xs = _space_to_depth(x, s)                       # (n, hs, ws, cin_tap)
    hs, ws = xs.shape[1], xs.shape[2]
    ws_needed = wop + kk - 1
    if ws < ws_needed:
        xs = jnp.pad(xs, ((0, 0), (0, 0), (0, ws_needed - ws), (0, 0)))
        ws = ws_needed

    bias_row = jnp.pad(bias.astype(jnp.float32), (0, cout_p - cout)).reshape(1, cout_p)

    # ---- tiling / compiler params ----
    vmem_cap = _vmem_capacity_bytes()
    vmem_limit = min(int(0.85 * vmem_cap), 100 * 1024 * 1024)
    th, steps = _pick_row_tile(n, ho, wop, ws, kk, cin_tap, cout_p, k_total,
                               jnp.dtype(out_dtype).itemsize,
                               budget=int(0.75 * vmem_limit))
    ho_pad = steps * th
    hs_needed = ho_pad + kk - 1
    if hs < hs_needed:
        xs = jnp.pad(xs, ((0, 0), (0, hs_needed - hs), (0, 0), (0, 0)))
        hs = hs_needed
    # TODO(synk): add a halo-tiled manual-DMA (pltpu.make_async_copy) fallback for
    # images whose bf16 s2d form alone exceeds the VMEM budget (huge latents on
    # v7x's 64 MiB); the whole-image-resident BlockSpec below assumes it fits.

    kernel = _make_conv_kernel(th, wop, kk, cin_tap, cout_p, relu_output)

    cost = pl.CostEstimate(
        flops=2 * n * ho_pad * wop * k_total * cout_p,
        transcendentals=0,
        bytes_accessed=int(xs.size * xs.dtype.itemsize + w_mat.size * 2
                           + bias_row.size * 4
                           + n * ho_pad * wop * cout_p
                           * jnp.dtype(out_dtype).itemsize))

    out = pl.pallas_call(
        kernel,
        out_shape=jax.ShapeDtypeStruct((n, ho_pad, wop, cout_p), out_dtype),
        grid=(n, steps),
        in_specs=[
            # full (padded, s2d, bf16) image of one batch element, resident across row tiles
            pl.BlockSpec((1, hs, ws, cin_tap), lambda nb, it: (nb, 0, 0, 0)),
            pl.BlockSpec((k_total, cout_p), lambda nb, it: (0, 0)),
            pl.BlockSpec((1, cout_p), lambda nb, it: (0, 0)),
        ],
        out_specs=pl.BlockSpec((1, th, wop, cout_p),
                               lambda nb, it: (nb, it, 0, 0)),
        compiler_params=pltpu.CompilerParams(
            dimension_semantics=("parallel", "parallel"),
            vmem_limit_bytes=vmem_limit),
        cost_estimate=cost,
    )(xs, w_mat, bias_row)

    return out[:, :ho, :wo, :cout]                   # drop row / lane padding


# ----------------------------------------------------------------------------
# Parameter init (mirrors torch xavier_normal_ with gain, bias = 0.01)
# ----------------------------------------------------------------------------
def _xavier_normal(key, shape, gain):
    cout, cin, kh, kw = shape
    fan_in = cin * kh * kw
    fan_out = cout * kh * kw
    std = gain * math.sqrt(2.0 / (fan_in + fan_out))
    return std * jax.random.normal(key, shape, dtype=jnp.float32)


def init_params(key, out_channel_N, out_channel_M):
    k1, k2, k3 = jax.random.split(key, 3)
    gain1 = math.sqrt(2 * (out_channel_M + out_channel_N) / (out_channel_M + out_channel_M))
    gain2 = math.sqrt(2.0)
    return {
        "w1": _xavier_normal(k1, (out_channel_N, out_channel_M, 3, 3), gain1),
        "b1": jnp.full((out_channel_N,), 0.01, jnp.float32),
        "w2": _xavier_normal(k2, (out_channel_N, out_channel_N, 5, 5), gain2),
        "b2": jnp.full((out_channel_N,), 0.01, jnp.float32),
        "w3": _xavier_normal(k3, (out_channel_N, out_channel_N, 5, 5), gain2),
        "b3": jnp.full((out_channel_N,), 0.01, jnp.float32),
    }


def pack_params(params):
    """Weight packing hoisted out of the forward path (done once)."""
    return {
        "w1m": _pack_weight(params["w1"], stride=1), "b1": params["b1"],
        "w2m": _pack_weight(params["w2"], stride=2), "b2": params["b2"],
        "w3m": _pack_weight(params["w3"], stride=2), "b3": params["b3"],
    }


# ----------------------------------------------------------------------------
# Full forward: NCHW in, NCHW out (matches the PyTorch module)
# ----------------------------------------------------------------------------
def analysis_prior_net(packed, x_nchw):
    x = jnp.transpose(x_nchw, (0, 2, 3, 1))          # NCHW -> NHWC
    x = conv2d_pallas(x, packed["w1m"], packed["b1"], kernel_size=3, stride=1,
                      pad=1, abs_input=True, relu_output=True,
                      out_dtype=jnp.bfloat16)
    x = conv2d_pallas(x, packed["w2m"], packed["b2"], kernel_size=5, stride=2,
                      pad=2, relu_output=True, out_dtype=jnp.bfloat16)
    x = conv2d_pallas(x, packed["w3m"], packed["b3"], kernel_size=5, stride=2,
                      pad=2, out_dtype=jnp.float32)
    return jnp.transpose(x, (0, 3, 1, 2))            # NHWC -> NCHW


# ----------------------------------------------------------------------------
# Pure-JAX f32 reference (lax.conv) for the correctness check
# ----------------------------------------------------------------------------
def _ref_forward(params, x_nchw):
    dn = ("NCHW", "OIHW", "NCHW")

    def conv(x, w, b, s, p):
        y = jax.lax.conv_general_dilated(x, w, (s, s), [(p, p), (p, p)],
                                         dimension_numbers=dn)
        return y + b.reshape(1, -1, 1, 1)

    x = jnp.abs(x_nchw)
    x = jax.nn.relu(conv(x, params["w1"], params["b1"], 1, 1))
    x = jax.nn.relu(conv(x, params["w2"], params["b2"], 2, 2))
    return conv(x, params["w3"], params["b3"], 2, 2)


if __name__ == "__main__":
    # Small synthetic config: out_channel_M=16 (input channels), out_channel_N=8
    out_channel_N, out_channel_M = 8, 16
    batch, H, W = 2, 32, 32

    key = jax.random.PRNGKey(0)
    kp, kx = jax.random.split(key)
    params = init_params(kp, out_channel_N, out_channel_M)
    packed = pack_params(params)                     # packed once, outside the forward
    x = jax.random.normal(kx, (batch, out_channel_M, H, W), dtype=jnp.float32)

    fwd = jax.jit(analysis_prior_net)
    out = jax.block_until_ready(fwd(packed, x))

    ref = jax.block_until_ready(_ref_forward(params, x))
    assert out.shape == (batch, out_channel_N, H // 4, W // 4), out.shape

    err = float(jnp.max(jnp.abs(out.astype(jnp.float32) - ref)))
    scale = float(jnp.max(jnp.abs(ref)))
    # bf16 operands / bf16 intermediate activations (f32 accumulation) vs f32 reference.
    assert err <= 0.05 * scale + 1e-2, (err, scale)

    print("KERNEL_OK")
</pallas_src>

<mosaic_0001>
module attributes {stable_mosaic.version = 11 : i64} {
  func.func @kernel(%arg0: i32, %arg1: i32, %arg2: memref<1x34x34x16xbf16, #tpu.memory_space<vmem>>, %arg3: memref<144x128xbf16, #tpu.memory_space<vmem>>, %arg4: memref<1x128xf32, #tpu.memory_space<vmem>>, %arg5: memref<1x16x32x128xbf16, #tpu.memory_space<vmem>>) attributes {dimension_semantics = [#tpu.dimension_semantics<parallel>, #tpu.dimension_semantics<parallel>], iteration_bounds = array<i64: 2, 2>, scalar_prefetch = 0 : i64, scratch_operands = 0 : i64, tpu.core_type = #tpu.core_type<tc>, window_params = [{transform_indices = @transform_0, window_bounds = array<i64: 1, 34, 34, 16>}, {pipeline_mode = #tpu.pipeline_mode<synchronous>, transform_indices = @transform_1, window_bounds = array<i64: 144, 128>}, {pipeline_mode = #tpu.pipeline_mode<synchronous>, transform_indices = @transform_2, window_bounds = array<i64: 1, 128>}, {transform_indices = @transform_3, window_bounds = array<i64: 1, 16, 32, 128>}]} {
    %c16_i32 = arith.constant 16 : i32
    %0 = arith.muli %arg1, %c16_i32 : i32
    %c0 = arith.constant 0 : index
    %1 = arith.index_cast %0 : i32 to index
    %c0_0 = arith.constant 0 : index
    %c0_1 = arith.constant 0 : index
    %2 = vector.load %arg2[%c0, %1, %c0_0, %c0_1] : memref<1x34x34x16xbf16, #tpu.memory_space<vmem>>, vector<1x18x34x16xbf16>
    %3 = vector.shape_cast %2 : vector<1x18x34x16xbf16> to vector<18x34x16xbf16>
    %4 = vector.extract_strided_slice %3 {offsets = [0, 0, 0], sizes = [18, 32, 16], strides = [1, 1, 1]} : vector<18x34x16xbf16> to vector<18x32x16xbf16>
    %5 = vector.extract_strided_slice %3 {offsets = [0, 1, 0], sizes = [18, 32, 16], strides = [1, 1, 1]} : vector<18x34x16xbf16> to vector<18x32x16xbf16>
    %6 = vector.extract_strided_slice %3 {offsets = [0, 2, 0], sizes = [18, 32, 16], strides = [1, 1, 1]} : vector<18x34x16xbf16> to vector<18x32x16xbf16>
    %7 = vector.extract_strided_slice %4 {offsets = [0, 0, 0], sizes = [16, 32, 16], strides = [1, 1, 1]} : vector<18x32x16xbf16> to vector<16x32x16xbf16>
    %8 = vector.shape_cast %7 : vector<16x32x16xbf16> to vector<512x16xbf16>
    %9 = vector.extract_strided_slice %5 {offsets = [0, 0, 0], sizes = [16, 32, 16], strides = [1, 1, 1]} : vector<18x32x16xbf16> to vector<16x32x16xbf16>
    %10 = vector.shape_cast %9 : vector<16x32x16xbf16> to vector<512x16xbf16>
    %11 = vector.extract_strided_slice %6 {offsets = [0, 0, 0], sizes = [16, 32, 16], strides = [1, 1, 1]} : vector<18x32x16xbf16> to vector<16x32x16xbf16>
    %12 = vector.shape_cast %11 : vector<16x32x16xbf16> to vector<512x16xbf16>
    %13 = vector.extract_strided_slice %4 {offsets = [1, 0, 0], sizes = [16, 32, 16], strides = [1, 1, 1]} : vector<18x32x16xbf16> to vector<16x32x16xbf16>
    %14 = vector.shape_cast %13 : vector<16x32x16xbf16> to vector<512x16xbf16>
    %15 = vector.extract_strided_slice %5 {offsets = [1, 0, 0], sizes = [16, 32, 16], strides = [1, 1, 1]} : vector<18x32x16xbf16> to vector<16x32x16xbf16>
    %16 = vector.shape_cast %15 : vector<16x32x16xbf16> to vector<512x16xbf16>
    %17 = vector.extract_strided_slice %6 {offsets = [1, 0, 0], sizes = [16, 32, 16], strides = [1, 1, 1]} : vector<18x32x16xbf16> to vector<16x32x16xbf16>
    %18 = vector.shape_cast %17 : vector<16x32x16xbf16> to vector<512x16xbf16>
    %19 = vector.extract_strided_slice %4 {offsets = [2, 0, 0], sizes = [16, 32, 16], strides = [1, 1, 1]} : vector<18x32x16xbf16> to vector<16x32x16xbf16>
    %20 = vector.shape_cast %19 : vector<16x32x16xbf16> to vector<512x16xbf16>
    %21 = vector.extract_strided_slice %5 {offsets = [2, 0, 0], sizes = [16, 32, 16], strides = [1, 1, 1]} : vector<18x32x16xbf16> to vector<16x32x16xbf16>
    %22 = vector.shape_cast %21 : vector<16x32x16xbf16> to vector<512x16xbf16>
    %23 = vector.extract_strided_slice %6 {offsets = [2, 0, 0], sizes = [16, 32, 16], strides = [1, 1, 1]} : vector<18x32x16xbf16> to vector<16x32x16xbf16>
    %24 = vector.shape_cast %23 : vector<16x32x16xbf16> to vector<512x16xbf16>
    %25 = tpu.concatenate %8, %10, %12, %14, %16, %18, %20, %22, %24 in 1 : vector<512x16xbf16>, vector<512x16xbf16>, vector<512x16xbf16>, vector<512x16xbf16>, vector<512x16xbf16>, vector<512x16xbf16>, vector<512x16xbf16>, vector<512x16xbf16>, vector<512x16xbf16> -> vector<512x144xbf16>
    %c0_2 = arith.constant 0 : index
    %c0_3 = arith.constant 0 : index
    %26 = vector.load %arg3[%c0_2, %c0_3] : memref<144x128xbf16, #tpu.memory_space<vmem>>, vector<144x128xbf16>
    %cst = arith.constant dense<0.000000e+00> : vector<512x128xf32>
    %27 = tpu.matmul %25, %26, %cst {dimension_numbers = #tpu.dot_dimension_numbers<[1], [0], [0], [1], [0, 0, 1, 1], [], []>} : vector<512x144xbf16>, vector<144x128xbf16>, vector<512x128xf32> -> vector<512x128xf32>
    %c0_4 = arith.constant 0 : index
    %c0_5 = arith.constant 0 : index
    %28 = vector.load %arg4[%c0_4, %c0_5] : memref<1x128xf32, #tpu.memory_space<vmem>>, vector<1x128xf32>
    %29 = vector.broadcast %28 : vector<1x128xf32> to vector<512x128xf32>
    %30 = arith.addf %27, %29 : vector<512x128xf32>
    %cst_6 = arith.constant 0.000000e+00 : f32
    %31 = vector.broadcast %cst_6 : f32 to vector<512x128xf32>
    %32 = arith.maximumf %30, %31 : vector<512x128xf32>
    %33 = vector.shape_cast %32 : vector<512x128xf32> to vector<1x16x32x128xf32>
    %34 = arith.truncf %33 : vector<1x16x32x128xf32> to vector<1x16x32x128xbf16>
    %c0_7 = arith.constant 0 : index
    %c0_8 = arith.constant 0 : index
    %c0_9 = arith.constant 0 : index
    %c0_10 = arith.constant 0 : index
    %35 = vector.load %arg5[%c0_7, %c0_8, %c0_9, %c0_10] : memref<1x16x32x128xbf16, #tpu.memory_space<vmem>>, vector<1x16x32x128xbf16>
    tpu.vector_store %arg5[%c0_7, %c0_8, %c0_9, %c0_10], %34 {strides = array<i32>} : memref<1x16x32x128xbf16, #tpu.memory_space<vmem>>, vector<1x16x32x128xbf16>,
    return
  }
  func.func @transform_0(%arg0: i32, %arg1: i32) -> (i32, i32, i32, i32) {
    %c0_i32 = arith.constant 0 : i32
    %c0_i32_0 = arith.constant 0 : i32
    %c0_i32_1 = arith.constant 0 : i32
    %c0_i32_2 = arith.constant 0 : i32
    return %arg0, %c0_i32, %c0_i32_0, %c0_i32_1 : i32, i32, i32, i32
  }
  func.func @transform_1(%arg0: i32, %arg1: i32) -> (i32, i32) {
    %c0_i32 = arith.constant 0 : i32
    %c0_i32_0 = arith.constant 0 : i32
    %c0_i32_1 = arith.constant 0 : i32
    return %c0_i32, %c0_i32_0 : i32, i32
  }
  func.func @transform_2(%arg0: i32, %arg1: i32) -> (i32, i32) {
    %c0_i32 = arith.constant 0 : i32
    %c0_i32_0 = arith.constant 0 : i32
    %c0_i32_1 = arith.constant 0 : i32
    return %c0_i32, %c0_i32_0 : i32, i32
  }
  func.func @transform_3(%arg0: i32, %arg1: i32) -> (i32, i32, i32, i32) {
    %c0_i32 = arith.constant 0 : i32
    %c0_i32_0 = arith.constant 0 : i32
    %c0_i32_1 = arith.constant 0 : i32
    return %arg0, %arg1, %c0_i32, %c0_i32_0 : i32, i32, i32, i32
  }
}

module attributes {stable_mosaic.version = 11 : i64} {
  func.func @kernel(%arg0: i32, %arg1: i32, %arg2: memref<1x18x18x32xbf16, #tpu.memory_space<vmem>>, %arg3: memref<288x128xbf16, #tpu.memory_space<vmem>>, %arg4: memref<1x128xf32, #tpu.memory_space<vmem>>, %arg5: memref<1x16x16x128xbf16, #tpu.memory_space<vmem>>) attributes {dimension_semantics = [#tpu.dimension_semantics<parallel>, #tpu.dimension_semantics<parallel>], iteration_bounds = array<i64: 2, 1>, scalar_prefetch = 0 : i64, scratch_operands = 0 : i64, tpu.core_type = #tpu.core_type<tc>, window_params = [{transform_indices = @transform_0, window_bounds = array<i64: 1, 18, 18, 32>}, {pipeline_mode = #tpu.pipeline_mode<synchronous>, transform_indices = @transform_1, window_bounds = array<i64: 288, 128>}, {pipeline_mode = #tpu.pipeline_mode<synchronous>, transform_indices = @transform_2, window_bounds = array<i64: 1, 128>}, {transform_indices = @transform_3, window_bounds = array<i64: 1, 16, 16, 128>}]} {
    %c16_i32 = arith.constant 16 : i32
    %0 = arith.muli %arg1, %c16_i32 : i32
    %c0 = arith.constant 0 : index
    %1 = arith.index_cast %0 : i32 to index
    %c0_0 = arith.constant 0 : index
    %c0_1 = arith.constant 0 : index
    %2 = vector.load %arg2[%c0, %1, %c0_0, %c0_1] : memref<1x18x18x32xbf16, #tpu.memory_space<vmem>>, vector<1x18x18x32xbf16>
    %3 = vector.shape_cast %2 : vector<1x18x18x32xbf16> to vector<18x18x32xbf16>
    %4 = vector.extract_strided_slice %3 {offsets = [0, 0, 0], sizes = [18, 16, 32], strides = [1, 1, 1]} : vector<18x18x32xbf16> to vector<18x16x32xbf16>
    %5 = vector.extract_strided_slice %3 {offsets = [0, 1, 0], sizes = [18, 16, 32], strides = [1, 1, 1]} : vector<18x18x32xbf16> to vector<18x16x32xbf16>
    %6 = vector.extract_strided_slice %3 {offsets = [0, 2, 0], sizes = [18, 16, 32], strides = [1, 1, 1]} : vector<18x18x32xbf16> to vector<18x16x32xbf16>
    %7 = vector.extract_strided_slice %4 {offsets = [0, 0, 0], sizes = [16, 16, 32], strides = [1, 1, 1]} : vector<18x16x32xbf16> to vector<16x16x32xbf16>
    %8 = vector.shape_cast %7 : vector<16x16x32xbf16> to vector<256x32xbf16>
    %9 = vector.extract_strided_slice %5 {offsets = [0, 0, 0], sizes = [16, 16, 32], strides = [1, 1, 1]} : vector<18x16x32xbf16> to vector<16x16x32xbf16>
    %10 = vector.shape_cast %9 : vector<16x16x32xbf16> to vector<256x32xbf16>
    %11 = vector.extract_strided_slice %6 {offsets = [0, 0, 0], sizes = [16, 16, 32], strides = [1, 1, 1]} : vector<18x16x32xbf16> to vector<16x16x32xbf16>
    %12 = vector.shape_cast %11 : vector<16x16x32xbf16> to vector<256x32xbf16>
    %13 = vector.extract_strided_slice %4 {offsets = [1, 0, 0], sizes = [16, 16, 32], strides = [1, 1, 1]} : vector<18x16x32xbf16> to vector<16x16x32xbf16>
    %14 = vector.shape_cast %13 : vector<16x16x32xbf16> to vector<256x32xbf16>
    %15 = vector.extract_strided_slice %5 {offsets = [1, 0, 0], sizes = [16, 16, 32], strides = [1, 1, 1]} : vector<18x16x32xbf16> to vector<16x16x32xbf16>
    %16 = vector.shape_cast %15 : vector<16x16x32xbf16> to vector<256x32xbf16>
    %17 = vector.extract_strided_slice %6 {offsets = [1, 0, 0], sizes = [16, 16, 32], strides = [1, 1, 1]} : vector<18x16x32xbf16> to vector<16x16x32xbf16>
    %18 = vector.shape_cast %17 : vector<16x16x32xbf16> to vector<256x32xbf16>
    %19 = vector.extract_strided_slice %4 {offsets = [2, 0, 0], sizes = [16, 16, 32], strides = [1, 1, 1]} : vector<18x16x32xbf16> to vector<16x16x32xbf16>
    %20 = vector.shape_cast %19 : vector<16x16x32xbf16> to vector<256x32xbf16>
    %21 = vector.extract_strided_slice %5 {offsets = [2, 0, 0], sizes = [16, 16, 32], strides = [1, 1, 1]} : vector<18x16x32xbf16> to vector<16x16x32xbf16>
    %22 = vector.shape_cast %21 : vector<16x16x32xbf16> to vector<256x32xbf16>
    %23 = vector.extract_strided_slice %6 {offsets = [2, 0, 0], sizes = [16, 16, 32], strides = [1, 1, 1]} : vector<18x16x32xbf16> to vector<16x16x32xbf16>
    %24 = vector.shape_cast %23 : vector<16x16x32xbf16> to vector<256x32xbf16>
    %25 = tpu.concatenate %8, %10, %12, %14, %16, %18, %20, %22, %24 in 1 : vector<256x32xbf16>, vector<256x32xbf16>, vector<256x32xbf16>, vector<256x32xbf16>, vector<256x32xbf16>, vector<256x32xbf16>, vector<256x32xbf16>, vector<256x32xbf16>, vector<256x32xbf16> -> vector<256x288xbf16>
    %c0_2 = arith.constant 0 : index
    %c0_3 = arith.constant 0 : index
    %26 = vector.load %arg3[%c0_2, %c0_3] : memref<288x128xbf16, #tpu.memory_space<vmem>>, vector<288x128xbf16>
    %cst = arith.constant dense<0.000000e+00> : vector<256x128xf32>
    %27 = tpu.matmul %25, %26, %cst {dimension_numbers = #tpu.dot_dimension_numbers<[1], [0], [0], [1], [0, 0, 1, 1], [], []>} : vector<256x288xbf16>, vector<288x128xbf16>, vector<256x128xf32> -> vector<256x128xf32>
    %c0_4 = arith.constant 0 : index
    %c0_5 = arith.constant 0 : index
    %28 = vector.load %arg4[%c0_4, %c0_5] : memref<1x128xf32, #tpu.memory_space<vmem>>, vector<1x128xf32>
    %29 = vector.broadcast %28 : vector<1x128xf32> to vector<256x128xf32>
    %30 = arith.addf %27, %29 : vector<256x128xf32>
    %cst_6 = arith.constant 0.000000e+00 : f32
    %31 = vector.broadcast %cst_6 : f32 to vector<256x128xf32>
    %32 = arith.maximumf %30, %31 : vector<256x128xf32>
    %33 = vector.shape_cast %32 : vector<256x128xf32> to vector<1x16x16x128xf32>
    %34 = arith.truncf %33 : vector<1x16x16x128xf32> to vector<1x16x16x128xbf16>
    %c0_7 = arith.constant 0 : index
    %c0_8 = arith.constant 0 : index
    %c0_9 = arith.constant 0 : index
    %c0_10 = arith.constant 0 : index
    %35 = vector.load %arg5[%c0_7, %c0_8, %c0_9, %c0_10] : memref<1x16x16x128xbf16, #tpu.memory_space<vmem>>, vector<1x16x16x128xbf16>
    tpu.vector_store %arg5[%c0_7, %c0_8, %c0_9, %c0_10], %34 {strides = array<i32>} : memref<1x16x16x128xbf16, #tpu.memory_space<vmem>>, vector<1x16x16x128xbf16>,
    return
  }
  func.func @transform_0(%arg0: i32, %arg1: i32) -> (i32, i32, i32, i32) {
    %c0_i32 = arith.constant 0 : i32
    %c0_i32_0 = arith.constant 0 : i32
    %c0_i32_1 = arith.constant 0 : i32
    %c0_i32_2 = arith.constant 0 : i32
    return %arg0, %c0_i32, %c0_i32_0, %c0_i32_1 : i32, i32, i32, i32
  }
  func.func @transform_1(%arg0: i32, %arg1: i32) -> (i32, i32) {
    %c0_i32 = arith.constant 0 : i32
    %c0_i32_0 = arith.constant 0 : i32
    %c0_i32_1 = arith.constant 0 : i32
    return %c0_i32, %c0_i32_0 : i32, i32
  }
  func.func @transform_2(%arg0: i32, %arg1: i32) -> (i32, i32) {
    %c0_i32 = arith.constant 0 : i32
    %c0_i32_0 = arith.constant 0 : i32
    %c0_i32_1 = arith.constant 0 : i32
    return %c0_i32, %c0_i32_0 : i32, i32
  }
  func.func @transform_3(%arg0: i32, %arg1: i32) -> (i32, i32, i32, i32) {
    %c0_i32 = arith.constant 0 : i32
    %c0_i32_0 = arith.constant 0 : i32
    %c0_i32_1 = arith.constant 0 : i32
    return %arg0, %arg1, %c0_i32, %c0_i32_0 : i32, i32, i32, i32
  }
}

module attributes {stable_mosaic.version = 11 : i64} {
  func.func @kernel(%arg0: i32, %arg1: i32, %arg2: memref<1x10x10x32xbf16, #tpu.memory_space<vmem>>, %arg3: memref<288x128xbf16, #tpu.memory_space<vmem>>, %arg4: memref<1x128xf32, #tpu.memory_space<vmem>>, %arg5: memref<1x8x8x128xf32, #tpu.memory_space<vmem>>) attributes {dimension_semantics = [#tpu.dimension_semantics<parallel>, #tpu.dimension_semantics<parallel>], iteration_bounds = array<i64: 2, 1>, scalar_prefetch = 0 : i64, scratch_operands = 0 : i64, tpu.core_type = #tpu.core_type<tc>, window_params = [{transform_indices = @transform_0, window_bounds = array<i64: 1, 10, 10, 32>}, {pipeline_mode = #tpu.pipeline_mode<synchronous>, transform_indices = @transform_1, window_bounds = array<i64: 288, 128>}, {pipeline_mode = #tpu.pipeline_mode<synchronous>, transform_indices = @transform_2, window_bounds = array<i64: 1, 128>}, {transform_indices = @transform_3, window_bounds = array<i64: 1, 8, 8, 128>}]} {
    %c8_i32 = arith.constant 8 : i32
    %0 = arith.muli %arg1, %c8_i32 : i32
    %c0 = arith.constant 0 : index
    %1 = arith.index_cast %0 : i32 to index
    %c0_0 = arith.constant 0 : index
    %c0_1 = arith.constant 0 : index
    %2 = vector.load %arg2[%c0, %1, %c0_0, %c0_1] : memref<1x10x10x32xbf16, #tpu.memory_space<vmem>>, vector<1x10x10x32xbf16>
    %3 = vector.shape_cast %2 : vector<1x10x10x32xbf16> to vector<10x10x32xbf16>
    %4 = vector.extract_strided_slice %3 {offsets = [0, 0, 0], sizes = [10, 8, 32], strides = [1, 1, 1]} : vector<10x10x32xbf16> to vector<10x8x32xbf16>
    %5 = vector.extract_strided_slice %3 {offsets = [0, 1, 0], sizes = [10, 8, 32], strides = [1, 1, 1]} : vector<10x10x32xbf16> to vector<10x8x32xbf16>
    %6 = vector.extract_strided_slice %3 {offsets = [0, 2, 0], sizes = [10, 8, 32], strides = [1, 1, 1]} : vector<10x10x32xbf16> to vector<10x8x32xbf16>
    %7 = vector.extract_strided_slice %4 {offsets = [0, 0, 0], sizes = [8, 8, 32], strides = [1, 1, 1]} : vector<10x8x32xbf16> to vector<8x8x32xbf16>
    %8 = vector.shape_cast %7 : vector<8x8x32xbf16> to vector<64x32xbf16>
    %9 = vector.extract_strided_slice %5 {offsets = [0, 0, 0], sizes = [8, 8, 32], strides = [1, 1, 1]} : vector<10x8x32xbf16> to vector<8x8x32xbf16>
    %10 = vector.shape_cast %9 : vector<8x8x32xbf16> to vector<64x32xbf16>
    %11 = vector.extract_strided_slice %6 {offsets = [0, 0, 0], sizes = [8, 8, 32], strides = [1, 1, 1]} : vector<10x8x32xbf16> to vector<8x8x32xbf16>
    %12 = vector.shape_cast %11 : vector<8x8x32xbf16> to vector<64x32xbf16>
    %13 = vector.extract_strided_slice %4 {offsets = [1, 0, 0], sizes = [8, 8, 32], strides = [1, 1, 1]} : vector<10x8x32xbf16> to vector<8x8x32xbf16>
    %14 = vector.shape_cast %13 : vector<8x8x32xbf16> to vector<64x32xbf16>
    %15 = vector.extract_strided_slice %5 {offsets = [1, 0, 0], sizes = [8, 8, 32], strides = [1, 1, 1]} : vector<10x8x32xbf16> to vector<8x8x32xbf16>
    %16 = vector.shape_cast %15 : vector<8x8x32xbf16> to vector<64x32xbf16>
    %17 = vector.extract_strided_slice %6 {offsets = [1, 0, 0], sizes = [8, 8, 32], strides = [1, 1, 1]} : vector<10x8x32xbf16> to vector<8x8x32xbf16>
    %18 = vector.shape_cast %17 : vector<8x8x32xbf16> to vector<64x32xbf16>
    %19 = vector.extract_strided_slice %4 {offsets = [2, 0, 0], sizes = [8, 8, 32], strides = [1, 1, 1]} : vector<10x8x32xbf16> to vector<8x8x32xbf16>
    %20 = vector.shape_cast %19 : vector<8x8x32xbf16> to vector<64x32xbf16>
    %21 = vector.extract_strided_slice %5 {offsets = [2, 0, 0], sizes = [8, 8, 32], strides = [1, 1, 1]} : vector<10x8x32xbf16> to vector<8x8x32xbf16>
    %22 = vector.shape_cast %21 : vector<8x8x32xbf16> to vector<64x32xbf16>
    %23 = vector.extract_strided_slice %6 {offsets = [2, 0, 0], sizes = [8, 8, 32], strides = [1, 1, 1]} : vector<10x8x32xbf16> to vector<8x8x32xbf16>
    %24 = vector.shape_cast %23 : vector<8x8x32xbf16> to vector<64x32xbf16>
    %25 = tpu.concatenate %8, %10, %12, %14, %16, %18, %20, %22, %24 in 1 : vector<64x32xbf16>, vector<64x32xbf16>, vector<64x32xbf16>, vector<64x32xbf16>, vector<64x32xbf16>, vector<64x32xbf16>, vector<64x32xbf16>, vector<64x32xbf16>, vector<64x32xbf16> -> vector<64x288xbf16>
    %c0_2 = arith.constant 0 : index
    %c0_3 = arith.constant 0 : index
    %26 = vector.load %arg3[%c0_2, %c0_3] : memref<288x128xbf16, #tpu.memory_space<vmem>>, vector<288x128xbf16>
    %cst = arith.constant dense<0.000000e+00> : vector<64x128xf32>
    %27 = tpu.matmul %25, %26, %cst {dimension_numbers = #tpu.dot_dimension_numbers<[1], [0], [0], [1], [0, 0, 1, 1], [], []>} : vector<64x288xbf16>, vector<288x128xbf16>, vector<64x128xf32> -> vector<64x128xf32>
    %c0_4 = arith.constant 0 : index
    %c0_5 = arith.constant 0 : index
    %28 = vector.load %arg4[%c0_4, %c0_5] : memref<1x128xf32, #tpu.memory_space<vmem>>, vector<1x128xf32>
    %29 = vector.broadcast %28 : vector<1x128xf32> to vector<64x128xf32>
    %30 = arith.addf %27, %29 : vector<64x128xf32>
    %31 = vector.shape_cast %30 : vector<64x128xf32> to vector<1x8x8x128xf32>
    %c0_6 = arith.constant 0 : index
    %c0_7 = arith.constant 0 : index
    %c0_8 = arith.constant 0 : index
    %c0_9 = arith.constant 0 : index
    %32 = vector.load %arg5[%c0_6, %c0_7, %c0_8, %c0_9] : memref<1x8x8x128xf32, #tpu.memory_space<vmem>>, vector<1x8x8x128xf32>
    tpu.vector_store %arg5[%c0_6, %c0_7, %c0_8, %c0_9], %31 {strides = array<i32>} : memref<1x8x8x128xf32, #tpu.memory_space<vmem>>, vector<1x8x8x128xf32>,
    return
  }
  func.func @transform_0(%arg0: i32, %arg1: i32) -> (i32, i32, i32, i32) {
    %c0_i32 = arith.constant 0 : i32
    %c0_i32_0 = arith.constant 0 : i32
    %c0_i32_1 = arith.constant 0 : i32
    %c0_i32_2 = arith.constant 0 : i32
    return %arg0, %c0_i32, %c0_i32_0, %c0_i32_1 : i32, i32, i32, i32
  }
  func.func @transform_1(%arg0: i32, %arg1: i32) -> (i32, i32) {
    %c0_i32 = arith.constant 0 : i32
    %c0_i32_0 = arith.constant 0 : i32
    %c0_i32_1 = arith.constant 0 : i32
    return %c0_i32, %c0_i32_0 : i32, i32
  }
  func.func @transform_2(%arg0: i32, %arg1: i32) -> (i32, i32) {
    %c0_i32 = arith.constant 0 : i32
    %c0_i32_0 = arith.constant 0 : i32
    %c0_i32_1 = arith.constant 0 : i32
    return %c0_i32, %c0_i32_0 : i32, i32
  }
  func.func @transform_3(%arg0: i32, %arg1: i32) -> (i32, i32, i32, i32) {
    %c0_i32 = arith.constant 0 : i32
    %c0_i32_0 = arith.constant 0 : i32
    %c0_i32_1 = arith.constant 0 : i32
    return %arg0, %arg1, %c0_i32, %c0_i32_0 : i32, i32, i32, i32
  }
}

</mosaic_0001>

<llo_original>
// kernel: analysis_prior_net.3
$region0: #{analysis_prior_net.3}
  #allocation0 [shape = 'u32[]', space=smem, size = 0x4, offset = 0x4, fixed_abs, tag = 'smem constant byte address 0x4 - core index']
  #allocation1 [shape = 'u32[144,128]{1,0:T(1,128)}', space=vmem, size = 0x12000, scoped, tag = 'internal scratch']
  %s0 = inlined_call_operand.vmem [shape: bf16[2,34,34,16], index: 0, kind: input, shape index: {}]
  %s1 = inlined_call_operand.vmem [shape: bf16[144,128], index: 1, kind: input, shape index: {}]
  %s2 = inlined_call_operand.vmem [shape: f32[1,128], index: 2, kind: input, shape index: {}]
  %s3 = inlined_call_operand.vmem [shape: bf16[2,32,32,128], index: 3, kind: output, shape index: {}]
  %s4 = sld [smem:[#allocation0]]
  $region45: #{analysis_prior_net.3} parent=0
    _
  %s6 = ssub.s32 1, %s4
  %s7 = scalar_select 0, %s6, %s4
  loop: start=0, step=1, limit=6
  $region2: #{analysis_prior_net.3} parent=0 // loop_pre_header
    _
  $region3: #{analysis_prior_net.3} parent=0 // loop_header
    %s9 = sphi 0, %s13
    %p10 = scmp.ge.s32.totalorder %s9, 6
    %s16 = sphi 0, %s28
    %s17 = sphi 0, %s24
    %s18 = sphi 0, %s16
    %s19 = sphi 0, %s17
    %s20 = sphi 0, %s18
    %s21 = sphi 0, %s19
    %s31 = sphi 0, %s33
    %s34 = sphi 0, %s31
    %s35 = sphi 0, %s34
    %s51 = sphi 0, %s35
    %s55 = sphi 0, %s55
    %s57 = sphi 0, %s55
    %s58 = sphi 0, %s57
    %s72 = sphi 0, %s58
    %s76 = sphi 0, %s76
    %s78 = sphi 0, %s76
    %s79 = sphi 0, %s78
    %s93 = sphi 0, %s79
    %s101 = sphi 0, %s103
    %s104 = sphi 0, %s101
    %s105 = sphi 0, %s104
    %s121 = sphi 0, %s105
  $region4: #{analysis_prior_net.3} parent=0 // loop_header_branch
    %12 = sbr.rel (%p10) target = $region8
  $region5: #{analysis_prior_net.3} parent=0 // loop_body
    %s14 = ssub.s32 %s9, 1
    %s15 = ssub.s32 %s9, 2
    %s22 = sadd.s32 1, %s17
    %p23 = scmp.ge.s32.totalorder %s22, 2
    %s24 = scalar_select %p23, 0, %s22
    %s25 = sadd.s32 1, %s16
    %s26 = scalar_select %p23, %s25, %s16
    %p27 = scmp.ge.s32.totalorder %s26, 2
    %s28 = scalar_select %p27, 0, %s26
    %s29 = ssub.s32 %s16, %s28
    %p30 = scmp.eq.s32.totalorder %s29, 0
    %s32 = sadd.s32 %s31, 1
    %s33 = scalar_select %p30, %s31, %s32
    %p36 = pneg %p30
    %p37 = scmp.eq.s32.totalorder %s9, 3
    %p38 = por %p36, %p37
    %p39 = scmp.ne.s32.totalorder %s31, %s34
    %p40 = scmp.eq.s32.totalorder %s9, 0
    %p41 = por %p39, %p40
    %p42 = scmp.ne.s32.totalorder %s31, %s34
    %p43 = scmp.eq.s32.totalorder %s14, 3
    %p44 = por %p42, %p43
    %p45 = scmp.ne.s32.totalorder %s34, %s35
    %p46 = scmp.eq.s32.totalorder %s14, 0
    %p47 = por %p45, %p46
    %p48 = scmp.ne.s32.totalorder %s34, %s35
    %p49 = scmp.eq.s32.totalorder %s15, 3
    %p50 = por %p48, %p49
    %p52 = scmp.ne.s32.totalorder %s35, %s51
    %p53 = scmp.eq.s32.totalorder %s15, 0
    %p54 = por %p52, %p53
    %s56 = sadd.s32 %s55, 1
    %p59 = scmp.eq.s32.totalorder %s9, 3
    %p60 = scmp.ne.s32.totalorder %s55, %s57
    %p61 = scmp.eq.s32.totalorder %s9, 0
    %p62 = por %p60, %p61
    %p63 = scmp.ne.s32.totalorder %s55, %s57
    %p64 = scmp.eq.s32.totalorder %s14, 3
    %p65 = por %p63, %p64
    %p66 = scmp.ne.s32.totalorder %s57, %s58
    %p67 = scmp.eq.s32.totalorder %s14, 0
    %p68 = por %p66, %p67
    %p69 = scmp.ne.s32.totalorder %s57, %s58
    %p70 = scmp.eq.s32.totalorder %s15, 3
    %p71 = por %p69, %p70
    %p73 = scmp.ne.s32.totalorder %s58, %s72
    %p74 = scmp.eq.s32.totalorder %s15, 0
    %p75 = por %p73, %p74
    %s77 = sadd.s32 %s76, 1
    %p80 = scmp.eq.s32.totalorder %s9, 3
    %p81 = scmp.ne.s32.totalorder %s76, %s78
    %p82 = scmp.eq.s32.totalorder %s9, 0
    %p83 = por %p81, %p82
    %p84 = scmp.ne.s32.totalorder %s76, %s78
    %p85 = scmp.eq.s32.totalorder %s14, 3
    %p86 = por %p84, %p85
    %p87 = scmp.ne.s32.totalorder %s78, %s79
    %p88 = scmp.eq.s32.totalorder %s14, 0
    %p89 = por %p87, %p88
    %p90 = scmp.ne.s32.totalorder %s78, %s79
    %p91 = scmp.eq.s32.totalorder %s15, 3
    %p92 = por %p90, %p91
    %p94 = scmp.ne.s32.totalorder %s79, %s93
    %p95 = scmp.eq.s32.totalorder %s15, 0
    %p96 = por %p94, %p95
    %s97 = ssub.s32 %s16, %s28
    %s98 = ssub.s32 %s17, %s24
    %s99 = sor.u32 %s97, %s98
    %p100 = scmp.eq.s32.totalorder %s99, 0
    %s102 = sadd.s32 %s101, 1
    %s103 = scalar_select %p100, %s101, %s102
    %p106 = pneg %p100
    %p107 = scmp.eq.s32.totalorder %s9, 3
    %p108 = por %p106, %p107
    %p109 = scmp.ne.s32.totalorder %s101, %s104
    %p110 = scmp.eq.s32.totalorder %s9, 0
    %p111 = por %p109, %p110
    %p112 = scmp.ne.s32.totalorder %s101, %s104
    %p113 = scmp.eq.s32.totalorder %s14, 3
    %p114 = por %p112, %p113
    %p115 = scmp.ne.s32.totalorder %s104, %s105
    %p116 = scmp.eq.s32.totalorder %s14, 0
    %p117 = por %p115, %p116
    %p118 = scmp.ne.s32.totalorder %s104, %s105
    %p119 = scmp.eq.s32.totalorder %s15, 3
    %p120 = por %p118, %p119
    %p122 = scmp.ne.s32.totalorder %s105, %s121
    %p123 = scmp.eq.s32.totalorder %s15, 0
    %p124 = por %p122, %p123
    %p125 = scmp.le.s32.totalorder 1, %s9
    %p126 = scmp.lt.s32.totalorder %s9, 5
    %p127 = pnand %p125, %p126
    %p128 = pneg %p127
    // Predicated region
    $region9: #{analysis_prior_net.3} parent=5 // pred_check
      _
    $region10: #{analysis_prior_net.3} parent=5 // pred_check_branch
      %130 = sbr.rel (%p127) target = $region12
    $region11: #{analysis_prior_net.3} parent=5 // pred_region
      %s131 = ssub.s32 %s9, 1
      // Predicated region
      $region13: #{analysis_prior_net.3} parent=11 // pred_check
        %p132 = pneg %p68
      $region14: #{analysis_prior_net.3} parent=11 // pred_check_branch
        %134 = sbr.rel (%p132) target = $region16
      $region15: #{analysis_prior_net.3} parent=11 // pred_region
        _
      $region16: #{analysis_prior_net.3} parent=11 // pred_fallthru
        _
      // Predicated region
      $region17: #{analysis_prior_net.3} parent=11 // pred_check
        %p135 = pneg %p89
      $region18: #{analysis_prior_net.3} parent=11 // pred_check_branch
        %137 = sbr.rel (%p135) target = $region20
      $region19: #{analysis_prior_net.3} parent=11 // pred_region
        _
      $region20: #{analysis_prior_net.3} parent=11 // pred_fallthru
        _
    $region12: #{analysis_prior_net.3} parent=5 // pred_fallthru
      _
    %p138 = scmp.lt.s32.totalorder %s9, 4
    // Predicated region
    $region21: #{analysis_prior_net.3} parent=5 // pred_check
      %p139 = pneg %p138
    $region22: #{analysis_prior_net.3} parent=5 // pred_check_branch
      %141 = sbr.rel (%p139) target = $region24
    $region23: #{analysis_prior_net.3} parent=5 // pred_region
      // Predicated region
      $region25: #{analysis_prior_net.3} parent=23 // pred_check
        %p142 = pneg %p41
      $region26: #{analysis_prior_net.3} parent=23 // pred_check_branch
        %144 = sbr.rel (%p142) target = $region28
      $region27: #{analysis_prior_net.3} parent=23 // pred_region
        %p145 = scmp.lt.s32.totalorder %s16, 1
        %s146 = scalar_select %p145, %s16, 1
        %s147 = smul.addr %s146, 170
        %s148 = smul.addr %s147, 4
        %s149 = scalar_lea.vmem %s0, %s148
      $region28: #{analysis_prior_net.3} parent=23 // pred_fallthru
        _
    $region24: #{analysis_prior_net.3} parent=5 // pred_fallthru
      _
    %p150 = scmp.le.s32.totalorder 1, %s9
    %p151 = scmp.lt.s32.totalorder %s9, 5
    %p152 = pnand %p150, %p151
    %p153 = pneg %p152
    // Predicated region
    $region29: #{analysis_prior_net.3} parent=5 // pred_check
      _
    $region30: #{analysis_prior_net.3} parent=5 // pred_check_branch
      %155 = sbr.rel (%p152) target = $region32
    $region31: #{analysis_prior_net.3} parent=5 // pred_region
      %s156 = ssub.s32 %s9, 1
      %p157 = scmp.lt.s32.totalorder %s18, 1
      %s158 = scalar_select %p157, %s18, 1
      %s159 = smul.addr %s158, 170
      %s160 = smul.addr %s159, 4
      %s161 = scalar_lea.vmem %s0, %s160
      %p162 = pneg %p47
      %p163 = pneg %p44
      %p164 = pneg %p68
      %p165 = pneg %p65
      %p166 = pneg %p89
      %p167 = pneg %p86
      %p168 = pneg %p117
      %p169 = pneg %p114
      %s170 = smul.u32 16, %s19
      %p171 = scmp.lt.s32.totalorder %s18, 1
      %s172 = scalar_select %p171, %s18, 1
      %p173 = scmp.lt.s32.totalorder %s170, 31
      %s174 = scalar_select %p173, %s170, 31
      %s175 = smul.addr %s174, 4
      %s176 = smul.addr %s172, 128
      %s177 = sadd.s32 %s175, %s176
      %s178 = smul.addr %s177, 4
      %s179 = scalar_lea.vmem %s3, %s178
      %p180 = scmp.lt.s32.totalorder %s18, 1
      %s181 = scalar_select %p180, %s18, 1
      %s182 = smul.addr %s181, 170
      %s183 = smul.addr %s182, 4
      %s184 = scalar_lea.vmem %s0, %s183
      %s185 = smul.u32 16, %s19
      %p186 = scmp.lt.s32.totalorder %s18, 1
      %s187 = scalar_select %p186, %s18, 1
      %p188 = scmp.lt.s32.totalorder %s185, 31
      %s189 = scalar_select %p188, %s185, 31
      %s190 = smul.addr %s189, 4
      %s191 = smul.addr %s187, 128
      %s192 = sadd.s32 %s190, %s191
      %s193 = smul.addr %s192, 4
      %s194 = scalar_lea.vmem %s3, %s193
      %s195 = smul.u32 16, %s19
      %s197 = smul.u32 %s19, 16
      %s198 = smul.u32 %s197, 5
      %s199 = smul.addr %s198, 4
      %s200 = scalar_lea.vmem %s184, %s199
      %v201 = vld [vmem:[%s200] sm:$0xf]
      %v202 = vld [vmem:[%s200 + $0x4] sm:$0xf]
      %v203 = vld [vmem:[%s200 + $0x8] sm:$0xf]
      %v204 = vld [vmem:[%s200 + $0xc] sm:$0xf]
      %v205 = vld [vmem:[%s200 + $0x10] sm:$0x1]
      %v206 = vld [vmem:[%s200 + $0x14] sm:$0xf]
      %v207 = vld [vmem:[%s200 + $0x18] sm:$0xf]
      %v208 = vld [vmem:[%s200 + $0x1c] sm:$0xf]
      %v209 = vld [vmem:[%s200 + $0x20] sm:$0xf]
      %v210 = vld [vmem:[%s200 + $0x24] sm:$0x1]
      %v211 = vld [vmem:[%s200 + $0x28] sm:$0xf]
      %v212 = vld [vmem:[%s200 + $0x2c] sm:$0xf]
      %v213 = vld [vmem:[%s200 + $0x30] sm:$0xf]
      %v214 = vld [vmem:[%s200 + $0x34] sm:$0xf]
      %v215 = vld [vmem:[%s200 + $0x38] sm:$0x1]
      %v216 = vld [vmem:[%s200 + $0x3c] sm:$0xf]
      %v217 = vld [vmem:[%s200 + $0x40] sm:$0xf]
      %v218 = vld [vmem:[%s200 + $0x44] sm:$0xf]
      %v219 = vld [vmem:[%s200 + $0x48] sm:$0xf]
      %v220 = vld [vmem:[%s200 + $0x4c] sm:$0x1]
      %v221 = vld [vmem:[%s200 + $0x50] sm:$0xf]
      %v222 = vld [vmem:[%s200 + $0x54] sm:$0xf]
      %v223 = vld [vmem:[%s200 + $0x58] sm:$0xf]
      %v224 = vld [vmem:[%s200 + $0x5c] sm:$0xf]
      %v225 = vld [vmem:[%s200 + $0x60] sm:$0x1]
      %v226 = vld [vmem:[%s200 + $0x64] sm:$0xf]
      %v227 = vld [vmem:[%s200 + $0x68] sm:$0xf]
      %v228 = vld [vmem:[%s200 + $0x6c] sm:$0xf]
      %v229 = vld [vmem:[%s200 + $0x70] sm:$0xf]
      %v230 = vld [vmem:[%s200 + $0x74] sm:$0x1]
      %v231 = vld [vmem:[%s200 + $0x78] sm:$0xf]
      %v232 = vld [vmem:[%s200 + $0x7c] sm:$0xf]
      %v233 = vld [vmem:[%s200 + $0x80] sm:$0xf]
      %v234 = vld [vmem:[%s200 + $0x84] sm:$0xf]
      %v235 = vld [vmem:[%s200 + $0x88] sm:$0x1]
      %v236 = vld [vmem:[%s200 + $0x8c] sm:$0xf]
      %v237 = vld [vmem:[%s200 + $0x90] sm:$0xf]
      %v238 = vld [vmem:[%s200 + $0x94] sm:$0xf]
      %v239 = vld [vmem:[%s200 + $0x98] sm:$0xf]
      %v240 = vld [vmem:[%s200 + $0x9c] sm:$0x1]
      %v241 = vld [vmem:[%s200 + $0xa0] sm:$0xf]
      %v242 = vld [vmem:[%s200 + $0xa4] sm:$0xf]
      %v243 = vld [vmem:[%s200 + $0xa8] sm:$0xf]
      %v244 = vld [vmem:[%s200 + $0xac] sm:$0xf]
      %v245 = vld [vmem:[%s200 + $0xb0] sm:$0x1]
      %v246 = vld [vmem:[%s200 + $0xb4] sm:$0xf]
      %v247 = vld [vmem:[%s200 + $0xb8] sm:$0xf]
      %v248 = vld [vmem:[%s200 + $0xbc] sm:$0xf]
      %v249 = vld [vmem:[%s200 + $0xc0] sm:$0xf]
      %v250 = vld [vmem:[%s200 + $0xc4] sm:$0x1]
      %v251 = vld [vmem:[%s200 + $0xc8] sm:$0xf]
      %v252 = vld [vmem:[%s200 + $0xcc] sm:$0xf]
      %v253 = vld [vmem:[%s200 + $0xd0] sm:$0xf]
      %v254 = vld [vmem:[%s200 + $0xd4] sm:$0xf]
      %v255 = vld [vmem:[%s200 + $0xd8] sm:$0x1]
      %v256 = vld [vmem:[%s200 + $0xdc] sm:$0xf]
      %v257 = vld [vmem:[%s200 + $0xe0] sm:$0xf]
      %v258 = vld [vmem:[%s200 + $0xe4] sm:$0xf]
      %v259 = vld [vmem:[%s200 + $0xe8] sm:$0xf]
      %v260 = vld [vmem:[%s200 + $0xec] sm:$0x1]
      %v261 = vld [vmem:[%s200 + $0xf0] sm:$0xf]
      %v262 = vld [vmem:[%s200 + $0xf4] sm:$0xf]
      %v263 = vld [vmem:[%s200 + $0xf8] sm:$0xf]
      %v264 = vld [vmem:[%s200 + $0xfc] sm:$0xf]
      %v265 = vld [vmem:[%s200 + $0x100] sm:$0x1]
      %v266 = vld [vmem:[%s200 + $0x104] sm:$0xf]
      %v267 = vld [vmem:[%s200 + $0x108] sm:$0xf]
      %v268 = vld [vmem:[%s200 + $0x10c] sm:$0xf]
      %v269 = vld [vmem:[%s200 + $0x110] sm:$0xf]
      %v270 = vld [vmem:[%s200 + $0x114] sm:$0x1]
      %v271 = vld [vmem:[%s200 + $0x118] sm:$0xf]
      %v272 = vld [vmem:[%s200 + $0x11c] sm:$0xf]
      %v273 = vld [vmem:[%s200 + $0x120] sm:$0xf]
      %v274 = vld [vmem:[%s200 + $0x124] sm:$0xf]
      %v275 = vld [vmem:[%s200 + $0x128] sm:$0x1]
      %v276 = vld [vmem:[%s200 + $0x12c] sm:$0xf]
      %v277 = vld [vmem:[%s200 + $0x130] sm:$0xf]
      %v278 = vld [vmem:[%s200 + $0x134] sm:$0xf]
      %v279 = vld [vmem:[%s200 + $0x138] sm:$0xf]
      %v280 = vld [vmem:[%s200 + $0x13c] sm:$0x1]
      %v281 = vld [vmem:[%s200 + $0x140] sm:$0xf]
      %v282 = vld [vmem:[%s200 + $0x144] sm:$0xf]
      %v283 = vld [vmem:[%s200 + $0x148] sm:$0xf]
      %v284 = vld [vmem:[%s200 + $0x14c] sm:$0xf]
      %v285 = vld [vmem:[%s200 + $0x150] sm:$0x1]
      %v286 = vld [vmem:[%s200 + $0x154] sm:$0xf]
      %v287 = vld [vmem:[%s200 + $0x158] sm:$0xf]
      %v288 = vld [vmem:[%s200 + $0x15c] sm:$0xf]
      %v289 = vld [vmem:[%s200 + $0x160] sm:$0xf]
      %v290 = vld [vmem:[%s200 + $0x164] sm:$0x1]
      %vm291 = vsmask.f32 3328
      %vm292 = vsmask.f32 7440
      %vm293 = vmor %vm291, %vm292
      %v295 = vshrl.u32 %v201, 16
      %v297 = vrot.slane %v295, 4
      %v298 = vshll.u32 %v201, 16
      %v300 = vrot.slane %v298, 5
      %v301 = vor.u32 %v297, %v300
      %v302 = vrot.slane %v301, 4
      %v304 = vshll.u32 %v202, 16
      %v306 = vrot.slane %v304, 5
      %v307 = vsel %vm293, %v302, %v306
      %v308 = vshrl.u32 %v202, 16
      %v310 = vrot.slane %v308, 4
      %v311 = vor.u32 %v310, %v306
      %v312 = vrot.slane %v311, 4
      %v314 = vshll.u32 %v203, 16
      %v316 = vrot.slane %v314, 5
      %v317 = vsel %vm293, %v312, %v316
      %v318 = vshrl.u32 %v203, 16
      %v320 = vrot.slane %v318, 4
      %v321 = vor.u32 %v320, %v316
      %v322 = vrot.slane %v321, 4
      %v324 = vshll.u32 %v204, 16
      %v326 = vrot.slane %v324, 5
      %v327 = vsel %vm293, %v322, %v326
      %v328 = vshrl.u32 %v204, 16
      %v330 = vrot.slane %v328, 4
      %v331 = vor.u32 %v330, %v326
      %v332 = vrot.slane %v331, 4
      %v334 = vshll.u32 %v205, 16
      %v336 = vrot.slane %v334, 5
      %v337 = vsel %vm293, %v332, %v336
      %v339 = vshrl.u32 %v206, 16
      %v341 = vrot.slane %v339, 4
      %v342 = vshll.u32 %v206, 16
      %v344 = vrot.slane %v342, 5
      %v345 = vor.u32 %v341, %v344
      %v346 = vrot.slane %v345, 4
      %v348 = vshll.u32 %v207, 16
      %v350 = vrot.slane %v348, 5
      %v351 = vsel %vm293, %v346, %v350
      %v352 = vshrl.u32 %v207, 16
      %v354 = vrot.slane %v352, 4
      %v355 = vor.u32 %v354, %v350
      %v356 = vrot.slane %v355, 4
      %v358 = vshll.u32 %v208, 16
      %v360 = vrot.slane %v358, 5
      %v361 = vsel %vm293, %v356, %v360
      %v362 = vshrl.u32 %v208, 16
      %v364 = vrot.slane %v362, 4
      %v365 = vor.u32 %v364, %v360
      %v366 = vrot.slane %v365, 4
      %v368 = vshll.u32 %v209, 16
      %v370 = vrot.slane %v368, 5
      %v371 = vsel %vm293, %v366, %v370
      %v372 = vshrl.u32 %v209, 16
      %v374 = vrot.slane %v372, 4
      %v375 = vor.u32 %v374, %v370
      %v376 = vrot.slane %v375, 4
      %v378 = vshll.u32 %v210, 16
      %v380 = vrot.slane %v378, 5
      %v381 = vsel %vm293, %v376, %v380
      %v383 = vshrl.u32 %v211, 16
      %v385 = vrot.slane %v383, 4
      %v386 = vshll.u32 %v211, 16
      %v388 = vrot.slane %v386, 5
      %v389 = vor.u32 %v385, %v388
      %v390 = vrot.slane %v389, 4
      %v392 = vshll.u32 %v212, 16
      %v394 = vrot.slane %v392, 5
      %v395 = vsel %vm293, %v390, %v394
      %v396 = vshrl.u32 %v212, 16
      %v398 = vrot.slane %v396, 4
      %v399 = vor.u32 %v398, %v394
      %v400 = vrot.slane %v399, 4
      %v402 = vshll.u32 %v213, 16
      %v404 = vrot.slane %v402, 5
      %v405 = vsel %vm293, %v400, %v404
      %v406 = vshrl.u32 %v213, 16
      %v408 = vrot.slane %v406, 4
      %v409 = vor.u32 %v408, %v404
      %v410 = vrot.slane %v409, 4
      %v412 = vshll.u32 %v214, 16
      %v414 = vrot.slane %v412, 5
      %v415 = vsel %vm293, %v410, %v414
      %v416 = vshrl.u32 %v214, 16
      %v418 = vrot.slane %v416, 4
      %v419 = vor.u32 %v418, %v414
      %v420 = vrot.slane %v419, 4
      %v422 = vshll.u32 %v215, 16
      %v424 = vrot.slane %v422, 5
      %v425 = vsel %vm293, %v420, %v424
      %v427 = vshrl.u32 %v216, 16
      %v429 = vrot.slane %v427, 4
      %v430 = vshll.u32 %v216, 16
      %v432 = vrot.slane %v430, 5
      %v433 = vor.u32 %v429, %v432
      %v434 = vrot.slane %v433, 4
      %v436 = vshll.u32 %v217, 16
      %v438 = vrot.slane %v436, 5
      %v439 = vsel %vm293, %v434, %v438
      %v440 = vshrl.u32 %v217, 16
      %v442 = vrot.slane %v440, 4
      %v443 = vor.u32 %v442, %v438
      %v444 = vrot.slane %v443, 4
      %v446 = vshll.u32 %v218, 16
      %v448 = vrot.slane %v446, 5
      %v449 = vsel %vm293, %v444, %v448
      %v450 = vshrl.u32 %v218, 16
      %v452 = vrot.slane %v450, 4
      %v453 = vor.u32 %v452, %v448
      %v454 = vrot.slane %v453, 4
      %v456 = vshll.u32 %v219, 16
      %v458 = vrot.slane %v456, 5
      %v459 = vsel %vm293, %v454, %v458
      %v460 = vshrl.u32 %v219, 16
      %v462 = vrot.slane %v460, 4
      %v463 = vor.u32 %v462, %v458
      %v464 = vrot.slane %v463, 4
      %v466 = vshll.u32 %v220, 16
      %v468 = vrot.slane %v466, 5
      %v469 = vsel %vm293, %v464, %v468
      %v471 = vshrl.u32 %v221, 16
      %v473 = vrot.slane %v471, 4
      %v474 = vshll.u32 %v221, 16
      %v476 = vrot.slane %v474, 5
      %v477 = vor.u32 %v473, %v476
      %v478 = vrot.slane %v477, 4
      %v480 = vshll.u32 %v222, 16
      %v482 = vrot.slane %v480, 5
      %v483 = vsel %vm293, %v478, %v482
      %v484 = vshrl.u32 %v222, 16
      %v486 = vrot.slane %v484, 4
      %v487 = vor.u32 %v486, %v482
      %v488 = vrot.slane %v487, 4
      %v490 = vshll.u32 %v223, 16
      %v492 = vrot.slane %v490, 5
      %v493 = vsel %vm293, %v488, %v492
      %v494 = vshrl.u32 %v223, 16
      %v496 = vrot.slane %v494, 4
      %v497 = vor.u32 %v496, %v492
      %v498 = vrot.slane %v497, 4
      %v500 = vshll.u32 %v224, 16
      %v502 = vrot.slane %v500, 5
      %v503 = vsel %vm293, %v498, %v502
      %v504 = vshrl.u32 %v224, 16
      %v506 = vrot.slane %v504, 4
      %v507 = vor.u32 %v506, %v502
      %v508 = vrot.slane %v507, 4
      %v510 = vshll.u32 %v225, 16
      %v512 = vrot.slane %v510, 5
      %v513 = vsel %vm293, %v508, %v512
      %v515 = vshrl.u32 %v226, 16
      %v517 = vrot.slane %v515, 4
      %v518 = vshll.u32 %v226, 16
      %v520 = vrot.slane %v518, 5
      %v521 = vor.u32 %v517, %v520
      %v522 = vrot.slane %v521, 4
      %v524 = vshll.u32 %v227, 16
      %v526 = vrot.slane %v524, 5
      %v527 = vsel %vm293, %v522, %v526
      %v528 = vshrl.u32 %v227, 16
      %v530 = vrot.slane %v528, 4
      %v531 = vor.u32 %v530, %v526
      %v532 = vrot.slane %v531, 4
      %v534 = vshll.u32 %v228, 16
      %v536 = vrot.slane %v534, 5
      %v537 = vsel %vm293, %v532, %v536
      %v538 = vshrl.u32 %v228, 16
      %v540 = vrot.slane %v538, 4
      %v541 = vor.u32 %v540, %v536
      %v542 = vrot.slane %v541, 4
      %v544 = vshll.u32 %v229, 16
      %v546 = vrot.slane %v544, 5
      %v547 = vsel %vm293, %v542, %v546
      %v548 = vshrl.u32 %v229, 16
      %v550 = vrot.slane %v548, 4
      %v551 = vor.u32 %v550, %v546
      %v552 = vrot.slane %v551, 4
      %v554 = vshll.u32 %v230, 16
      %v556 = vrot.slane %v554, 5
      %v557 = vsel %vm293, %v552, %v556
      %v559 = vshrl.u32 %v231, 16
      %v561 = vrot.slane %v559, 4
      %v562 = vshll.u32 %v231, 16
      %v564 = vrot.slane %v562, 5
      %v565 = vor.u32 %v561, %v564
      %v566 = vrot.slane %v565, 4
      %v568 = vshll.u32 %v232, 16
      %v570 = vrot.slane %v568, 5
      %v571 = vsel %vm293, %v566, %v570
      %v572 = vshrl.u32 %v232, 16
      %v574 = vrot.slane %v572, 4
      %v575 = vor.u32 %v574, %v570
      %v576 = vrot.slane %v575, 4
      %v578 = vshll.u32 %v233, 16
      %v580 = vrot.slane %v578, 5
      %v581 = vsel %vm293, %v576, %v580
      %v582 = vshrl.u32 %v233, 16
      %v584 = vrot.slane %v582, 4
      %v585 = vor.u32 %v584, %v580
      %v586 = vrot.slane %v585, 4
      %v588 = vshll.u32 %v234, 16
      %v590 = vrot.slane %v588, 5
      %v591 = vsel %vm293, %v586, %v590
      %v592 = vshrl.u32 %v234, 16
      %v594 = vrot.slane %v592, 4
      %v595 = vor.u32 %v594, %v590
      %v596 = vrot.slane %v595, 4
      %v598 = vshll.u32 %v235, 16
      %v600 = vrot.slane %v598, 5
      %v601 = vsel %vm293, %v596, %v600
      %v603 = vshrl.u32 %v236, 16
      %v605 = vrot.slane %v603, 4
      %v606 = vshll.u32 %v236, 16
      %v608 = vrot.slane %v606, 5
      %v609 = vor.u32 %v605, %v608
      %v610 = vrot.slane %v609, 4
      %v612 = vshll.u32 %v237, 16
      %v614 = vrot.slane %v612, 5
      %v615 = vsel %vm293, %v610, %v614
      %v616 = vshrl.u32 %v237, 16
      %v618 = vrot.slane %v616, 4
      %v619 = vor.u32 %v618, %v614
      %v620 = vrot.slane %v619, 4
      %v622 = vshll.u32 %v238, 16
      %v624 = vrot.slane %v622, 5
      %v625 = vsel %vm293, %v620, %v624
      %v626 = vshrl.u32 %v238, 16
      %v628 = vrot.slane %v626, 4
      %v629 = vor.u32 %v628, %v624
      %v630 = vrot.slane %v629, 4
      %v632 = vshll.u32 %v239, 16
      %v634 = vrot.slane %v632, 5
      %v635 = vsel %vm293, %v630, %v634
      %v636 = vshrl.u32 %v239, 16
      %v638 = vrot.slane %v636, 4
      %v639 = vor.u32 %v638, %v634
      %v640 = vrot.slane %v639, 4
      %v642 = vshll.u32 %v240, 16
      %v644 = vrot.slane %v642, 5
      %v645 = vsel %vm293, %v640, %v644
      %v647 = vshrl.u32 %v241, 16
      %v649 = vrot.slane %v647, 4
      %v650 = vshll.u32 %v241, 16
      %v652 = vrot.slane %v650, 5
      %v653 = vor.u32 %v649, %v652
      %v654 = vrot.slane %v653, 4
      %v656 = vshll.u32 %v242, 16
      %v658 = vrot.slane %v656, 5
      %v659 = vsel %vm293, %v654, %v658
      %v660 = vshrl.u32 %v242, 16
      %v662 = vrot.slane %v660, 4
      %v663 = vor.u32 %v662, %v658
      %v664 = vrot.slane %v663, 4
      %v666 = vshll.u32 %v243, 16
      %v668 = vrot.slane %v666, 5
      %v669 = vsel %vm293, %v664, %v668
      %v670 = vshrl.u32 %v243, 16
      %v672 = vrot.slane %v670, 4
      %v673 = vor.u32 %v672, %v668
      %v674 = vrot.slane %v673, 4
      %v676 = vshll.u32 %v244, 16
      %v678 = vrot.slane %v676, 5
      %v679 = vsel %vm293, %v674, %v678
      %v680 = vshrl.u32 %v244, 16
      %v682 = vrot.slane %v680, 4
      %v683 = vor.u32 %v682, %v678
      %v684 = vrot.slane %v683, 4
      %v686 = vshll.u32 %v245, 16
      %v688 = vrot.slane %v686, 5
      %v689 = vsel %vm293, %v684, %v688
      %v691 = vshrl.u32 %v246, 16
      %v693 = vrot.slane %v691, 4
      %v694 = vshll.u32 %v246, 16
      %v696 = vrot.slane %v694, 5
      %v697 = vor.u32 %v693, %v696
      %v698 = vrot.slane %v697, 4
      %v700 = vshll.u32 %v247, 16
      %v702 = vrot.slane %v700, 5
      %v703 = vsel %vm293, %v698, %v702
      %v704 = vshrl.u32 %v247, 16
      %v706 = vrot.slane %v704, 4
      %v707 = vor.u32 %v706, %v702
      %v708 = vrot.slane %v707, 4
      %v710 = vshll.u32 %v248, 16
      %v712 = vrot.slane %v710, 5
      %v713 = vsel %vm293, %v708, %v712
      %v714 = vshrl.u32 %v248, 16
      %v716 = vrot.slane %v714, 4
      %v717 = vor.u32 %v716, %v712
      %v718 = vrot.slane %v717, 4
      %v720 = vshll.u32 %v249, 16
      %v722 = vrot.slane %v720, 5
      %v723 = vsel %vm293, %v718, %v722
      %v724 = vshrl.u32 %v249, 16
      %v726 = vrot.slane %v724, 4
      %v727 = vor.u32 %v726, %v722
      %v728 = vrot.slane %v727, 4
      %v730 = vshll.u32 %v250, 16
      %v732 = vrot.slane %v730, 5
      %v733 = vsel %vm293, %v728, %v732
      %v735 = vshrl.u32 %v251, 16
      %v737 = vrot.slane %v735, 4
      %v738 = vshll.u32 %v251, 16
      %v740 = vrot.slane %v738, 5
      %v741 = vor.u32 %v737, %v740
      %v742 = vrot.slane %v741, 4
      %v744 = vshll.u32 %v252, 16
      %v746 = vrot.slane %v744, 5
      %v747 = vsel %vm293, %v742, %v746
      %v748 = vshrl.u32 %v252, 16
      %v750 = vrot.slane %v748, 4
      %v751 = vor.u32 %v750, %v746
      %v752 = vrot.slane %v751, 4
      %v754 = vshll.u32 %v253, 16
      %v756 = vrot.slane %v754, 5
      %v757 = vsel %vm293, %v752, %v756
      %v758 = vshrl.u32 %v253, 16
      %v760 = vrot.slane %v758, 4
      %v761 = vor.u32 %v760, %v756
      %v762 = vrot.slane %v761, 4
      %v764 = vshll.u32 %v254, 16
      %v766 = vrot.slane %v764, 5
      %v767 = vsel %vm293, %v762, %v766
      %v768 = vshrl.u32 %v254, 16
      %v770 = vrot.slane %v768, 4
      %v771 = vor.u32 %v770, %v766
      %v772 = vrot.slane %v771, 4
      %v774 = vshll.u32 %v255, 16
      %v776 = vrot.slane %v774, 5
      %v777 = vsel %vm293, %v772, %v776
      %v779 = vshrl.u32 %v256, 16
      %v781 = vrot.slane %v779, 4
      %v782 = vshll.u32 %v256, 16
      %v784 = vrot.slane %v782, 5
      %v785 = vor.u32 %v781, %v784
      %v786 = vrot.slane %v785, 4
      %v788 = vshll.u32 %v257, 16
      %v790 = vrot.slane %v788, 5
      %v791 = vsel %vm293, %v786, %v790
      %v792 = vshrl.u32 %v257, 16
      %v794 = vrot.slane %v792, 4
      %v795 = vor.u32 %v794, %v790
      %v796 = vrot.slane %v795, 4
      %v798 = vshll.u32 %v258, 16
      %v800 = vrot.slane %v798, 5
      %v801 = vsel %vm293, %v796, %v800
      %v802 = vshrl.u32 %v258, 16
      %v804 = vrot.slane %v802, 4
      %v805 = vor.u32 %v804, %v800
      %v806 = vrot.slane %v805, 4
      %v808 = vshll.u32 %v259, 16
      %v810 = vrot.slane %v808, 5
      %v811 = vsel %vm293, %v806, %v810
      %v812 = vshrl.u32 %v259, 16
      %v814 = vrot.slane %v812, 4
      %v815 = vor.u32 %v814, %v810
      %v816 = vrot.slane %v815, 4
      %v818 = vshll.u32 %v260, 16
      %v820 = vrot.slane %v818, 5
      %v821 = vsel %vm293, %v816, %v820
      %v823 = vshrl.u32 %v261, 16
      %v825 = vrot.slane %v823, 4
      %v826 = vshll.u32 %v261, 16
      %v828 = vrot.slane %v826, 5
      %v829 = vor.u32 %v825, %v828
      %v830 = vrot.slane %v829, 4
      %v832 = vshll.u32 %v262, 16
      %v834 = vrot.slane %v832, 5
      %v835 = vsel %vm293, %v830, %v834
      %v836 = vshrl.u32 %v262, 16
      %v838 = vrot.slane %v836, 4
      %v839 = vor.u32 %v838, %v834
      %v840 = vrot.slane %v839, 4
      %v842 = vshll.u32 %v263, 16
      %v844 = vrot.slane %v842, 5
      %v845 = vsel %vm293, %v840, %v844
      %v846 = vshrl.u32 %v263, 16
      %v848 = vrot.slane %v846, 4
      %v849 = vor.u32 %v848, %v844
      %v850 = vrot.slane %v849, 4
      %v852 = vshll.u32 %v264, 16
      %v854 = vrot.slane %v852, 5
      %v855 = vsel %vm293, %v850, %v854
      %v856 = vshrl.u32 %v264, 16
      %v858 = vrot.slane %v856, 4
      %v859 = vor.u32 %v858, %v854
      %v860 = vrot.slane %v859, 4
      %v862 = vshll.u32 %v265, 16
      %v864 = vrot.slane %v862, 5
      %v865 = vsel %vm293, %v860, %v864
      %v867 = vshrl.u32 %v266, 16
      %v869 = vrot.slane %v867, 4
      %v870 = vshll.u32 %v266, 16
      %v872 = vrot.slane %v870, 5
      %v873 = vor.u32 %v869, %v872
      %v874 = vrot.slane %v873, 4
      %v876 = vshll.u32 %v267, 16
      %v878 = vrot.slane %v876, 5
      %v879 = vsel %vm293, %v874, %v878
      %v880 = vshrl.u32 %v267, 16
      %v882 = vrot.slane %v880, 4
      %v883 = vor.u32 %v882, %v878
      %v884 = vrot.slane %v883, 4
      %v886 = vshll.u32 %v268, 16
      %v888 = vrot.slane %v886, 5
      %v889 = vsel %vm293, %v884, %v888
      %v890 = vshrl.u32 %v268, 16
      %v892 = vrot.slane %v890, 4
      %v893 = vor.u32 %v892, %v888
      %v894 = vrot.slane %v893, 4
      %v896 = vshll.u32 %v269, 16
      %v898 = vrot.slane %v896, 5
      %v899 = vsel %vm293, %v894, %v898
      %v900 = vshrl.u32 %v269, 16
      %v902 = vrot.slane %v900, 4
      %v903 = vor.u32 %v902, %v898
      %v904 = vrot.slane %v903, 4
      %v906 = vshll.u32 %v270, 16
      %v908 = vrot.slane %v906, 5
      %v909 = vsel %vm293, %v904, %v908
      %v911 = vshrl.u32 %v271, 16
      %v913 = vrot.slane %v911, 4
      %v914 = vshll.u32 %v271, 16
      %v916 = vrot.slane %v914, 5
      %v917 = vor.u32 %v913, %v916
      %v918 = vrot.slane %v917, 4
      %v920 = vshll.u32 %v272, 16
      %v922 = vrot.slane %v920, 5
      %v923 = vsel %vm293, %v918, %v922
      %v924 = vshrl.u32 %v272, 16
      %v926 = vrot.slane %v924, 4
      %v927 = vor.u32 %v926, %v922
      %v928 = vrot.slane %v927, 4
      %v930 = vshll.u32 %v273, 16
      %v932 = vrot.slane %v930, 5
      %v933 = vsel %vm293, %v928, %v932
      %v934 = vshrl.u32 %v273, 16
      %v936 = vrot.slane %v934, 4
      %v937 = vor.u32 %v936, %v932
      %v938 = vrot.slane %v937, 4
      %v940 = vshll.u32 %v274, 16
      %v942 = vrot.slane %v940, 5
      %v943 = vsel %vm293, %v938, %v942
      %v944 = vshrl.u32 %v274, 16
      %v946 = vrot.slane %v944, 4
      %v947 = vor.u32 %v946, %v942
      %v948 = vrot.slane %v947, 4
      %v950 = vshll.u32 %v275, 16
      %v952 = vrot.slane %v950, 5
      %v953 = vsel %vm293, %v948, %v952
      %v955 = vshrl.u32 %v276, 16
      %v957 = vrot.slane %v955, 4
      %v958 = vshll.u32 %v276, 16
      %v960 = vrot.slane %v958, 5
      %v961 = vor.u32 %v957, %v960
      %v962 = vrot.slane %v961, 4
      %v964 = vshll.u32 %v277, 16
      %v966 = vrot.slane %v964, 5
      %v967 = vsel %vm293, %v962, %v966
      %v968 = vshrl.u32 %v277, 16
      %v970 = vrot.slane %v968, 4
      %v971 = vor.u32 %v970, %v966
      %v972 = vrot.slane %v971, 4
      %v974 = vshll.u32 %v278, 16
      %v976 = vrot.slane %v974, 5
      %v977 = vsel %vm293, %v972, %v976
      %v978 = vshrl.u32 %v278, 16
      %v980 = vrot.slane %v978, 4
      %v981 = vor.u32 %v980, %v976
      %v982 = vrot.slane %v981, 4
      %v984 = vshll.u32 %v279, 16
      %v986 = vrot.slane %v984, 5
      %v987 = vsel %vm293, %v982, %v986
      %v988 = vshrl.u32 %v279, 16
      %v990 = vrot.slane %v988, 4
      %v991 = vor.u32 %v990, %v986
      %v992 = vrot.slane %v991, 4
      %v994 = vshll.u32 %v280, 16
      %v996 = vrot.slane %v994, 5
      %v997 = vsel %vm293, %v992, %v996
      %vm1078 = vcmask 1042432
      %vm1079 = vcmask 1046532
      %vm1080 = vmor %vm1078, %vm1079
      %v1081 = vrot.slane %v201, 5
      %v1082 = vrot.slane %v1081, 4
      %v1083 = vrot.slane %v202, 5
      %v1084 = vsel %vm1080, %v1082, %v1083
      %v1085 = vrot.slane %v1083, 4
      %v1086 = vrot.slane %v203, 5
      %v1087 = vsel %vm1080, %v1085, %v1086
      %v1088 = vrot.slane %v1086, 4
      %v1089 = vrot.slane %v204, 5
      %v1090 = vsel %vm1080, %v1088, %v1089
      %v1091 = vrot.slane %v1089, 4
      %v1092 = vrot.slane %v205, 5
      %v1093 = vsel %vm1080, %v1091, %v1092
      %v1094 = vrot.slane %v206, 5
      %v1095 = vrot.slane %v1094, 4
      %v1096 = vrot.slane %v207, 5
      %v1097 = vsel %vm1080, %v1095, %v1096
      %v1098 = vrot.slane %v1096, 4
      %v1099 = vrot.slane %v208, 5
      %v1100 = vsel %vm1080, %v1098, %v1099
      %v1101 = vrot.slane %v1099, 4
      %v1102 = vrot.slane %v209, 5
      %v1103 = vsel %vm1080, %v1101, %v1102
      %v1104 = vrot.slane %v1102, 4
      %v1105 = vrot.slane %v210, 5
      %v1106 = vsel %vm1080, %v1104, %v1105
      %v1107 = vrot.slane %v211, 5
      %v1108 = vrot.slane %v1107, 4
      %v1109 = vrot.slane %v212, 5
      %v1110 = vsel %vm1080, %v1108, %v1109
      %v1111 = vrot.slane %v1109, 4
      %v1112 = vrot.slane %v213, 5
      %v1113 = vsel %vm1080, %v1111, %v1112
      %v1114 = vrot.slane %v1112, 4
      %v1115 = vrot.slane %v214, 5
      %v1116 = vsel %vm1080, %v1114, %v1115
      %v1117 = vrot.slane %v1115, 4
      %v1118 = vrot.slane %v215, 5
      %v1119 = vsel %vm1080, %v1117, %v1118
      %v1120 = vrot.slane %v216, 5
      %v1121 = vrot.slane %v1120, 4
      %v1122 = vrot.slane %v217, 5
      %v1123 = vsel %vm1080, %v1121, %v1122
      %v1124 = vrot.slane %v1122, 4
      %v1125 = vrot.slane %v218, 5
      %v1126 = vsel %vm1080, %v1124, %v1125
      %v1127 = vrot.slane %v1125, 4
      %v1128 = vrot.slane %v219, 5
      %v1129 = vsel %vm1080, %v1127, %v1128
      %v1130 = vrot.slane %v1128, 4
      %v1131 = vrot.slane %v220, 5
      %v1132 = vsel %vm1080, %v1130, %v1131
      %v1133 = vrot.slane %v221, 5
      %v1134 = vrot.slane %v1133, 4
      %v1135 = vrot.slane %v222, 5
      %v1136 = vsel %vm1080, %v1134, %v1135
      %v1137 = vrot.slane %v1135, 4
      %v1138 = vrot.slane %v223, 5
      %v1139 = vsel %vm1080, %v1137, %v1138
      %v1140 = vrot.slane %v1138, 4
      %v1141 = vrot.slane %v224, 5
      %v1142 = vsel %vm1080, %v1140, %v1141
      %v1143 = vrot.slane %v1141, 4
      %v1144 = vrot.slane %v225, 5
      %v1145 = vsel %vm1080, %v1143, %v1144
      %v1146 = vrot.slane %v226, 5
      %v1147 = vrot.slane %v1146, 4
      %v1148 = vrot.slane %v227, 5
      %v1149 = vsel %vm1080, %v1147, %v1148
      %v1150 = vrot.slane %v1148, 4
      %v1151 = vrot.slane %v228, 5
      %v1152 = vsel %vm1080, %v1150, %v1151
      %v1153 = vrot.slane %v1151, 4
      %v1154 = vrot.slane %v229, 5
      %v1155 = vsel %vm1080, %v1153, %v1154
      %v1156 = vrot.slane %v1154, 4
      %v1157 = vrot.slane %v230, 5
      %v1158 = vsel %vm1080, %v1156, %v1157
      %v1159 = vrot.slane %v231, 5
      %v1160 = vrot.slane %v1159, 4
      %v1161 = vrot.slane %v232, 5
      %v1162 = vsel %vm1080, %v1160, %v1161
      %v1163 = vrot.slane %v1161, 4
      %v1164 = vrot.slane %v233, 5
      %v1165 = vsel %vm1080, %v1163, %v1164
      %v1166 = vrot.slane %v1164, 4
      %v1167 = vrot.slane %v234, 5
      %v1168 = vsel %vm1080, %v1166, %v1167
      %v1169 = vrot.slane %v1167, 4
      %v1170 = vrot.slane %v235, 5
      %v1171 = vsel %vm1080, %v1169, %v1170
      %v1172 = vrot.slane %v236, 5
      %v1173 = vrot.slane %v1172, 4
      %v1174 = vrot.slane %v237, 5
      %v1175 = vsel %vm1080, %v1173, %v1174
      %v1176 = vrot.slane %v1174, 4
      %v1177 = vrot.slane %v238, 5
      %v1178 = vsel %vm1080, %v1176, %v1177
      %v1179 = vrot.slane %v1177, 4
      %v1180 = vrot.slane %v239, 5
      %v1181 = vsel %vm1080, %v1179, %v1180
      %v1182 = vrot.slane %v1180, 4
      %v1183 = vrot.slane %v240, 5
      %v1184 = vsel %vm1080, %v1182, %v1183
      %v1185 = vrot.slane %v241, 5
      %v1186 = vrot.slane %v1185, 4
      %v1187 = vrot.slane %v242, 5
      %v1188 = vsel %vm1080, %v1186, %v1187
      %v1189 = vrot.slane %v1187, 4
      %v1190 = vrot.slane %v243, 5
      %v1191 = vsel %vm1080, %v1189, %v1190
      %v1192 = vrot.slane %v1190, 4
      %v1193 = vrot.slane %v244, 5
      %v1194 = vsel %vm1080, %v1192, %v1193
      %v1195 = vrot.slane %v1193, 4
      %v1196 = vrot.slane %v245, 5
      %v1197 = vsel %vm1080, %v1195, %v1196
      %v1198 = vrot.slane %v246, 5
      %v1199 = vrot.slane %v1198, 4
      %v1200 = vrot.slane %v247, 5
      %v1201 = vsel %vm1080, %v1199, %v1200
      %v1202 = vrot.slane %v1200, 4
      %v1203 = vrot.slane %v248, 5
      %v1204 = vsel %vm1080, %v1202, %v1203
      %v1205 = vrot.slane %v1203, 4
      %v1206 = vrot.slane %v249, 5
      %v1207 = vsel %vm1080, %v1205, %v1206
      %v1208 = vrot.slane %v1206, 4
      %v1209 = vrot.slane %v250, 5
      %v1210 = vsel %vm1080, %v1208, %v1209
      %v1211 = vrot.slane %v251, 5
      %v1212 = vrot.slane %v1211, 4
      %v1213 = vrot.slane %v252, 5
      %v1214 = vsel %vm1080, %v1212, %v1213
      %v1215 = vrot.slane %v1213, 4
      %v1216 = vrot.slane %v253, 5
      %v1217 = vsel %vm1080, %v1215, %v1216
      %v1218 = vrot.slane %v1216, 4
      %v1219 = vrot.slane %v254, 5
      %v1220 = vsel %vm1080, %v1218, %v1219
      %v1221 = vrot.slane %v1219, 4
      %v1222 = vrot.slane %v255, 5
      %v1223 = vsel %vm1080, %v1221, %v1222
      %v1224 = vrot.slane %v256, 5
      %v1225 = vrot.slane %v1224, 4
      %v1226 = vrot.slane %v257, 5
      %v1227 = vsel %vm1080, %v1225, %v1226
      %v1228 = vrot.slane %v1226, 4
      %v1229 = vrot.slane %v258, 5
      %v1230 = vsel %vm1080, %v1228, %v1229
      %v1231 = vrot.slane %v1229, 4
      %v1232 = vrot.slane %v259, 5
      %v1233 = vsel %vm1080, %v1231, %v1232
      %v1234 = vrot.slane %v1232, 4
      %v1235 = vrot.slane %v260, 5
      %v1236 = vsel %vm1080, %v1234, %v1235
      %v1237 = vrot.slane %v261, 5
      %v1238 = vrot.slane %v1237, 4
      %v1239 = vrot.slane %v262, 5
      %v1240 = vsel %vm1080, %v1238, %v1239
      %v1241 = vrot.slane %v1239, 4
      %v1242 = vrot.slane %v263, 5
      %v1243 = vsel %vm1080, %v1241, %v1242
      %v1244 = vrot.slane %v1242, 4
      %v1245 = vrot.slane %v264, 5
      %v1246 = vsel %vm1080, %v1244, %v1245
      %v1247 = vrot.slane %v1245, 4
      %v1248 = vrot.slane %v265, 5
      %v1249 = vsel %vm1080, %v1247, %v1248
      %v1250 = vrot.slane %v266, 5
      %v1251 = vrot.slane %v1250, 4
      %v1252 = vrot.slane %v267, 5
      %v1253 = vsel %vm1080, %v1251, %v1252
      %v1254 = vrot.slane %v1252, 4
      %v1255 = vrot.slane %v268, 5
      %v1256 = vsel %vm1080, %v1254, %v1255
      %v1257 = vrot.slane %v1255, 4
      %v1258 = vrot.slane %v269, 5
      %v1259 = vsel %vm1080, %v1257, %v1258
      %v1260 = vrot.slane %v1258, 4
      %v1261 = vrot.slane %v270, 5
      %v1262 = vsel %vm1080, %v1260, %v1261
      %v1263 = vrot.slane %v271, 5
      %v1264 = vrot.slane %v1263, 4
      %v1265 = vrot.slane %v272, 5
      %v1266 = vsel %vm1080, %v1264, %v1265
      %v1267 = vrot.slane %v1265, 4
      %v1268 = vrot.slane %v273, 5
      %v1269 = vsel %vm1080, %v1267, %v1268
      %v1270 = vrot.slane %v1268, 4
      %v1271 = vrot.slane %v274, 5
      %v1272 = vsel %vm1080, %v1270, %v1271
      %v1273 = vrot.slane %v1271, 4
      %v1274 = vrot.slane %v275, 5
      %v1275 = vsel %vm1080, %v1273, %v1274
      %v1276 = vrot.slane %v276, 5
      %v1277 = vrot.slane %v1276, 4
      %v1278 = vrot.slane %v277, 5
      %v1279 = vsel %vm1080, %v1277, %v1278
      %v1280 = vrot.slane %v1278, 4
      %v1281 = vrot.slane %v278, 5
      %v1282 = vsel %vm1080, %v1280, %v1281
      %v1283 = vrot.slane %v1281, 4
      %v1284 = vrot.slane %v279, 5
      %v1285 = vsel %vm1080, %v1283, %v1284
      %v1286 = vrot.slane %v1284, 4
      %v1287 = vrot.slane %v280, 5
      %v1288 = vsel %vm1080, %v1286, %v1287
      %v1290 = vshrl.u32 %v281, 16
      %v1292 = vrot.slane %v1290, 4
      %v1293 = vshll.u32 %v281, 16
      %v1295 = vrot.slane %v1293, 5
      %v1296 = vor.u32 %v1292, %v1295
      %v1297 = vrot.slane %v1296, 4
      %v1299 = vshll.u32 %v282, 16
      %v1301 = vrot.slane %v1299, 5
      %v1302 = vsel %vm293, %v1297, %v1301
      %v1303 = vshrl.u32 %v282, 16
      %v1305 = vrot.slane %v1303, 4
      %v1306 = vor.u32 %v1305, %v1301
      %v1307 = vrot.slane %v1306, 4
      %v1309 = vshll.u32 %v283, 16
      %v1311 = vrot.slane %v1309, 5
      %v1312 = vsel %vm293, %v1307, %v1311
      %v1313 = vshrl.u32 %v283, 16
      %v1315 = vrot.slane %v1313, 4
      %v1316 = vor.u32 %v1315, %v1311
      %v1317 = vrot.slane %v1316, 4
      %v1319 = vshll.u32 %v284, 16
      %v1321 = vrot.slane %v1319, 5
      %v1322 = vsel %vm293, %v1317, %v1321
      %v1323 = vshrl.u32 %v284, 16
      %v1325 = vrot.slane %v1323, 4
      %v1326 = vor.u32 %v1325, %v1321
      %v1327 = vrot.slane %v1326, 4
      %v1329 = vshll.u32 %v285, 16
      %v1331 = vrot.slane %v1329, 5
      %v1332 = vsel %vm293, %v1327, %v1331
      %v1338 = vrot.slane %v281, 5
      %v1339 = vrot.slane %v1338, 4
      %v1340 = vrot.slane %v282, 5
      %v1341 = vsel %vm1080, %v1339, %v1340
      %v1342 = vrot.slane %v1340, 4
      %v1343 = vrot.slane %v283, 5
      %v1344 = vsel %vm1080, %v1342, %v1343
      %v1345 = vrot.slane %v1343, 4
      %v1346 = vrot.slane %v284, 5
      %v1347 = vsel %vm1080, %v1345, %v1346
      %v1348 = vrot.slane %v1346, 4
      %v1349 = vrot.slane %v285, 5
      %v1350 = vsel %vm1080, %v1348, %v1349
      %v1352 = vshrl.u32 %v286, 16
      %v1354 = vrot.slane %v1352, 4
      %v1355 = vshll.u32 %v286, 16
      %v1357 = vrot.slane %v1355, 5
      %v1358 = vor.u32 %v1354, %v1357
      %v1359 = vrot.slane %v1358, 4
      %v1361 = vshll.u32 %v287, 16
      %v1363 = vrot.slane %v1361, 5
      %v1364 = vsel %vm293, %v1359, %v1363
      %v1365 = vshrl.u32 %v287, 16
      %v1367 = vrot.slane %v1365, 4
      %v1368 = vor.u32 %v1367, %v1363
      %v1369 = vrot.slane %v1368, 4
      %v1371 = vshll.u32 %v288, 16
      %v1373 = vrot.slane %v1371, 5
      %v1374 = vsel %vm293, %v1369, %v1373
      %v1375 = vshrl.u32 %v288, 16
      %v1377 = vrot.slane %v1375, 4
      %v1378 = vor.u32 %v1377, %v1373
      %v1379 = vrot.slane %v1378, 4
      %v1381 = vshll.u32 %v289, 16
      %v1383 = vrot.slane %v1381, 5
      %v1384 = vsel %vm293, %v1379, %v1383
      %v1385 = vshrl.u32 %v289, 16
      %v1387 = vrot.slane %v1385, 4
      %v1388 = vor.u32 %v1387, %v1383
      %v1389 = vrot.slane %v1388, 4
      %v1391 = vshll.u32 %v290, 16
      %v1393 = vrot.slane %v1391, 5
      %v1394 = vsel %vm293, %v1389, %v1393
      %v1400 = vrot.slane %v286, 5
      %v1401 = vrot.slane %v1400, 4
      %v1402 = vrot.slane %v287, 5
      %v1403 = vsel %vm1080, %v1401, %v1402
      %v1404 = vrot.slane %v1402, 4
      %v1405 = vrot.slane %v288, 5
      %v1406 = vsel %vm1080, %v1404, %v1405
      %v1407 = vrot.slane %v1405, 4
      %v1408 = vrot.slane %v289, 5
      %v1409 = vsel %vm1080, %v1407, %v1408
      %v1410 = vrot.slane %v1408, 4
      %v1411 = vrot.slane %v290, 5
      %v1412 = vsel %vm1080, %v1410, %v1411
      %v1413 = vunpack.c.l.b16 %v201
      %v1414 = vunpack.c.l.b16 %v202
      %v1415 = vunpack.c.l.b16 %v203
      %v1416 = vunpack.c.l.b16 %v204
      %v1417 = vunpack.c.l.b16 %v206
      %v1418 = vunpack.c.l.b16 %v207
      %v1419 = vunpack.c.l.b16 %v208
      %v1420 = vunpack.c.l.b16 %v209
      %v1421 = vunpack.c.l.b16 %v211
      %v1422 = vunpack.c.l.b16 %v212
      %v1423 = vunpack.c.l.b16 %v213
      %v1424 = vunpack.c.l.b16 %v214
      %v1425 = vunpack.c.l.b16 %v216
      %v1426 = vunpack.c.l.b16 %v217
      %v1427 = vunpack.c.l.b16 %v218
      %v1428 = vunpack.c.l.b16 %v219
      %v1429 = vunpack.c.l.b16 %v221
      %v1430 = vunpack.c.l.b16 %v222
      %v1431 = vunpack.c.l.b16 %v223
      %v1432 = vunpack.c.l.b16 %v224
      %v1433 = vunpack.c.l.b16 %v226
      %v1434 = vunpack.c.l.b16 %v227
      %v1435 = vunpack.c.l.b16 %v228
      %v1436 = vunpack.c.l.b16 %v229
      %v1437 = vunpack.c.l.b16 %v231
      %v1438 = vunpack.c.l.b16 %v232
      %v1439 = vunpack.c.l.b16 %v233
      %v1440 = vunpack.c.l.b16 %v234
      %v1441 = vunpack.c.l.b16 %v236
      %v1442 = vunpack.c.l.b16 %v237
      %v1443 = vunpack.c.l.b16 %v238
      %v1444 = vunpack.c.l.b16 %v239
      %v1445 = vunpack.c.l.b16 %v241
      %v1446 = vunpack.c.l.b16 %v242
      %v1447 = vunpack.c.l.b16 %v243
      %v1448 = vunpack.c.l.b16 %v244
      %v1449 = vunpack.c.l.b16 %v246
      %v1450 = vunpack.c.l.b16 %v247
      %v1451 = vunpack.c.l.b16 %v248
      %v1452 = vunpack.c.l.b16 %v249
      %v1453 = vunpack.c.l.b16 %v251
      %v1454 = vunpack.c.l.b16 %v252
      %v1455 = vunpack.c.l.b16 %v253
      %v1456 = vunpack.c.l.b16 %v254
      %v1457 = vunpack.c.l.b16 %v256
      %v1458 = vunpack.c.l.b16 %v257
      %v1459 = vunpack.c.l.b16 %v258
      %v1460 = vunpack.c.l.b16 %v259
      %v1461 = vunpack.c.l.b16 %v261
      %v1462 = vunpack.c.l.b16 %v262
      %v1463 = vunpack.c.l.b16 %v263
      %v1464 = vunpack.c.l.b16 %v264
      %v1465 = vunpack.c.l.b16 %v266
      %v1466 = vunpack.c.l.b16 %v267
      %v1467 = vunpack.c.l.b16 %v268
      %v1468 = vunpack.c.l.b16 %v269
      %v1469 = vunpack.c.l.b16 %v271
      %v1470 = vunpack.c.l.b16 %v272
      %v1471 = vunpack.c.l.b16 %v273
      %v1472 = vunpack.c.l.b16 %v274
      %v1473 = vunpack.c.l.b16 %v276
      %v1474 = vunpack.c.l.b16 %v277
      %v1475 = vunpack.c.l.b16 %v278
      %v1476 = vunpack.c.l.b16 %v279
      %v1477 = vpack.c.b16 %v1414, %v1413
      %v1478 = vpack.c.b16 %v1416, %v1415
      %v1479 = vpack.c.b16 %v1418, %v1417
      %v1480 = vpack.c.b16 %v1420, %v1419
      %v1481 = vpack.c.b16 %v1422, %v1421
      %v1482 = vpack.c.b16 %v1424, %v1423
      %v1483 = vpack.c.b16 %v1426, %v1425
      %v1484 = vpack.c.b16 %v1428, %v1427
      %v1485 = vpack.c.b16 %v1430, %v1429
      %v1486 = vpack.c.b16 %v1432, %v1431
      %v1487 = vpack.c.b16 %v1434, %v1433
      %v1488 = vpack.c.b16 %v1436, %v1435
      %v1489 = vpack.c.b16 %v1438, %v1437
      %v1490 = vpack.c.b16 %v1440, %v1439
      %v1491 = vpack.c.b16 %v1442, %v1441
      %v1492 = vpack.c.b16 %v1444, %v1443
      %v1493 = vpack.c.b16 %v1446, %v1445
      %v1494 = vpack.c.b16 %v1448, %v1447
      %v1495 = vpack.c.b16 %v1450, %v1449
      %v1496 = vpack.c.b16 %v1452, %v1451
      %v1497 = vpack.c.b16 %v1454, %v1453
      %v1498 = vpack.c.b16 %v1456, %v1455
      %v1499 = vpack.c.b16 %v1458, %v1457
      %v1500 = vpack.c.b16 %v1460, %v1459
      %v1501 = vpack.c.b16 %v1462, %v1461
      %v1502 = vpack.c.b16 %v1464, %v1463
      %v1503 = vpack.c.b16 %v1466, %v1465
      %v1504 = vpack.c.b16 %v1468, %v1467
      %v1505 = vpack.c.b16 %v1470, %v1469
      %v1506 = vpack.c.b16 %v1472, %v1471
      %v1507 = vpack.c.b16 %v1474, %v1473
      %v1508 = vpack.c.b16 %v1476, %v1475
      %v1509 = vunpack.c.l.b16 %v307
      %v1510 = vunpack.c.l.b16 %v317
      %v1511 = vunpack.c.l.b16 %v327
      %v1512 = vunpack.c.l.b16 %v337
      %v1513 = vunpack.c.l.b16 %v351
      %v1514 = vunpack.c.l.b16 %v361
      %v1515 = vunpack.c.l.b16 %v371
      %v1516 = vunpack.c.l.b16 %v381
      %v1517 = vunpack.c.l.b16 %v395
      %v1518 = vunpack.c.l.b16 %v405
      %v1519 = vunpack.c.l.b16 %v415
      %v1520 = vunpack.c.l.b16 %v425
      %v1521 = vunpack.c.l.b16 %v439
      %v1522 = vunpack.c.l.b16 %v449
      %v1523 = vunpack.c.l.b16 %v459
      %v1524 = vunpack.c.l.b16 %v469
      %v1525 = vunpack.c.l.b16 %v483
      %v1526 = vunpack.c.l.b16 %v493
      %v1527 = vunpack.c.l.b16 %v503
      %v1528 = vunpack.c.l.b16 %v513
      %v1529 = vunpack.c.l.b16 %v527
      %v1530 = vunpack.c.l.b16 %v537
      %v1531 = vunpack.c.l.b16 %v547
      %v1532 = vunpack.c.l.b16 %v557
      %v1533 = vunpack.c.l.b16 %v571
      %v1534 = vunpack.c.l.b16 %v581
      %v1535 = vunpack.c.l.b16 %v591
      %v1536 = vunpack.c.l.b16 %v601
      %v1537 = vunpack.c.l.b16 %v615
      %v1538 = vunpack.c.l.b16 %v625
      %v1539 = vunpack.c.l.b16 %v635
      %v1540 = vunpack.c.l.b16 %v645
      %v1541 = vunpack.c.l.b16 %v659
      %v1542 = vunpack.c.l.b16 %v669
      %v1543 = vunpack.c.l.b16 %v679
      %v1544 = vunpack.c.l.b16 %v689
      %v1545 = vunpack.c.l.b16 %v703
      %v1546 = vunpack.c.l.b16 %v713
      %v1547 = vunpack.c.l.b16 %v723
      %v1548 = vunpack.c.l.b16 %v733
      %v1549 = vunpack.c.l.b16 %v747
      %v1550 = vunpack.c.l.b16 %v757
      %v1551 = vunpack.c.l.b16 %v767
      %v1552 = vunpack.c.l.b16 %v777
      %v1553 = vunpack.c.l.b16 %v791
      %v1554 = vunpack.c.l.b16 %v801
      %v1555 = vunpack.c.l.b16 %v811
      %v1556 = vunpack.c.l.b16 %v821
      %v1557 = vunpack.c.l.b16 %v835
      %v1558 = vunpack.c.l.b16 %v845
      %v1559 = vunpack.c.l.b16 %v855
      %v1560 = vunpack.c.l.b16 %v865
      %v1561 = vunpack.c.l.b16 %v879
      %v1562 = vunpack.c.l.b16 %v889
      %v1563 = vunpack.c.l.b16 %v899
      %v1564 = vunpack.c.l.b16 %v909
      %v1565 = vunpack.c.l.b16 %v923
      %v1566 = vunpack.c.l.b16 %v933
      %v1567 = vunpack.c.l.b16 %v943
      %v1568 = vunpack.c.l.b16 %v953
      %v1569 = vunpack.c.l.b16 %v967
      %v1570 = vunpack.c.l.b16 %v977
      %v1571 = vunpack.c.l.b16 %v987
      %v1572 = vunpack.c.l.b16 %v997
      %v1573 = vpack.c.b16 %v1510, %v1509
      %v1574 = vpack.c.b16 %v1512, %v1511
      %v1575 = vpack.c.b16 %v1514, %v1513
      %v1576 = vpack.c.b16 %v1516, %v1515
      %v1577 = vpack.c.b16 %v1518, %v1517
      %v1578 = vpack.c.b16 %v1520, %v1519
      %v1579 = vpack.c.b16 %v1522, %v1521
      %v1580 = vpack.c.b16 %v1524, %v1523
      %v1581 = vpack.c.b16 %v1526, %v1525
      %v1582 = vpack.c.b16 %v1528, %v1527
      %v1583 = vpack.c.b16 %v1530, %v1529
      %v1584 = vpack.c.b16 %v1532, %v1531
      %v1585 = vpack.c.b16 %v1534, %v1533
      %v1586 = vpack.c.b16 %v1536, %v1535
      %v1587 = vpack.c.b16 %v1538, %v1537
      %v1588 = vpack.c.b16 %v1540, %v1539
      %v1589 = vpack.c.b16 %v1542, %v1541
      %v1590 = vpack.c.b16 %v1544, %v1543
      %v1591 = vpack.c.b16 %v1546, %v1545
      %v1592 = vpack.c.b16 %v1548, %v1547
      %v1593 = vpack.c.b16 %v1550, %v1549
      %v1594 = vpack.c.b16 %v1552, %v1551
      %v1595 = vpack.c.b16 %v1554, %v1553
      %v1596 = vpack.c.b16 %v1556, %v1555
      %v1597 = vpack.c.b16 %v1558, %v1557
      %v1598 = vpack.c.b16 %v1560, %v1559
      %v1599 = vpack.c.b16 %v1562, %v1561
      %v1600 = vpack.c.b16 %v1564, %v1563
      %v1601 = vpack.c.b16 %v1566, %v1565
      %v1602 = vpack.c.b16 %v1568, %v1567
      %v1603 = vpack.c.b16 %v1570, %v1569
      %v1604 = vpack.c.b16 %v1572, %v1571
      %1605 = vrot.lane.b32.xlu0 %v1573, 16
      %v1606 = vpop.permute.xlu0 %1605
      %1607 = vrot.lane.b32.xlu0 %v1574, 16
      %v1608 = vpop.permute.xlu0 %1607
      %1609 = vrot.lane.b32.xlu0 %v1575, 16
      %v1610 = vpop.permute.xlu0 %1609
      %1611 = vrot.lane.b32.xlu0 %v1576, 16
      %v1612 = vpop.permute.xlu0 %1611
      %1613 = vrot.lane.b32.xlu0 %v1577, 16
      %v1614 = vpop.permute.xlu0 %1613
      %1615 = vrot.lane.b32.xlu0 %v1578, 16
      %v1616 = vpop.permute.xlu0 %1615
      %1617 = vrot.lane.b32.xlu0 %v1579, 16
      %v1618 = vpop.permute.xlu0 %1617
      %1619 = vrot.lane.b32.xlu0 %v1580, 16
      %v1620 = vpop.permute.xlu0 %1619
      %1621 = vrot.lane.b32.xlu0 %v1581, 16
      %v1622 = vpop.permute.xlu0 %1621
      %1623 = vrot.lane.b32.xlu0 %v1582, 16
      %v1624 = vpop.permute.xlu0 %1623
      %1625 = vrot.lane.b32.xlu0 %v1583, 16
      %v1626 = vpop.permute.xlu0 %1625
      %1627 = vrot.lane.b32.xlu0 %v1584, 16
      %v1628 = vpop.permute.xlu0 %1627
      %1629 = vrot.lane.b32.xlu0 %v1585, 16
      %v1630 = vpop.permute.xlu0 %1629
      %1631 = vrot.lane.b32.xlu0 %v1586, 16
      %v1632 = vpop.permute.xlu0 %1631
      %1633 = vrot.lane.b32.xlu0 %v1587, 16
      %v1634 = vpop.permute.xlu0 %1633
      %1635 = vrot.lane.b32.xlu0 %v1588, 16
      %v1636 = vpop.permute.xlu0 %1635
      %1637 = vrot.lane.b32.xlu0 %v1589, 16
      %v1638 = vpop.permute.xlu0 %1637
      %1639 = vrot.lane.b32.xlu0 %v1590, 16
      %v1640 = vpop.permute.xlu0 %1639
      %1641 = vrot.lane.b32.xlu0 %v1591, 16
      %v1642 = vpop.permute.xlu0 %1641
      %1643 = vrot.lane.b32.xlu0 %v1592, 16
      %v1644 = vpop.permute.xlu0 %1643
      %1645 = vrot.lane.b32.xlu0 %v1593, 16
      %v1646 = vpop.permute.xlu0 %1645
      %1647 = vrot.lane.b32.xlu0 %v1594, 16
      %v1648 = vpop.permute.xlu0 %1647
      %1649 = vrot.lane.b32.xlu0 %v1595, 16
      %v1650 = vpop.permute.xlu0 %1649
      %1651 = vrot.lane.b32.xlu0 %v1596, 16
      %v1652 = vpop.permute.xlu0 %1651
      %1653 = vrot.lane.b32.xlu0 %v1597, 16
      %v1654 = vpop.permute.xlu0 %1653
      %1655 = vrot.lane.b32.xlu0 %v1598, 16
      %v1656 = vpop.permute.xlu0 %1655
      %1657 = vrot.lane.b32.xlu0 %v1599, 16
      %v1658 = vpop.permute.xlu0 %1657
      %1659 = vrot.lane.b32.xlu0 %v1600, 16
      %v1660 = vpop.permute.xlu0 %1659
      %1661 = vrot.lane.b32.xlu0 %v1601, 16
      %v1662 = vpop.permute.xlu0 %1661
      %1663 = vrot.lane.b32.xlu0 %v1602, 16
      %v1664 = vpop.permute.xlu0 %1663
      %1665 = vrot.lane.b32.xlu0 %v1603, 16
      %v1666 = vpop.permute.xlu0 %1665
      %1667 = vrot.lane.b32.xlu0 %v1604, 16
      %v1668 = vpop.permute.xlu0 %1667
      %v1669 = vunpack.c.l.b16 %v1084
      %v1670 = vunpack.c.l.b16 %v1087
      %v1671 = vunpack.c.l.b16 %v1090
      %v1672 = vunpack.c.l.b16 %v1093
      %v1673 = vunpack.c.l.b16 %v1097
      %v1674 = vunpack.c.l.b16 %v1100
      %v1675 = vunpack.c.l.b16 %v1103
      %v1676 = vunpack.c.l.b16 %v1106
      %v1677 = vunpack.c.l.b16 %v1110
      %v1678 = vunpack.c.l.b16 %v1113
      %v1679 = vunpack.c.l.b16 %v1116
      %v1680 = vunpack.c.l.b16 %v1119
      %v1681 = vunpack.c.l.b16 %v1123
      %v1682 = vunpack.c.l.b16 %v1126
      %v1683 = vunpack.c.l.b16 %v1129
      %v1684 = vunpack.c.l.b16 %v1132
      %v1685 = vunpack.c.l.b16 %v1136
      %v1686 = vunpack.c.l.b16 %v1139
      %v1687 = vunpack.c.l.b16 %v1142
      %v1688 = vunpack.c.l.b16 %v1145
      %v1689 = vunpack.c.l.b16 %v1149
      %v1690 = vunpack.c.l.b16 %v1152
      %v1691 = vunpack.c.l.b16 %v1155
      %v1692 = vunpack.c.l.b16 %v1158
      %v1693 = vunpack.c.l.b16 %v1162
      %v1694 = vunpack.c.l.b16 %v1165
      %v1695 = vunpack.c.l.b16 %v1168
      %v1696 = vunpack.c.l.b16 %v1171
      %v1697 = vunpack.c.l.b16 %v1175
      %v1698 = vunpack.c.l.b16 %v1178
      %v1699 = vunpack.c.l.b16 %v1181
      %v1700 = vunpack.c.l.b16 %v1184
      %v1701 = vunpack.c.l.b16 %v1188
      %v1702 = vunpack.c.l.b16 %v1191
      %v1703 = vunpack.c.l.b16 %v1194
      %v1704 = vunpack.c.l.b16 %v1197
      %v1705 = vunpack.c.l.b16 %v1201
      %v1706 = vunpack.c.l.b16 %v1204
      %v1707 = vunpack.c.l.b16 %v1207
      %v1708 = vunpack.c.l.b16 %v1210
      %v1709 = vunpack.c.l.b16 %v1214
      %v1710 = vunpack.c.l.b16 %v1217
      %v1711 = vunpack.c.l.b16 %v1220
      %v1712 = vunpack.c.l.b16 %v1223
      %v1713 = vunpack.c.l.b16 %v1227
      %v1714 = vunpack.c.l.b16 %v1230
      %v1715 = vunpack.c.l.b16 %v1233
      %v1716 = vunpack.c.l.b16 %v1236
      %v1717 = vunpack.c.l.b16 %v1240
      %v1718 = vunpack.c.l.b16 %v1243
      %v1719 = vunpack.c.l.b16 %v1246
      %v1720 = vunpack.c.l.b16 %v1249
      %v1721 = vunpack.c.l.b16 %v1253
      %v1722 = vunpack.c.l.b16 %v1256
      %v1723 = vunpack.c.l.b16 %v1259
      %v1724 = vunpack.c.l.b16 %v1262
      %v1725 = vunpack.c.l.b16 %v1266
      %v1726 = vunpack.c.l.b16 %v1269
      %v1727 = vunpack.c.l.b16 %v1272
      %v1728 = vunpack.c.l.b16 %v1275
      %v1729 = vunpack.c.l.b16 %v1279
      %v1730 = vunpack.c.l.b16 %v1282
      %v1731 = vunpack.c.l.b16 %v1285
      %v1732 = vunpack.c.l.b16 %v1288
      %v1733 = vpack.c.b16 %v1670, %v1669
      %v1734 = vpack.c.b16 %v1672, %v1671
      %v1735 = vpack.c.b16 %v1674, %v1673
      %v1736 = vpack.c.b16 %v1676, %v1675
      %v1737 = vpack.c.b16 %v1678, %v1677
      %v1738 = vpack.c.b16 %v1680, %v1679
      %v1739 = vpack.c.b16 %v1682, %v1681
      %v1740 = vpack.c.b16 %v1684, %v1683
      %v1741 = vpack.c.b16 %v1686, %v1685
      %v1742 = vpack.c.b16 %v1688, %v1687
      %v1743 = vpack.c.b16 %v1690, %v1689
      %v1744 = vpack.c.b16 %v1692, %v1691
      %v1745 = vpack.c.b16 %v1694, %v1693
      %v1746 = vpack.c.b16 %v1696, %v1695
      %v1747 = vpack.c.b16 %v1698, %v1697
      %v1748 = vpack.c.b16 %v1700, %v1699
      %v1749 = vpack.c.b16 %v1702, %v1701
      %v1750 = vpack.c.b16 %v1704, %v1703
      %v1751 = vpack.c.b16 %v1706, %v1705
      %v1752 = vpack.c.b16 %v1708, %v1707
      %v1753 = vpack.c.b16 %v1710, %v1709
      %v1754 = vpack.c.b16 %v1712, %v1711
      %v1755 = vpack.c.b16 %v1714, %v1713
      %v1756 = vpack.c.b16 %v1716, %v1715
      %v1757 = vpack.c.b16 %v1718, %v1717
      %v1758 = vpack.c.b16 %v1720, %v1719
      %v1759 = vpack.c.b16 %v1722, %v1721
      %v1760 = vpack.c.b16 %v1724, %v1723
      %v1761 = vpack.c.b16 %v1726, %v1725
      %v1762 = vpack.c.b16 %v1728, %v1727
      %v1763 = vpack.c.b16 %v1730, %v1729
      %v1764 = vpack.c.b16 %v1732, %v1731
      %1765 = vrot.lane.b32.xlu0 %v1733, 32
      %v1766 = vpop.permute.xlu0 %1765
      %1767 = vrot.lane.b32.xlu0 %v1734, 32
      %v1768 = vpop.permute.xlu0 %1767
      %1769 = vrot.lane.b32.xlu0 %v1735, 32
      %v1770 = vpop.permute.xlu0 %1769
      %1771 = vrot.lane.b32.xlu0 %v1736, 32
      %v1772 = vpop.permute.xlu0 %1771
      %1773 = vrot.lane.b32.xlu0 %v1737, 32
      %v1774 = vpop.permute.xlu0 %1773
      %1775 = vrot.lane.b32.xlu0 %v1738, 32
      %v1776 = vpop.permute.xlu0 %1775
      %1777 = vrot.lane.b32.xlu0 %v1739, 32
      %v1778 = vpop.permute.xlu0 %1777
      %1779 = vrot.lane.b32.xlu0 %v1740, 32
      %v1780 = vpop.permute.xlu0 %1779
      %1781 = vrot.lane.b32.xlu0 %v1741, 32
      %v1782 = vpop.permute.xlu0 %1781
      %1783 = vrot.lane.b32.xlu0 %v1742, 32
      %v1784 = vpop.permute.xlu0 %1783
      %1785 = vrot.lane.b32.xlu0 %v1743, 32
      %v1786 = vpop.permute.xlu0 %1785
      %1787 = vrot.lane.b32.xlu0 %v1744, 32
      %v1788 = vpop.permute.xlu0 %1787
      %1789 = vrot.lane.b32.xlu0 %v1745, 32
      %v1790 = vpop.permute.xlu0 %1789
      %1791 = vrot.lane.b32.xlu0 %v1746, 32
      %v1792 = vpop.permute.xlu0 %1791
      %1793 = vrot.lane.b32.xlu0 %v1747, 32
      %v1794 = vpop.permute.xlu0 %1793
      %1795 = vrot.lane.b32.xlu0 %v1748, 32
      %v1796 = vpop.permute.xlu0 %1795
      %1797 = vrot.lane.b32.xlu0 %v1749, 32
      %v1798 = vpop.permute.xlu0 %1797
      %1799 = vrot.lane.b32.xlu0 %v1750, 32
      %v1800 = vpop.permute.xlu0 %1799
      %1801 = vrot.lane.b32.xlu0 %v1751, 32
      %v1802 = vpop.permute.xlu0 %1801
      %1803 = vrot.lane.b32.xlu0 %v1752, 32
      %v1804 = vpop.permute.xlu0 %1803
      %1805 = vrot.lane.b32.xlu0 %v1753, 32
      %v1806 = vpop.permute.xlu0 %1805
      %1807 = vrot.lane.b32.xlu0 %v1754, 32
      %v1808 = vpop.permute.xlu0 %1807
      %1809 = vrot.lane.b32.xlu0 %v1755, 32
      %v1810 = vpop.permute.xlu0 %1809
      %1811 = vrot.lane.b32.xlu0 %v1756, 32
      %v1812 = vpop.permute.xlu0 %1811
      %1813 = vrot.lane.b32.xlu0 %v1757, 32
      %v1814 = vpop.permute.xlu0 %1813
      %1815 = vrot.lane.b32.xlu0 %v1758, 32
      %v1816 = vpop.permute.xlu0 %1815
      %1817 = vrot.lane.b32.xlu0 %v1759, 32
      %v1818 = vpop.permute.xlu0 %1817
      %1819 = vrot.lane.b32.xlu0 %v1760, 32
      %v1820 = vpop.permute.xlu0 %1819
      %1821 = vrot.lane.b32.xlu0 %v1761, 32
      %v1822 = vpop.permute.xlu0 %1821
      %1823 = vrot.lane.b32.xlu0 %v1762, 32
      %v1824 = vpop.permute.xlu0 %1823
      %1825 = vrot.lane.b32.xlu0 %v1763, 32
      %v1826 = vpop.permute.xlu0 %1825
      %1827 = vrot.lane.b32.xlu0 %v1764, 32
      %v1828 = vpop.permute.xlu0 %1827
      %v1829 = vunpack.c.l.b16 %v281
      %v1830 = vunpack.c.l.b16 %v282
      %v1831 = vunpack.c.l.b16 %v283
      %v1832 = vunpack.c.l.b16 %v284
      %v1833 = vpack.c.b16 %v1830, %v1829
      %v1834 = vpack.c.b16 %v1832, %v1831
      %1835 = vrot.lane.b32.xlu0 %v1479, 48
      %v1836 = vpop.permute.xlu0 %1835
      %1837 = vrot.lane.b32.xlu0 %v1480, 48
      %v1838 = vpop.permute.xlu0 %1837
      %1839 = vrot.lane.b32.xlu0 %v1481, 48
      %v1840 = vpop.permute.xlu0 %1839
      %1841 = vrot.lane.b32.xlu0 %v1482, 48
      %v1842 = vpop.permute.xlu0 %1841
      %1843 = vrot.lane.b32.xlu0 %v1483, 48
      %v1844 = vpop.permute.xlu0 %1843
      %1845 = vrot.lane.b32.xlu0 %v1484, 48
      %v1846 = vpop.permute.xlu0 %1845
      %1847 = vrot.lane.b32.xlu0 %v1485, 48
      %v1848 = vpop.permute.xlu0 %1847
      %1849 = vrot.lane.b32.xlu0 %v1486, 48
      %v1850 = vpop.permute.xlu0 %1849
      %1851 = vrot.lane.b32.xlu0 %v1487, 48
      %v1852 = vpop.permute.xlu0 %1851
      %1853 = vrot.lane.b32.xlu0 %v1488, 48
      %v1854 = vpop.permute.xlu0 %1853
      %1855 = vrot.lane.b32.xlu0 %v1489, 48
      %v1856 = vpop.permute.xlu0 %1855
      %1857 = vrot.lane.b32.xlu0 %v1490, 48
      %v1858 = vpop.permute.xlu0 %1857
      %1859 = vrot.lane.b32.xlu0 %v1491, 48
      %v1860 = vpop.permute.xlu0 %1859
      %1861 = vrot.lane.b32.xlu0 %v1492, 48
      %v1862 = vpop.permute.xlu0 %1861
      %1863 = vrot.lane.b32.xlu0 %v1493, 48
      %v1864 = vpop.permute.xlu0 %1863
      %1865 = vrot.lane.b32.xlu0 %v1494, 48
      %v1866 = vpop.permute.xlu0 %1865
      %1867 = vrot.lane.b32.xlu0 %v1495, 48
      %v1868 = vpop.permute.xlu0 %1867
      %1869 = vrot.lane.b32.xlu0 %v1496, 48
      %v1870 = vpop.permute.xlu0 %1869
      %1871 = vrot.lane.b32.xlu0 %v1497, 48
      %v1872 = vpop.permute.xlu0 %1871
      %1873 = vrot.lane.b32.xlu0 %v1498, 48
      %v1874 = vpop.permute.xlu0 %1873
      %1875 = vrot.lane.b32.xlu0 %v1499, 48
      %v1876 = vpop.permute.xlu0 %1875
      %1877 = vrot.lane.b32.xlu0 %v1500, 48
      %v1878 = vpop.permute.xlu0 %1877
      %1879 = vrot.lane.b32.xlu0 %v1501, 48
      %v1880 = vpop.permute.xlu0 %1879
      %1881 = vrot.lane.b32.xlu0 %v1502, 48
      %v1882 = vpop.permute.xlu0 %1881
      %1883 = vrot.lane.b32.xlu0 %v1503, 48
      %v1884 = vpop.permute.xlu0 %1883
      %1885 = vrot.lane.b32.xlu0 %v1504, 48
      %v1886 = vpop.permute.xlu0 %1885
      %1887 = vrot.lane.b32.xlu0 %v1505, 48
      %v1888 = vpop.permute.xlu0 %1887
      %1889 = vrot.lane.b32.xlu0 %v1506, 48
      %v1890 = vpop.permute.xlu0 %1889
      %1891 = vrot.lane.b32.xlu0 %v1507, 48
      %v1892 = vpop.permute.xlu0 %1891
      %1893 = vrot.lane.b32.xlu0 %v1508, 48
      %v1894 = vpop.permute.xlu0 %1893
      %1895 = vrot.lane.b32.xlu0 %v1833, 48
      %v1896 = vpop.permute.xlu0 %1895
      %1897 = vrot.lane.b32.xlu0 %v1834, 48
      %v1898 = vpop.permute.xlu0 %1897
      %v1899 = vunpack.c.l.b16 %v1302
      %v1900 = vunpack.c.l.b16 %v1312
      %v1901 = vunpack.c.l.b16 %v1322
      %v1902 = vunpack.c.l.b16 %v1332
      %v1903 = vpack.c.b16 %v1900, %v1899
      %v1904 = vpack.c.b16 %v1902, %v1901
      %1905 = vrot.lane.b32.xlu0 %v1575, 64
      %v1906 = vpop.permute.xlu0 %1905
      %1907 = vrot.lane.b32.xlu0 %v1576, 64
      %v1908 = vpop.permute.xlu0 %1907
      %1909 = vrot.lane.b32.xlu0 %v1577, 64
      %v1910 = vpop.permute.xlu0 %1909
      %1911 = vrot.lane.b32.xlu0 %v1578, 64
      %v1912 = vpop.permute.xlu0 %1911
      %1913 = vrot.lane.b32.xlu0 %v1579, 64
      %v1914 = vpop.permute.xlu0 %1913
      %1915 = vrot.lane.b32.xlu0 %v1580, 64
      %v1916 = vpop.permute.xlu0 %1915
      %1917 = vrot.lane.b32.xlu0 %v1581, 64
      %v1918 = vpop.permute.xlu0 %1917
      %1919 = vrot.lane.b32.xlu0 %v1582, 64
      %v1920 = vpop.permute.xlu0 %1919
      %1921 = vrot.lane.b32.xlu0 %v1583, 64
      %v1922 = vpop.permute.xlu0 %1921
      %1923 = vrot.lane.b32.xlu0 %v1584, 64
      %v1924 = vpop.permute.xlu0 %1923
      %1925 = vrot.lane.b32.xlu0 %v1585, 64
      %v1926 = vpop.permute.xlu0 %1925
      %1927 = vrot.lane.b32.xlu0 %v1586, 64
      %v1928 = vpop.permute.xlu0 %1927
      %1929 = vrot.lane.b32.xlu0 %v1587, 64
      %v1930 = vpop.permute.xlu0 %1929
      %1931 = vrot.lane.b32.xlu0 %v1588, 64
      %v1932 = vpop.permute.xlu0 %1931
      %1933 = vrot.lane.b32.xlu0 %v1589, 64
      %v1934 = vpop.permute.xlu0 %1933
      %1935 = vrot.lane.b32.xlu0 %v1590, 64
      %v1936 = vpop.permute.xlu0 %1935
      %1937 = vrot.lane.b32.xlu0 %v1591, 64
      %v1938 = vpop.permute.xlu0 %1937
      %1939 = vrot.lane.b32.xlu0 %v1592, 64
      %v1940 = vpop.permute.xlu0 %1939
      %1941 = vrot.lane.b32.xlu0 %v1593, 64
      %v1942 = vpop.permute.xlu0 %1941
      %1943 = vrot.lane.b32.xlu0 %v1594, 64
      %v1944 = vpop.permute.xlu0 %1943
      %1945 = vrot.lane.b32.xlu0 %v1595, 64
      %v1946 = vpop.permute.xlu0 %1945
      %1947 = vrot.lane.b32.xlu0 %v1596, 64
      %v1948 = vpop.permute.xlu0 %1947
      %1949 = vrot.lane.b32.xlu0 %v1597, 64
      %v1950 = vpop.permute.xlu0 %1949
      %1951 = vrot.lane.b32.xlu0 %v1598, 64
      %v1952 = vpop.permute.xlu0 %1951
      %1953 = vrot.lane.b32.xlu0 %v1599, 64
      %v1954 = vpop.permute.xlu0 %1953
      %1955 = vrot.lane.b32.xlu0 %v1600, 64
      %v1956 = vpop.permute.xlu0 %1955
      %1957 = vrot.lane.b32.xlu0 %v1601, 64
      %v1958 = vpop.permute.xlu0 %1957
      %1959 = vrot.lane.b32.xlu0 %v1602, 64
      %v1960 = vpop.permute.xlu0 %1959
      %1961 = vrot.lane.b32.xlu0 %v1603, 64
      %v1962 = vpop.permute.xlu0 %1961
      %1963 = vrot.lane.b32.xlu0 %v1604, 64
      %v1964 = vpop.permute.xlu0 %1963
      %1965 = vrot.lane.b32.xlu0 %v1903, 64
      %v1966 = vpop.permute.xlu0 %1965
      %1967 = vrot.lane.b32.xlu0 %v1904, 64
      %v1968 = vpop.permute.xlu0 %1967
      %v1969 = vunpack.c.l.b16 %v1341
      %v1970 = vunpack.c.l.b16 %v1344
      %v1971 = vunpack.c.l.b16 %v1347
      %v1972 = vunpack.c.l.b16 %v1350
      %v1973 = vpack.c.b16 %v1970, %v1969
      %v1974 = vpack.c.b16 %v1972, %v1971
      %1975 = vrot.lane.b32.xlu0 %v1735, 80
      %v1976 = vpop.permute.xlu0 %1975
      %1977 = vrot.lane.b32.xlu0 %v1736, 80
      %v1978 = vpop.permute.xlu0 %1977
      %1979 = vrot.lane.b32.xlu0 %v1737, 80
      %v1980 = vpop.permute.xlu0 %1979
      %1981 = vrot.lane.b32.xlu0 %v1738, 80
      %v1982 = vpop.permute.xlu0 %1981
      %1983 = vrot.lane.b32.xlu0 %v1739, 80
      %v1984 = vpop.permute.xlu0 %1983
      %1985 = vrot.lane.b32.xlu0 %v1740, 80
      %v1986 = vpop.permute.xlu0 %1985
      %1987 = vrot.lane.b32.xlu0 %v1741, 80
      %v1988 = vpop.permute.xlu0 %1987
      %1989 = vrot.lane.b32.xlu0 %v1742, 80
      %v1990 = vpop.permute.xlu0 %1989
      %1991 = vrot.lane.b32.xlu0 %v1743, 80
      %v1992 = vpop.permute.xlu0 %1991
      %1993 = vrot.lane.b32.xlu0 %v1744, 80
      %v1994 = vpop.permute.xlu0 %1993
      %1995 = vrot.lane.b32.xlu0 %v1745, 80
      %v1996 = vpop.permute.xlu0 %1995
      %1997 = vrot.lane.b32.xlu0 %v1746, 80
      %v1998 = vpop.permute.xlu0 %1997
      %1999 = vrot.lane.b32.xlu0 %v1747, 80
      %v2000 = vpop.permute.xlu0 %1999
      %2001 = vrot.lane.b32.xlu0 %v1748, 80
      %v2002 = vpop.permute.xlu0 %2001
      %2003 = vrot.lane.b32.xlu0 %v1749, 80
      %v2004 = vpop.permute.xlu0 %2003
      %2005 = vrot.lane.b32.xlu0 %v1750, 80
      %v2006 = vpop.permute.xlu0 %2005
      %2007 = vrot.lane.b32.xlu0 %v1751, 80
      %v2008 = vpop.permute.xlu0 %2007
      %2009 = vrot.lane.b32.xlu0 %v1752, 80
      %v2010 = vpop.permute.xlu0 %2009
      %2011 = vrot.lane.b32.xlu0 %v1753, 80
      %v2012 = vpop.permute.xlu0 %2011
      %2013 = vrot.lane.b32.xlu0 %v1754, 80
      %v2014 = vpop.permute.xlu0 %2013
      %2015 = vrot.lane.b32.xlu0 %v1755, 80
      %v2016 = vpop.permute.xlu0 %2015
      %2017 = vrot.lane.b32.xlu0 %v1756, 80
      %v2018 = vpop.permute.xlu0 %2017
      %2019 = vrot.lane.b32.xlu0 %v1757, 80
      %v2020 = vpop.permute.xlu0 %2019
      %2021 = vrot.lane.b32.xlu0 %v1758, 80
      %v2022 = vpop.permute.xlu0 %2021
      %2023 = vrot.lane.b32.xlu0 %v1759, 80
      %v2024 = vpop.permute.xlu0 %2023
      %2025 = vrot.lane.b32.xlu0 %v1760, 80
      %v2026 = vpop.permute.xlu0 %2025
      %2027 = vrot.lane.b32.xlu0 %v1761, 80
      %v2028 = vpop.permute.xlu0 %2027
      %2029 = vrot.lane.b32.xlu0 %v1762, 80
      %v2030 = vpop.permute.xlu0 %2029
      %2031 = vrot.lane.b32.xlu0 %v1763, 80
      %v2032 = vpop.permute.xlu0 %2031
      %2033 = vrot.lane.b32.xlu0 %v1764, 80
      %v2034 = vpop.permute.xlu0 %2033
      %2035 = vrot.lane.b32.xlu0 %v1973, 80
      %v2036 = vpop.permute.xlu0 %2035
      %2037 = vrot.lane.b32.xlu0 %v1974, 80
      %v2038 = vpop.permute.xlu0 %2037
      %v2039 = vunpack.c.l.b16 %v286
      %v2040 = vunpack.c.l.b16 %v287
      %v2041 = vunpack.c.l.b16 %v288
      %v2042 = vunpack.c.l.b16 %v289
      %v2043 = vpack.c.b16 %v2040, %v2039
      %v2044 = vpack.c.b16 %v2042, %v2041
      %2045 = vrot.lane.b32.xlu0 %v1481, 96
      %v2046 = vpop.permute.xlu0 %2045
      %2047 = vrot.lane.b32.xlu0 %v1482, 96
      %v2048 = vpop.permute.xlu0 %2047
      %2049 = vrot.lane.b32.xlu0 %v1483, 96
      %v2050 = vpop.permute.xlu0 %2049
      %2051 = vrot.lane.b32.xlu0 %v1484, 96
      %v2052 = vpop.permute.xlu0 %2051
      %2053 = vrot.lane.b32.xlu0 %v1485, 96
      %v2054 = vpop.permute.xlu0 %2053
      %2055 = vrot.lane.b32.xlu0 %v1486, 96
      %v2056 = vpop.permute.xlu0 %2055
      %2057 = vrot.lane.b32.xlu0 %v1487, 96
      %v2058 = vpop.permute.xlu0 %2057
      %2059 = vrot.lane.b32.xlu0 %v1488, 96
      %v2060 = vpop.permute.xlu0 %2059
      %2061 = vrot.lane.b32.xlu0 %v1489, 96
      %v2062 = vpop.permute.xlu0 %2061
      %2063 = vrot.lane.b32.xlu0 %v1490, 96
      %v2064 = vpop.permute.xlu0 %2063
      %2065 = vrot.lane.b32.xlu0 %v1491, 96
      %v2066 = vpop.permute.xlu0 %2065
      %2067 = vrot.lane.b32.xlu0 %v1492, 96
      %v2068 = vpop.permute.xlu0 %2067
      %2069 = vrot.lane.b32.xlu0 %v1493, 96
      %v2070 = vpop.permute.xlu0 %2069
      %2071 = vrot.lane.b32.xlu0 %v1494, 96
      %v2072 = vpop.permute.xlu0 %2071
      %2073 = vrot.lane.b32.xlu0 %v1495, 96
      %v2074 = vpop.permute.xlu0 %2073
      %2075 = vrot.lane.b32.xlu0 %v1496, 96
      %v2076 = vpop.permute.xlu0 %2075
      %2077 = vrot.lane.b32.xlu0 %v1497, 96
      %v2078 = vpop.permute.xlu0 %2077
      %2079 = vrot.lane.b32.xlu0 %v1498, 96
      %v2080 = vpop.permute.xlu0 %2079
      %2081 = vrot.lane.b32.xlu0 %v1499, 96
      %v2082 = vpop.permute.xlu0 %2081
      %2083 = vrot.lane.b32.xlu0 %v1500, 96
      %v2084 = vpop.permute.xlu0 %2083
      %2085 = vrot.lane.b32.xlu0 %v1501, 96
      %v2086 = vpop.permute.xlu0 %2085
      %2087 = vrot.lane.b32.xlu0 %v1502, 96
      %v2088 = vpop.permute.xlu0 %2087
      %2089 = vrot.lane.b32.xlu0 %v1503, 96
      %v2090 = vpop.permute.xlu0 %2089
      %2091 = vrot.lane.b32.xlu0 %v1504, 96
      %v2092 = vpop.permute.xlu0 %2091
      %2093 = vrot.lane.b32.xlu0 %v1505, 96
      %v2094 = vpop.permute.xlu0 %2093
      %2095 = vrot.lane.b32.xlu0 %v1506, 96
      %v2096 = vpop.permute.xlu0 %2095
      %2097 = vrot.lane.b32.xlu0 %v1507, 96
      %v2098 = vpop.permute.xlu0 %2097
      %2099 = vrot.lane.b32.xlu0 %v1508, 96
      %v2100 = vpop.permute.xlu0 %2099
      %2101 = vrot.lane.b32.xlu0 %v1833, 96
      %v2102 = vpop.permute.xlu0 %2101
      %2103 = vrot.lane.b32.xlu0 %v1834, 96
      %v2104 = vpop.permute.xlu0 %2103
      %2105 = vrot.lane.b32.xlu0 %v2043, 96
      %v2106 = vpop.permute.xlu0 %2105
      %2107 = vrot.lane.b32.xlu0 %v2044, 96
      %v2108 = vpop.permute.xlu0 %2107
      %v2109 = vunpack.c.l.b16 %v1364
      %v2110 = vunpack.c.l.b16 %v1374
      %v2111 = vunpack.c.l.b16 %v1384
      %v2112 = vunpack.c.l.b16 %v1394
      %v2113 = vpack.c.b16 %v2110, %v2109
      %v2114 = vpack.c.b16 %v2112, %v2111
      %2115 = vrot.lane.b32.xlu0 %v1577, 112
      %v2116 = vpop.permute.xlu0 %2115
      %2117 = vrot.lane.b32.xlu0 %v1578, 112
      %v2118 = vpop.permute.xlu0 %2117
      %2119 = vrot.lane.b32.xlu0 %v1579, 112
      %v2120 = vpop.permute.xlu0 %2119
      %2121 = vrot.lane.b32.xlu0 %v1580, 112
      %v2122 = vpop.permute.xlu0 %2121
      %2123 = vrot.lane.b32.xlu0 %v1581, 112
      %v2124 = vpop.permute.xlu0 %2123
      %2125 = vrot.lane.b32.xlu0 %v1582, 112
      %v2126 = vpop.permute.xlu0 %2125
      %2127 = vrot.lane.b32.xlu0 %v1583, 112
      %v2128 = vpop.permute.xlu0 %2127
      %2129 = vrot.lane.b32.xlu0 %v1584, 112
      %v2130 = vpop.permute.xlu0 %2129
      %2131 = vrot.lane.b32.xlu0 %v1585, 112
      %v2132 = vpop.permute.xlu0 %2131
      %2133 = vrot.lane.b32.xlu0 %v1586, 112
      %v2134 = vpop.permute.xlu0 %2133
      %2135 = vrot.lane.b32.xlu0 %v1587, 112
      %v2136 = vpop.permute.xlu0 %2135
      %2137 = vrot.lane.b32.xlu0 %v1588, 112
      %v2138 = vpop.permute.xlu0 %2137
      %2139 = vrot.lane.b32.xlu0 %v1589, 112
      %v2140 = vpop.permute.xlu0 %2139
      %2141 = vrot.lane.b32.xlu0 %v1590, 112
      %v2142 = vpop.permute.xlu0 %2141
      %2143 = vrot.lane.b32.xlu0 %v1591, 112
      %v2144 = vpop.permute.xlu0 %2143
      %2145 = vrot.lane.b32.xlu0 %v1592, 112
      %v2146 = vpop.permute.xlu0 %2145
      %2147 = vrot.lane.b32.xlu0 %v1593, 112
      %v2148 = vpop.permute.xlu0 %2147
      %2149 = vrot.lane.b32.xlu0 %v1594, 112
      %v2150 = vpop.permute.xlu0 %2149
      %2151 = vrot.lane.b32.xlu0 %v1595, 112
      %v2152 = vpop.permute.xlu0 %2151
      %2153 = vrot.lane.b32.xlu0 %v1596, 112
      %v2154 = vpop.permute.xlu0 %2153
      %2155 = vrot.lane.b32.xlu0 %v1597, 112
      %v2156 = vpop.permute.xlu0 %2155
      %2157 = vrot.lane.b32.xlu0 %v1598, 112
      %v2158 = vpop.permute.xlu0 %2157
      %2159 = vrot.lane.b32.xlu0 %v1599, 112
      %v2160 = vpop.permute.xlu0 %2159
      %2161 = vrot.lane.b32.xlu0 %v1600, 112
      %v2162 = vpop.permute.xlu0 %2161
      %2163 = vrot.lane.b32.xlu0 %v1601, 112
      %v2164 = vpop.permute.xlu0 %2163
      %2165 = vrot.lane.b32.xlu0 %v1602, 112
      %v2166 = vpop.permute.xlu0 %2165
      %2167 = vrot.lane.b32.xlu0 %v1603, 112
      %v2168 = vpop.permute.xlu0 %2167
      %2169 = vrot.lane.b32.xlu0 %v1604, 112
      %v2170 = vpop.permute.xlu0 %2169
      %2171 = vrot.lane.b32.xlu0 %v1903, 112
      %v2172 = vpop.permute.xlu0 %2171
      %2173 = vrot.lane.b32.xlu0 %v1904, 112
      %v2174 = vpop.permute.xlu0 %2173
      %2175 = vrot.lane.b32.xlu0 %v2113, 112
      %v2176 = vpop.permute.xlu0 %2175
      %2177 = vrot.lane.b32.xlu0 %v2114, 112
      %v2178 = vpop.permute.xlu0 %2177
      %v2179 = vunpack.c.l.b16 %v1403
      %v2180 = vunpack.c.l.b16 %v1406
      %v2181 = vunpack.c.l.b16 %v1409
      %v2182 = vunpack.c.l.b16 %v1412
      %v2183 = vpack.c.b16 %v2180, %v2179
      %v2184 = vpack.c.b16 %v2182, %v2181
      %vm2185 = vcmask 130048
      %v2188 = vsel %vm2185, %v1477, %v1606
      %v2191 = vsel %vm2185, %v1478, %v1608
      %v2194 = vsel %vm2185, %v1479, %v1610
      %v2197 = vsel %vm2185, %v1480, %v1612
      %v2200 = vsel %vm2185, %v1481, %v1614
      %v2203 = vsel %vm2185, %v1482, %v1616
      %v2206 = vsel %vm2185, %v1483, %v1618
      %v2209 = vsel %vm2185, %v1484, %v1620
      %v2212 = vsel %vm2185, %v1485, %v1622
      %v2215 = vsel %vm2185, %v1486, %v1624
      %v2218 = vsel %vm2185, %v1487, %v1626
      %v2221 = vsel %vm2185, %v1488, %v1628
      %v2224 = vsel %vm2185, %v1489, %v1630
      %v2227 = vsel %vm2185, %v1490, %v1632
      %v2230 = vsel %vm2185, %v1491, %v1634
      %v2233 = vsel %vm2185, %v1492, %v1636
      %v2236 = vsel %vm2185, %v1493, %v1638
      %v2239 = vsel %vm2185, %v1494, %v1640
      %v2242 = vsel %vm2185, %v1495, %v1642
      %v2245 = vsel %vm2185, %v1496, %v1644
      %v2248 = vsel %vm2185, %v1497, %v1646
      %v2251 = vsel %vm2185, %v1498, %v1648
      %v2254 = vsel %vm2185, %v1499, %v1650
      %v2257 = vsel %vm2185, %v1500, %v1652
      %v2260 = vsel %vm2185, %v1501, %v1654
      %v2263 = vsel %vm2185, %v1502, %v1656
      %v2266 = vsel %vm2185, %v1503, %v1658
      %v2269 = vsel %vm2185, %v1504, %v1660
      %v2272 = vsel %vm2185, %v1505, %v1662
      %v2275 = vsel %vm2185, %v1506, %v1664
      %v2278 = vsel %vm2185, %v1507, %v1666
      %v2281 = vsel %vm2185, %v1508, %v1668
      %vm2282 = vcmask 261120
      %v2284 = vsel %vm2282, %v2188, %v1766
      %v2286 = vsel %vm2282, %v2191, %v1768
      %v2288 = vsel %vm2282, %v2194, %v1770
      %v2290 = vsel %vm2282, %v2197, %v1772
      %v2292 = vsel %vm2282, %v2200, %v1774
      %v2294 = vsel %vm2282, %v2203, %v1776
      %v2296 = vsel %vm2282, %v2206, %v1778
      %v2298 = vsel %vm2282, %v2209, %v1780
      %v2300 = vsel %vm2282, %v2212, %v1782
      %v2302 = vsel %vm2282, %v2215, %v1784
      %v2304 = vsel %vm2282, %v2218, %v1786
      %v2306 = vsel %vm2282, %v2221, %v1788
      %v2308 = vsel %vm2282, %v2224, %v1790
      %v2310 = vsel %vm2282, %v2227, %v1792
      %v2312 = vsel %vm2282, %v2230, %v1794
      %v2314 = vsel %vm2282, %v2233, %v1796
      %v2316 = vsel %vm2282, %v2236, %v1798
      %v2318 = vsel %vm2282, %v2239, %v1800
      %v2320 = vsel %vm2282, %v2242, %v1802
      %v2322 = vsel %vm2282, %v2245, %v1804
      %v2324 = vsel %vm2282, %v2248, %v1806
      %v2326 = vsel %vm2282, %v2251, %v1808
      %v2328 = vsel %vm2282, %v2254, %v1810
      %v2330 = vsel %vm2282, %v2257, %v1812
      %v2332 = vsel %vm2282, %v2260, %v1814
      %v2334 = vsel %vm2282, %v2263, %v1816
      %v2336 = vsel %vm2282, %v2266, %v1818
      %v2338 = vsel %vm2282, %v2269, %v1820
      %v2340 = vsel %vm2282, %v2272, %v1822
      %v2342 = vsel %vm2282, %v2275, %v1824
      %v2344 = vsel %vm2282, %v2278, %v1826
      %v2346 = vsel %vm2282, %v2281, %v1828
      %vm2347 = vcmask 392192
      %v2349 = vsel %vm2347, %v2284, %v1836
      %v2351 = vsel %vm2347, %v2286, %v1838
      %v2353 = vsel %vm2347, %v2288, %v1840
      %v2355 = vsel %vm2347, %v2290, %v1842
      %v2357 = vsel %vm2347, %v2292, %v1844
      %v2359 = vsel %vm2347, %v2294, %v1846
      %v2361 = vsel %vm2347, %v2296, %v1848
      %v2363 = vsel %vm2347, %v2298, %v1850
      %v2365 = vsel %vm2347, %v2300, %v1852
      %v2367 = vsel %vm2347, %v2302, %v1854
      %v2369 = vsel %vm2347, %v2304, %v1856
      %v2371 = vsel %vm2347, %v2306, %v1858
      %v2373 = vsel %vm2347, %v2308, %v1860
      %v2375 = vsel %vm2347, %v2310, %v1862
      %v2377 = vsel %vm2347, %v2312, %v1864
      %v2379 = vsel %vm2347, %v2314, %v1866
      %v2381 = vsel %vm2347, %v2316, %v1868
      %v2383 = vsel %vm2347, %v2318, %v1870
      %v2385 = vsel %vm2347, %v2320, %v1872
      %v2387 = vsel %vm2347, %v2322, %v1874
      %v2389 = vsel %vm2347, %v2324, %v1876
      %v2391 = vsel %vm2347, %v2326, %v1878
      %v2393 = vsel %vm2347, %v2328, %v1880
      %v2395 = vsel %vm2347, %v2330, %v1882
      %v2397 = vsel %vm2347, %v2332, %v1884
      %v2399 = vsel %vm2347, %v2334, %v1886
      %v2401 = vsel %vm2347, %v2336, %v1888
      %v2403 = vsel %vm2347, %v2338, %v1890
      %v2405 = vsel %vm2347, %v2340, %v1892
      %v2407 = vsel %vm2347, %v2342, %v1894
      %v2409 = vsel %vm2347, %v2344, %v1896
      %v2411 = vsel %vm2347, %v2346, %v1898
      %vm2412 = vcmask 523264
      %v2414 = vsel %vm2412, %v2349, %v1906
      %v2416 = vsel %vm2412, %v2351, %v1908
      %v2418 = vsel %vm2412, %v2353, %v1910
      %v2420 = vsel %vm2412, %v2355, %v1912
      %v2422 = vsel %vm2412, %v2357, %v1914
      %v2424 = vsel %vm2412, %v2359, %v1916
      %v2426 = vsel %vm2412, %v2361, %v1918
      %v2428 = vsel %vm2412, %v2363, %v1920
      %v2430 = vsel %vm2412, %v2365, %v1922
      %v2432 = vsel %vm2412, %v2367, %v1924
      %v2434 = vsel %vm2412, %v2369, %v1926
      %v2436 = vsel %vm2412, %v2371, %v1928
      %v2438 = vsel %vm2412, %v2373, %v1930
      %v2440 = vsel %vm2412, %v2375, %v1932
      %v2442 = vsel %vm2412, %v2377, %v1934
      %v2444 = vsel %vm2412, %v2379, %v1936
      %v2446 = vsel %vm2412, %v2381, %v1938
      %v2448 = vsel %vm2412, %v2383, %v1940
      %v2450 = vsel %vm2412, %v2385, %v1942
      %v2452 = vsel %vm2412, %v2387, %v1944
      %v2454 = vsel %vm2412, %v2389, %v1946
      %v2456 = vsel %vm2412, %v2391, %v1948
      %v2458 = vsel %vm2412, %v2393, %v1950
      %v2460 = vsel %vm2412, %v2395, %v1952
      %v2462 = vsel %vm2412, %v2397, %v1954
      %v2464 = vsel %vm2412, %v2399, %v1956
      %v2466 = vsel %vm2412, %v2401, %v1958
      %v2468 = vsel %vm2412, %v2403, %v1960
      %v2470 = vsel %vm2412, %v2405, %v1962
      %v2472 = vsel %vm2412, %v2407, %v1964
      %v2474 = vsel %vm2412, %v2409, %v1966
      %v2476 = vsel %vm2412, %v2411, %v1968
      %vm2477 = vcmask 654336
      %v2479 = vsel %vm2477, %v2414, %v1976
      %v2481 = vsel %vm2477, %v2416, %v1978
      %v2483 = vsel %vm2477, %v2418, %v1980
      %v2485 = vsel %vm2477, %v2420, %v1982
      %v2487 = vsel %vm2477, %v2422, %v1984
      %v2489 = vsel %vm2477, %v2424, %v1986
      %v2491 = vsel %vm2477, %v2426, %v1988
      %v2493 = vsel %vm2477, %v2428, %v1990
      %v2495 = vsel %vm2477, %v2430, %v1992
      %v2497 = vsel %vm2477, %v2432, %v1994
      %v2499 = vsel %vm2477, %v2434, %v1996
      %v2501 = vsel %vm2477, %v2436, %v1998
      %v2503 = vsel %vm2477, %v2438, %v2000
      %v2505 = vsel %vm2477, %v2440, %v2002
      %v2507 = vsel %vm2477, %v2442, %v2004
      %v2509 = vsel %vm2477, %v2444, %v2006
      %v2511 = vsel %vm2477, %v2446, %v2008
      %v2513 = vsel %vm2477, %v2448, %v2010
      %v2515 = vsel %vm2477, %v2450, %v2012
      %v2517 = vsel %vm2477, %v2452, %v2014
      %v2519 = vsel %vm2477, %v2454, %v2016
      %v2521 = vsel %vm2477, %v2456, %v2018
      %v2523 = vsel %vm2477, %v2458, %v2020
      %v2525 = vsel %vm2477, %v2460, %v2022
      %v2527 = vsel %vm2477, %v2462, %v2024
      %v2529 = vsel %vm2477, %v2464, %v2026
      %v2531 = vsel %vm2477, %v2466, %v2028
      %v2533 = vsel %vm2477, %v2468, %v2030
      %v2535 = vsel %vm2477, %v2470, %v2032
      %v2537 = vsel %vm2477, %v2472, %v2034
      %v2539 = vsel %vm2477, %v2474, %v2036
      %v2541 = vsel %vm2477, %v2476, %v2038
      %vm2542 = vcmask 785408
      %v2544 = vsel %vm2542, %v2479, %v2046
      %v2546 = vsel %vm2542, %v2481, %v2048
      %v2548 = vsel %vm2542, %v2483, %v2050
      %v2550 = vsel %vm2542, %v2485, %v2052
      %v2552 = vsel %vm2542, %v2487, %v2054
      %v2554 = vsel %vm2542, %v2489, %v2056
      %v2556 = vsel %vm2542, %v2491, %v2058
      %v2558 = vsel %vm2542, %v2493, %v2060
      %v2560 = vsel %vm2542, %v2495, %v2062
      %v2562 = vsel %vm2542, %v2497, %v2064
      %v2564 = vsel %vm2542, %v2499, %v2066
      %v2566 = vsel %vm2542, %v2501, %v2068
      %v2568 = vsel %vm2542, %v2503, %v2070
      %v2570 = vsel %vm2542, %v2505, %v2072
      %v2572 = vsel %vm2542, %v2507, %v2074
      %v2574 = vsel %vm2542, %v2509, %v2076
      %v2576 = vsel %vm2542, %v2511, %v2078
      %v2578 = vsel %vm2542, %v2513, %v2080
      %v2580 = vsel %vm2542, %v2515, %v2082
      %v2582 = vsel %vm2542, %v2517, %v2084
      %v2584 = vsel %vm2542, %v2519, %v2086
      %v2586 = vsel %vm2542, %v2521, %v2088
      %v2588 = vsel %vm2542, %v2523, %v2090
      %v2590 = vsel %vm2542, %v2525, %v2092
      %v2592 = vsel %vm2542, %v2527, %v2094
      %v2594 = vsel %vm2542, %v2529, %v2096
      %v2596 = vsel %vm2542, %v2531, %v2098
      %v2598 = vsel %vm2542, %v2533, %v2100
      %v2600 = vsel %vm2542, %v2535, %v2102
      %v2602 = vsel %vm2542, %v2537, %v2104
      %v2604 = vsel %vm2542, %v2539, %v2106
      %v2606 = vsel %vm2542, %v2541, %v2108
      %vm2607 = vcmask 916480
      %v2609 = vsel %vm2607, %v2544, %v2116
      %v2612 = vsel %vm2607, %v2546, %v2118
      %v2615 = vsel %vm2607, %v2548, %v2120
      %v2618 = vsel %vm2607, %v2550, %v2122
      %v2621 = vsel %vm2607, %v2552, %v2124
      %v2624 = vsel %vm2607, %v2554, %v2126
      %v2627 = vsel %vm2607, %v2556, %v2128
      %v2630 = vsel %vm2607, %v2558, %v2130
      %v2633 = vsel %vm2607, %v2560, %v2132
      %v2636 = vsel %vm2607, %v2562, %v2134
      %v2639 = vsel %vm2607, %v2564, %v2136
      %v2642 = vsel %vm2607, %v2566, %v2138
      %v2645 = vsel %vm2607, %v2568, %v2140
      %v2648 = vsel %vm2607, %v2570, %v2142
      %v2651 = vsel %vm2607, %v2572, %v2144
      %v2654 = vsel %vm2607, %v2574, %v2146
      %v2657 = vsel %vm2607, %v2576, %v2148
      %v2660 = vsel %vm2607, %v2578, %v2150
      %v2663 = vsel %vm2607, %v2580, %v2152
      %v2666 = vsel %vm2607, %v2582, %v2154
      %v2669 = vsel %vm2607, %v2584, %v2156
      %v2672 = vsel %vm2607, %v2586, %v2158
      %v2675 = vsel %vm2607, %v2588, %v2160
      %v2678 = vsel %vm2607, %v2590, %v2162
      %v2681 = vsel %vm2607, %v2592, %v2164
      %v2684 = vsel %vm2607, %v2594, %v2166
      %v2687 = vsel %vm2607, %v2596, %v2168
      %v2690 = vsel %vm2607, %v2598, %v2170
      %v2693 = vsel %vm2607, %v2600, %v2172
      %v2696 = vsel %vm2607, %v2602, %v2174
      %v2699 = vsel %vm2607, %v2604, %v2176
      %v2702 = vsel %vm2607, %v2606, %v2178
      %v2704 = vld [vmem:[%s1] sm:$0xf]
      %v2705 = vld [vmem:[%s1 + $0x4] sm:$0xf]
      %v2706 = vld [vmem:[%s1 + $0x8] sm:$0xf]
      %v2707 = vld [vmem:[%s1 + $0xc] sm:$0xf]
      %v2708 = vld [vmem:[%s1 + $0x10] sm:$0xf]
      %v2709 = vld [vmem:[%s1 + $0x14] sm:$0xf]
      %v2710 = vld [vmem:[%s1 + $0x18] sm:$0xf]
      %v2711 = vld [vmem:[%s1 + $0x1c] sm:$0xf]
      %v2712 = vld [vmem:[%s1 + $0x20] sm:$0xf]
      %v2713 = vld [vmem:[%s1 + $0x24] sm:$0xf]
      %v2714 = vld [vmem:[%s1 + $0x28] sm:$0xf]
      %v2715 = vld [vmem:[%s1 + $0x2c] sm:$0xf]
      %v2716 = vld [vmem:[%s1 + $0x30] sm:$0xf]
      %v2717 = vld [vmem:[%s1 + $0x34] sm:$0xf]
      %v2718 = vld [vmem:[%s1 + $0x38] sm:$0xf]
      %v2719 = vld [vmem:[%s1 + $0x3c] sm:$0xf]
      %v2720 = vld [vmem:[%s1 + $0x40] sm:$0xf]
      %v2721 = vld [vmem:[%s1 + $0x44] sm:$0xf]
      %v2722 = vld [vmem:[%s2] sm:$0x1]
      %v2724 = vlaneseq
      %v2725 = vshrl.u32 %v2724, 7
      %v2726 = vsub.s32 0, %v2725
      %v2727 = vrot.slane %v2722, %v2726
      %v2747 = vunpack.c.l.b16 %v2704
      %v2748 = vunpack.c.l.b16 %v2705
      %v2749 = vunpack.c.l.b16 %v2706
      %v2750 = vunpack.c.l.b16 %v2707
      %v2751 = vunpack.c.l.b16 %v2708
      %v2752 = vunpack.c.l.b16 %v2709
      %v2753 = vunpack.c.l.b16 %v2710
      %v2754 = vunpack.c.l.b16 %v2711
      %v2755 = vunpack.c.l.b16 %v2712
      %v2756 = vunpack.c.l.b16 %v2713
      %v2757 = vunpack.c.l.b16 %v2714
      %v2758 = vunpack.c.l.b16 %v2715
      %v2759 = vunpack.c.l.b16 %v2716
      %v2760 = vunpack.c.l.b16 %v2717
      %v2761 = vunpack.c.l.b16 %v2718
      %v2762 = vunpack.c.l.b16 %v2719
      %v2763 = vunpack.c.l.b16 %v2720
      %v2764 = vunpack.c.l.b16 %v2721
      %v2765 = vpack.c.b16 %v2748, %v2747
      %v2766 = vpack.c.b16 %v2750, %v2749
      %v2767 = vpack.c.b16 %v2752, %v2751
      %v2768 = vpack.c.b16 %v2754, %v2753
      %v2769 = vpack.c.b16 %v2756, %v2755
      %v2770 = vpack.c.b16 %v2758, %v2757
      %v2771 = vpack.c.b16 %v2760, %v2759
      %v2772 = vpack.c.b16 %v2762, %v2761
      %v2773 = vpack.c.b16 %v2764, %v2763
      %v2784 = vsel %vm2185, %v1737, 0
      %v2787 = vsel %vm2185, %v1738, 0
      %v2790 = vsel %vm2185, %v1739, 0
      %v2793 = vsel %vm2185, %v1740, 0
      %v2796 = vsel %vm2185, %v1741, 0
      %v2799 = vsel %vm2185, %v1742, 0
      %v2802 = vsel %vm2185, %v1743, 0
      %v2805 = vsel %vm2185, %v1744, 0
      %v2808 = vsel %vm2185, %v1745, 0
      %v2811 = vsel %vm2185, %v1746, 0
      %v2814 = vsel %vm2185, %v1747, 0
      %v2817 = vsel %vm2185, %v1748, 0
      %v2820 = vsel %vm2185, %v1749, 0
      %v2823 = vsel %vm2185, %v1750, 0
      %v2826 = vsel %vm2185, %v1751, 0
      %v2829 = vsel %vm2185, %v1752, 0
      %v2832 = vsel %vm2185, %v1753, 0
      %v2835 = vsel %vm2185, %v1754, 0
      %v2838 = vsel %vm2185, %v1755, 0
      %v2841 = vsel %vm2185, %v1756, 0
      %v2844 = vsel %vm2185, %v1757, 0
      %v2847 = vsel %vm2185, %v1758, 0
      %v2850 = vsel %vm2185, %v1759, 0
      %v2853 = vsel %vm2185, %v1760, 0
      %v2856 = vsel %vm2185, %v1761, 0
      %v2859 = vsel %vm2185, %v1762, 0
      %v2862 = vsel %vm2185, %v1763, 0
      %v2865 = vsel %vm2185, %v1764, 0
      %v2868 = vsel %vm2185, %v1973, 0
      %v2871 = vsel %vm2185, %v1974, 0
      %v2874 = vsel %vm2185, %v2183, 0
      %v2877 = vsel %vm2185, %v2184, 0
      %2879 = vmatprep.subr.bf16.mxu0 0
      %2880 = vmatpush1.bf16.msra.mxu0 %v2765
      %2881 = vmatprep.subr.bf16.mxu0 0
      %2882 = vmatpush1.bf16.msra.mxu0 %v2766
      %2883 = vmatprep.subr.bf16.mxu0 0
      %2884 = vmatpush1.bf16.msra.mxu0 %v2767
      %2885 = vmatprep.subr.bf16.mxu0 0
      %2886 = vmatpush1.bf16.msra.mxu0 %v2768
      %2887 = vmatprep.subr.bf16.mxu0 0
      %2888 = vmatpush1.bf16.msra.mxu0 %v2769
      %2889 = vmatprep.subr.bf16.mxu0 0
      %2890 = vmatpush1.bf16.msra.mxu0 %v2770
      %2891 = vmatprep.subr.bf16.mxu0 0
      %2892 = vmatpush1.bf16.msra.mxu0 %v2771
      %2893 = vmatprep.subr.bf16.mxu0 0
      %2894 = vmatpush1.bf16.msra.mxu0 %v2772
      %2895 = vmatprep.subr.bf16.mxu0 0
      %2896 = vmatpush1.bf16.msra.mxu0 %v2773
      %2897 = vmatprep.subr.bf16.mxu0 0
      %2898 = vmatpush1.bf16.msra.mxu0 0
      %2899 = vmatprep.subr.bf16.mxu0 0
      %2900 = vmatpush1.bf16.msra.mxu0 0
      %2901 = vmatprep.subr.bf16.mxu0 0
      %2902 = vmatpush1.bf16.msra.mxu0 0
      %2903 = vmatprep.subr.bf16.mxu0 0
      %2904 = vmatpush1.bf16.msra.mxu0 0
      %2905 = vmatprep.subr.bf16.mxu0 0
      %2906 = vmatpush1.bf16.msra.mxu0 0
      %2907 = vmatprep.subr.bf16.mxu0 0
      %2908 = vmatpush1.bf16.msra.mxu0 0
      %2909 = vmatprep.subr.bf16.mxu0 0
      %2910 = vmatpush1.bf16.msra.mxu0 0
      %2911 = vmatprep.mubr.bf16.mxu0 %v2784
      %2912 = vmatmul.mubr.bf16.gmra.mrb[0].mxu0 %v2609
      %v2913 = vpop.f32.mrb[0].mxu0
      %v2914 = vadd.f32 %v2727, %v2913
      %v2915 = vpop.f32.mrb[0].mxu0
      %v2916 = vpop.f32.mrb[0].mxu0
      %v2917 = vadd.f32 %v2727, %v2916
      %v2918 = vpop.f32.mrb[0].mxu0
      %2919 = vmatprep.mubr.bf16.mxu0 %v2787
      %2920 = vmatmul.mubr.bf16.gmra.mrb[0].mxu0 %v2612
      %v2921 = vpop.f32.mrb[0].mxu0
      %v2922 = vadd.f32 %v2727, %v2921
      %v2923 = vpop.f32.mrb[0].mxu0
      %v2924 = vpop.f32.mrb[0].mxu0
      %v2925 = vadd.f32 %v2727, %v2924
      %v2926 = vpop.f32.mrb[0].mxu0
      %2927 = vmatprep.mubr.bf16.mxu0 %v2790
      %2928 = vmatmul.mubr.bf16.gmra.mrb[0].mxu0 %v2615
      %v2929 = vpop.f32.mrb[0].mxu0
      %v2930 = vadd.f32 %v2727, %v2929
      %v2931 = vpop.f32.mrb[0].mxu0
      %v2932 = vpop.f32.mrb[0].mxu0
      %v2933 = vadd.f32 %v2727, %v2932
      %v2934 = vpop.f32.mrb[0].mxu0
      %2935 = vmatprep.mubr.bf16.mxu0 %v2793
      %2936 = vmatmul.mubr.bf16.gmra.mrb[0].mxu0 %v2618
      %v2937 = vpop.f32.mrb[0].mxu0
      %v2938 = vadd.f32 %v2727, %v2937
      %v2939 = vpop.f32.mrb[0].mxu0
      %v2940 = vpop.f32.mrb[0].mxu0
      %v2941 = vadd.f32 %v2727, %v2940
      %v2942 = vpop.f32.mrb[0].mxu0
      %2943 = vmatprep.mubr.bf16.mxu0 %v2796
      %2944 = vmatmul.mubr.bf16.gmra.mrb[0].mxu0 %v2621
      %v2945 = vpop.f32.mrb[0].mxu0
      %v2946 = vadd.f32 %v2727, %v2945
      %v2947 = vpop.f32.mrb[0].mxu0
      %v2948 = vpop.f32.mrb[0].mxu0
      %v2949 = vadd.f32 %v2727, %v2948
      %v2950 = vpop.f32.mrb[0].mxu0
      %2951 = vmatprep.mubr.bf16.mxu0 %v2799
      %2952 = vmatmul.mubr.bf16.gmra.mrb[0].mxu0 %v2624
      %v2953 = vpop.f32.mrb[0].mxu0
      %v2954 = vadd.f32 %v2727, %v2953
      %v2955 = vpop.f32.mrb[0].mxu0
      %v2956 = vpop.f32.mrb[0].mxu0
      %v2957 = vadd.f32 %v2727, %v2956
      %v2958 = vpop.f32.mrb[0].mxu0
      %2959 = vmatprep.mubr.bf16.mxu0 %v2802
      %2960 = vmatmul.mubr.bf16.gmra.mrb[0].mxu0 %v2627
      %v2961 = vpop.f32.mrb[0].mxu0
      %v2962 = vadd.f32 %v2727, %v2961
      %v2963 = vpop.f32.mrb[0].mxu0
      %v2964 = vpop.f32.mrb[0].mxu0
      %v2965 = vadd.f32 %v2727, %v2964
      %v2966 = vpop.f32.mrb[0].mxu0
      %2967 = vmatprep.mubr.bf16.mxu0 %v2805
      %2968 = vmatmul.mubr.bf16.gmra.mrb[0].mxu0 %v2630
      %v2969 = vpop.f32.mrb[0].mxu0
      %v2970 = vadd.f32 %v2727, %v2969
      %v2971 = vpop.f32.mrb[0].mxu0
      %v2972 = vpop.f32.mrb[0].mxu0
      %v2973 = vadd.f32 %v2727, %v2972
      %v2974 = vpop.f32.mrb[0].mxu0
      %2975 = vmatprep.mubr.bf16.mxu0 %v2808
      %2976 = vmatmul.mubr.bf16.gmra.mrb[0].mxu0 %v2633
      %v2977 = vpop.f32.mrb[0].mxu0
      %v2978 = vadd.f32 %v2727, %v2977
      %v2979 = vpop.f32.mrb[0].mxu0
      %v2980 = vpop.f32.mrb[0].mxu0
      %v2981 = vadd.f32 %v2727, %v2980
      %v2982 = vpop.f32.mrb[0].mxu0
      %2983 = vmatprep.mubr.bf16.mxu0 %v2811
      %2984 = vmatmul.mubr.bf16.gmra.mrb[0].mxu0 %v2636
      %v2985 = vpop.f32.mrb[0].mxu0
      %v2986 = vadd.f32 %v2727, %v2985
      %v2987 = vpop.f32.mrb[0].mxu0
      %v2988 = vpop.f32.mrb[0].mxu0
      %v2989 = vadd.f32 %v2727, %v2988
      %v2990 = vpop.f32.mrb[0].mxu0
      %2991 = vmatprep.mubr.bf16.mxu0 %v2814
      %2992 = vmatmul.mubr.bf16.gmra.mrb[0].mxu0 %v2639
      %v2993 = vpop.f32.mrb[0].mxu0
      %v2994 = vadd.f32 %v2727, %v2993
      %v2995 = vpop.f32.mrb[0].mxu0
      %v2996 = vpop.f32.mrb[0].mxu0
      %v2997 = vadd.f32 %v2727, %v2996
      %v2998 = vpop.f32.mrb[0].mxu0
      %2999 = vmatprep.mubr.bf16.mxu0 %v2817
      %3000 = vmatmul.mubr.bf16.gmra.mrb[0].mxu0 %v2642
      %v3001 = vpop.f32.mrb[0].mxu0
      %v3002 = vadd.f32 %v2727, %v3001
      %v3003 = vpop.f32.mrb[0].mxu0
      %v3004 = vpop.f32.mrb[0].mxu0
      %v3005 = vadd.f32 %v2727, %v3004
      %v3006 = vpop.f32.mrb[0].mxu0
      %3007 = vmatprep.mubr.bf16.mxu0 %v2820
      %3008 = vmatmul.mubr.bf16.gmra.mrb[0].mxu0 %v2645
      %v3009 = vpop.f32.mrb[0].mxu0
      %v3010 = vadd.f32 %v2727, %v3009
      %v3011 = vpop.f32.mrb[0].mxu0
      %v3012 = vpop.f32.mrb[0].mxu0
      %v3013 = vadd.f32 %v2727, %v3012
      %v3014 = vpop.f32.mrb[0].mxu0
      %3015 = vmatprep.mubr.bf16.mxu0 %v2823
      %3016 = vmatmul.mubr.bf16.gmra.mrb[0].mxu0 %v2648
      %v3017 = vpop.f32.mrb[0].mxu0
      %v3018 = vadd.f32 %v2727, %v3017
      %v3019 = vpop.f32.mrb[0].mxu0
      %v3020 = vpop.f32.mrb[0].mxu0
      %v3021 = vadd.f32 %v2727, %v3020
      %v3022 = vpop.f32.mrb[0].mxu0
      %3023 = vmatprep.mubr.bf16.mxu0 %v2826
      %3024 = vmatmul.mubr.bf16.gmra.mrb[0].mxu0 %v2651
      %v3025 = vpop.f32.mrb[0].mxu0
      %v3026 = vadd.f32 %v2727, %v3025
      %v3027 = vpop.f32.mrb[0].mxu0
      %v3028 = vpop.f32.mrb[0].mxu0
      %v3029 = vadd.f32 %v2727, %v3028
      %v3030 = vpop.f32.mrb[0].mxu0
      %3031 = vmatprep.mubr.bf16.mxu0 %v2829
      %3032 = vmatmul.mubr.bf16.gmra.mrb[0].mxu0 %v2654
      %v3033 = vpop.f32.mrb[0].mxu0
      %v3034 = vadd.f32 %v2727, %v3033
      %v3035 = vpop.f32.mrb[0].mxu0
      %v3036 = vpop.f32.mrb[0].mxu0
      %v3037 = vadd.f32 %v2727, %v3036
      %v3038 = vpop.f32.mrb[0].mxu0
      %3039 = vmatprep.mubr.bf16.mxu0 %v2832
      %3040 = vmatmul.mubr.bf16.gmra.mrb[0].mxu0 %v2657
      %v3041 = vpop.f32.mrb[0].mxu0
      %v3042 = vadd.f32 %v2727, %v3041
      %v3043 = vpop.f32.mrb[0].mxu0
      %v3044 = vpop.f32.mrb[0].mxu0
      %v3045 = vadd.f32 %v2727, %v3044
      %v3046 = vpop.f32.mrb[0].mxu0
      %3047 = vmatprep.mubr.bf16.mxu0 %v2835
      %3048 = vmatmul.mubr.bf16.gmra.mrb[0].mxu0 %v2660
      %v3049 = vpop.f32.mrb[0].mxu0
      %v3050 = vadd.f32 %v2727, %v3049
      %v3051 = vpop.f32.mrb[0].mxu0
      %v3052 = vpop.f32.mrb[0].mxu0
      %v3053 = vadd.f32 %v2727, %v3052
      %v3054 = vpop.f32.mrb[0].mxu0
      %3055 = vmatprep.mubr.bf16.mxu0 %v2838
      %3056 = vmatmul.mubr.bf16.gmra.mrb[0].mxu0 %v2663
      %v3057 = vpop.f32.mrb[0].mxu0
      %v3058 = vadd.f32 %v2727, %v3057
      %v3059 = vpop.f32.mrb[0].mxu0
      %v3060 = vpop.f32.mrb[0].mxu0
      %v3061 = vadd.f32 %v2727, %v3060
      %v3062 = vpop.f32.mrb[0].mxu0
      %3063 = vmatprep.mubr.bf16.mxu0 %v2841
      %3064 = vmatmul.mubr.bf16.gmra.mrb[0].mxu0 %v2666
      %v3065 = vpop.f32.mrb[0].mxu0
      %v3066 = vadd.f32 %v2727, %v3065
      %v3067 = vpop.f32.mrb[0].mxu0
      %v3068 = vpop.f32.mrb[0].mxu0
      %v3069 = vadd.f32 %v2727, %v3068
      %v3070 = vpop.f32.mrb[0].mxu0
      %3071 = vmatprep.mubr.bf16.mxu0 %v2844
      %3072 = vmatmul.mubr.bf16.gmra.mrb[0].mxu0 %v2669
      %v3073 = vpop.f32.mrb[0].mxu0
      %v3074 = vadd.f32 %v2727, %v3073
      %v3075 = vpop.f32.mrb[0].mxu0
      %v3076 = vpop.f32.mrb[0].mxu0
      %v3077 = vadd.f32 %v2727, %v3076
      %v3078 = vpop.f32.mrb[0].mxu0
      %3079 = vmatprep.mubr.bf16.mxu0 %v2847
      %3080 = vmatmul.mubr.bf16.gmra.mrb[0].mxu0 %v2672
      %v3081 = vpop.f32.mrb[0].mxu0
      %v3082 = vadd.f32 %v2727, %v3081
      %v3083 = vpop.f32.mrb[0].mxu0
      %v3084 = vpop.f32.mrb[0].mxu0
      %v3085 = vadd.f32 %v2727, %v3084
      %v3086 = vpop.f32.mrb[0].mxu0
      %3087 = vmatprep.mubr.bf16.mxu0 %v2850
      %3088 = vmatmul.mubr.bf16.gmra.mrb[0].mxu0 %v2675
      %v3089 = vpop.f32.mrb[0].mxu0
      %v3090 = vadd.f32 %v2727, %v3089
      %v3091 = vpop.f32.mrb[0].mxu0
      %v3092 = vpop.f32.mrb[0].mxu0
      %v3093 = vadd.f32 %v2727, %v3092
      %v3094 = vpop.f32.mrb[0].mxu0
      %3095 = vmatprep.mubr.bf16.mxu0 %v2853
      %3096 = vmatmul.mubr.bf16.gmra.mrb[0].mxu0 %v2678
      %v3097 = vpop.f32.mrb[0].mxu0
      %v3098 = vadd.f32 %v2727, %v3097
      %v3099 = vpop.f32.mrb[0].mxu0
      %v3100 = vpop.f32.mrb[0].mxu0
      %v3101 = vadd.f32 %v2727, %v3100
      %v3102 = vpop.f32.mrb[0].mxu0
      %3103 = vmatprep.mubr.bf16.mxu0 %v2856
      %3104 = vmatmul.mubr.bf16.gmra.mrb[0].mxu0 %v2681
      %v3105 = vpop.f32.mrb[0].mxu0
      %v3106 = vadd.f32 %v2727, %v3105
      %v3107 = vpop.f32.mrb[0].mxu0
      %v3108 = vpop.f32.mrb[0].mxu0
      %v3109 = vadd.f32 %v2727, %v3108
      %v3110 = vpop.f32.mrb[0].mxu0
      %3111 = vmatprep.mubr.bf16.mxu0 %v2859
      %3112 = vmatmul.mubr.bf16.gmra.mrb[0].mxu0 %v2684
      %v3113 = vpop.f32.mrb[0].mxu0
      %v3114 = vadd.f32 %v2727, %v3113
      %v3115 = vpop.f32.mrb[0].mxu0
      %v3116 = vpop.f32.mrb[0].mxu0
      %v3117 = vadd.f32 %v2727, %v3116
      %v3118 = vpop.f32.mrb[0].mxu0
      %3119 = vmatprep.mubr.bf16.mxu0 %v2862
      %3120 = vmatmul.mubr.bf16.gmra.mrb[0].mxu0 %v2687
      %v3121 = vpop.f32.mrb[0].mxu0
      %v3122 = vadd.f32 %v2727, %v3121
      %v3123 = vpop.f32.mrb[0].mxu0
      %v3124 = vpop.f32.mrb[0].mxu0
      %v3125 = vadd.f32 %v2727, %v3124
      %v3126 = vpop.f32.mrb[0].mxu0
      %3127 = vmatprep.mubr.bf16.mxu0 %v2865
      %3128 = vmatmul.mubr.bf16.gmra.mrb[0].mxu0 %v2690
      %v3129 = vpop.f32.mrb[0].mxu0
      %v3130 = vadd.f32 %v2727, %v3129
      %v3131 = vpop.f32.mrb[0].mxu0
      %v3132 = vpop.f32.mrb[0].mxu0
      %v3133 = vadd.f32 %v2727, %v3132
      %v3134 = vpop.f32.mrb[0].mxu0
      %3135 = vmatprep.mubr.bf16.mxu0 %v2868
      %3136 = vmatmul.mubr.bf16.gmra.mrb[0].mxu0 %v2693
      %v3137 = vpop.f32.mrb[0].mxu0
      %v3138 = vadd.f32 %v2727, %v3137
      %v3139 = vpop.f32.mrb[0].mxu0
      %v3140 = vpop.f32.mrb[0].mxu0
      %v3141 = vadd.f32 %v2727, %v3140
      %v3142 = vpop.f32.mrb[0].mxu0
      %3143 = vmatprep.mubr.bf16.mxu0 %v2871
      %3144 = vmatmul.mubr.bf16.gmra.mrb[0].mxu0 %v2696
      %v3145 = vpop.f32.mrb[0].mxu0
      %v3146 = vadd.f32 %v2727, %v3145
      %v3147 = vpop.f32.mrb[0].mxu0
      %v3148 = vpop.f32.mrb[0].mxu0
      %v3149 = vadd.f32 %v2727, %v3148
      %v3150 = vpop.f32.mrb[0].mxu0
      %3151 = vmatprep.mubr.bf16.mxu0 %v2874
      %3152 = vmatmul.mubr.bf16.gmra.mrb[0].mxu0 %v2699
      %v3153 = vpop.f32.mrb[0].mxu0
      %v3154 = vadd.f32 %v2727, %v3153
      %v3155 = vpop.f32.mrb[0].mxu0
      %v3156 = vpop.f32.mrb[0].mxu0
      %v3157 = vadd.f32 %v2727, %v3156
      %v3158 = vpop.f32.mrb[0].mxu0
      %3159 = vmatprep.mubr.bf16.mxu0 %v2877
      %3160 = vmatmul.mubr.bf16.gmra.mrb[0].mxu0 %v2702
      %v3161 = vpop.f32.mrb[0].mxu0
      %v3162 = vadd.f32 %v2727, %v3161
      %v3163 = vpop.f32.mrb[0].mxu0
      %v3164 = vpop.f32.mrb[0].mxu0
      %v3165 = vadd.f32 %v2727, %v3164
      %v3166 = vpop.f32.mrb[0].mxu0
      %3167 = vdwg.mxu0
      %v3168 = vmax.f32 %v2914, 0.0
      %v3169 = vmax.f32 %v2917, 0.0
      %v3170 = vmax.f32 %v2922, 0.0
      %v3171 = vmax.f32 %v2925, 0.0
      %v3172 = vmax.f32 %v2930, 0.0
      %v3173 = vmax.f32 %v2933, 0.0
      %v3174 = vmax.f32 %v2938, 0.0
      %v3175 = vmax.f32 %v2941, 0.0
      %v3176 = vmax.f32 %v2946, 0.0
      %v3177 = vmax.f32 %v2949, 0.0
      %v3178 = vmax.f32 %v2954, 0.0
      %v3179 = vmax.f32 %v2957, 0.0
      %v3180 = vmax.f32 %v2962, 0.0
      %v3181 = vmax.f32 %v2965, 0.0
      %v3182 = vmax.f32 %v2970, 0.0
      %v3183 = vmax.f32 %v2973, 0.0
      %v3184 = vmax.f32 %v2978, 0.0
      %v3185 = vmax.f32 %v2981, 0.0
      %v3186 = vmax.f32 %v2986, 0.0
      %v3187 = vmax.f32 %v2989, 0.0
      %v3188 = vmax.f32 %v2994, 0.0
      %v3189 = vmax.f32 %v2997, 0.0
      %v3190 = vmax.f32 %v3002, 0.0
      %v3191 = vmax.f32 %v3005, 0.0
      %v3192 = vmax.f32 %v3010, 0.0
      %v3193 = vmax.f32 %v3013, 0.0
      %v3194 = vmax.f32 %v3018, 0.0
      %v3195 = vmax.f32 %v3021, 0.0
      %v3196 = vmax.f32 %v3026, 0.0
      %v3197 = vmax.f32 %v3029, 0.0
      %v3198 = vmax.f32 %v3034, 0.0
      %v3199 = vmax.f32 %v3037, 0.0
      %v3200 = vmax.f32 %v3042, 0.0
      %v3201 = vmax.f32 %v3045, 0.0
      %v3202 = vmax.f32 %v3050, 0.0
      %v3203 = vmax.f32 %v3053, 0.0
      %v3204 = vmax.f32 %v3058, 0.0
      %v3205 = vmax.f32 %v3061, 0.0
      %v3206 = vmax.f32 %v3066, 0.0
      %v3207 = vmax.f32 %v3069, 0.0
      %v3208 = vmax.f32 %v3074, 0.0
      %v3209 = vmax.f32 %v3077, 0.0
      %v3210 = vmax.f32 %v3082, 0.0
      %v3211 = vmax.f32 %v3085, 0.0
      %v3212 = vmax.f32 %v3090, 0.0
      %v3213 = vmax.f32 %v3093, 0.0
      %v3214 = vmax.f32 %v3098, 0.0
      %v3215 = vmax.f32 %v3101, 0.0
      %v3216 = vmax.f32 %v3106, 0.0
      %v3217 = vmax.f32 %v3109, 0.0
      %v3218 = vmax.f32 %v3114, 0.0
      %v3219 = vmax.f32 %v3117, 0.0
      %v3220 = vmax.f32 %v3122, 0.0
      %v3221 = vmax.f32 %v3125, 0.0
      %v3222 = vmax.f32 %v3130, 0.0
      %v3223 = vmax.f32 %v3133, 0.0
      %v3224 = vmax.f32 %v3138, 0.0
      %v3225 = vmax.f32 %v3141, 0.0
      %v3226 = vmax.f32 %v3146, 0.0
      %v3227 = vmax.f32 %v3149, 0.0
      %v3228 = vmax.f32 %v3154, 0.0
      %v3229 = vmax.f32 %v3157, 0.0
      %v3230 = vmax.f32 %v3162, 0.0
      %v3231 = vmax.f32 %v3165, 0.0
      %v3232 = vpack.c.bf16 %v3169, %v3168
      %v3233 = vpack.c.bf16 %v3171, %v3170
      %v3234 = vpack.c.bf16 %v3173, %v3172
      %v3235 = vpack.c.bf16 %v3175, %v3174
      %v3236 = vpack.c.bf16 %v3177, %v3176
      %v3237 = vpack.c.bf16 %v3179, %v3178
      %v3238 = vpack.c.bf16 %v3181, %v3180
      %v3239 = vpack.c.bf16 %v3183, %v3182
      %v3240 = vpack.c.bf16 %v3185, %v3184
      %v3241 = vpack.c.bf16 %v3187, %v3186
      %v3242 = vpack.c.bf16 %v3189, %v3188
      %v3243 = vpack.c.bf16 %v3191, %v3190
      %v3244 = vpack.c.bf16 %v3193, %v3192
      %v3245 = vpack.c.bf16 %v3195, %v3194
      %v3246 = vpack.c.bf16 %v3197, %v3196
      %v3247 = vpack.c.bf16 %v3199, %v3198
      %v3248 = vpack.c.bf16 %v3201, %v3200
      %v3249 = vpack.c.bf16 %v3203, %v3202
      %v3250 = vpack.c.bf16 %v3205, %v3204
      %v3251 = vpack.c.bf16 %v3207, %v3206
      %v3252 = vpack.c.bf16 %v3209, %v3208
      %v3253 = vpack.c.bf16 %v3211, %v3210
      %v3254 = vpack.c.bf16 %v3213, %v3212
      %v3255 = vpack.c.bf16 %v3215, %v3214
      %v3256 = vpack.c.bf16 %v3217, %v3216
      %v3257 = vpack.c.bf16 %v3219, %v3218
      %v3258 = vpack.c.bf16 %v3221, %v3220
      %v3259 = vpack.c.bf16 %v3223, %v3222
      %v3260 = vpack.c.bf16 %v3225, %v3224
      %v3261 = vpack.c.bf16 %v3227, %v3226
      %v3262 = vpack.c.bf16 %v3229, %v3228
      %v3263 = vpack.c.bf16 %v3231, %v3230
      %v3296 = vunpack.c.l.b16 %v3232
      %v3297 = vunpack.c.h.b16 %v3232
      %v3298 = vunpack.c.l.b16 %v3233
      %v3299 = vunpack.c.h.b16 %v3233
      %v3300 = vunpack.c.l.b16 %v3234
      %v3301 = vunpack.c.h.b16 %v3234
      %v3302 = vunpack.c.l.b16 %v3235
      %v3303 = vunpack.c.h.b16 %v3235
      %v3304 = vunpack.c.l.b16 %v3236
      %v3305 = vunpack.c.h.b16 %v3236
      %v3306 = vunpack.c.l.b16 %v3237
      %v3307 = vunpack.c.h.b16 %v3237
      %v3308 = vunpack.c.l.b16 %v3238
      %v3309 = vunpack.c.h.b16 %v3238
      %v3310 = vunpack.c.l.b16 %v3239
      %v3311 = vunpack.c.h.b16 %v3239
      %v3312 = vunpack.c.l.b16 %v3240
      %v3313 = vunpack.c.h.b16 %v3240
      %v3314 = vunpack.c.l.b16 %v3241
      %v3315 = vunpack.c.h.b16 %v3241
      %v3316 = vunpack.c.l.b16 %v3242
      %v3317 = vunpack.c.h.b16 %v3242
      %v3318 = vunpack.c.l.b16 %v3243
      %v3319 = vunpack.c.h.b16 %v3243
      %v3320 = vunpack.c.l.b16 %v3244
      %v3321 = vunpack.c.h.b16 %v3244
      %v3322 = vunpack.c.l.b16 %v3245
      %v3323 = vunpack.c.h.b16 %v3245
      %v3324 = vunpack.c.l.b16 %v3246
      %v3325 = vunpack.c.h.b16 %v3246
      %v3326 = vunpack.c.l.b16 %v3247
      %v3327 = vunpack.c.h.b16 %v3247
      %v3328 = vunpack.c.l.b16 %v3248
      %v3329 = vunpack.c.h.b16 %v3248
      %v3330 = vunpack.c.l.b16 %v3249
      %v3331 = vunpack.c.h.b16 %v3249
      %v3332 = vunpack.c.l.b16 %v3250
      %v3333 = vunpack.c.h.b16 %v3250
      %v3334 = vunpack.c.l.b16 %v3251
      %v3335 = vunpack.c.h.b16 %v3251
      %v3336 = vunpack.c.l.b16 %v3252
      %v3337 = vunpack.c.h.b16 %v3252
      %v3338 = vunpack.c.l.b16 %v3253
      %v3339 = vunpack.c.h.b16 %v3253
      %v3340 = vunpack.c.l.b16 %v3254
      %v3341 = vunpack.c.h.b16 %v3254
      %v3342 = vunpack.c.l.b16 %v3255
      %v3343 = vunpack.c.h.b16 %v3255
      %v3344 = vunpack.c.l.b16 %v3256
      %v3345 = vunpack.c.h.b16 %v3256
      %v3346 = vunpack.c.l.b16 %v3257
      %v3347 = vunpack.c.h.b16 %v3257
      %v3348 = vunpack.c.l.b16 %v3258
      %v3349 = vunpack.c.h.b16 %v3258
      %v3350 = vunpack.c.l.b16 %v3259
      %v3351 = vunpack.c.h.b16 %v3259
      %v3352 = vunpack.c.l.b16 %v3260
      %v3353 = vunpack.c.h.b16 %v3260
      %v3354 = vunpack.c.l.b16 %v3261
      %v3355 = vunpack.c.h.b16 %v3261
      %v3356 = vunpack.c.l.b16 %v3262
      %v3357 = vunpack.c.h.b16 %v3262
      %v3358 = vunpack.c.l.b16 %v3263
      %v3359 = vunpack.c.h.b16 %v3263
      %v3360 = vpack.c.b16 %v3296, %v3296
      %v3361 = vpack.c.b16 %v3297, %v3297
      %v3362 = vpack.c.b16 %v3298, %v3298
      %v3363 = vpack.c.b16 %v3299, %v3299
      %v3364 = vpack.c.b16 %v3300, %v3300
      %v3365 = vpack.c.b16 %v3301, %v3301
      %v3366 = vpack.c.b16 %v3302, %v3302
      %v3367 = vpack.c.b16 %v3303, %v3303
      %v3368 = vpack.c.b16 %v3304, %v3304
      %v3369 = vpack.c.b16 %v3305, %v3305
      %v3370 = vpack.c.b16 %v3306, %v3306
      %v3371 = vpack.c.b16 %v3307, %v3307
      %v3372 = vpack.c.b16 %v3308, %v3308
      %v3373 = vpack.c.b16 %v3309, %v3309
      %v3374 = vpack.c.b16 %v3310, %v3310
      %v3375 = vpack.c.b16 %v3311, %v3311
      %v3376 = vpack.c.b16 %v3312, %v3312
      %v3377 = vpack.c.b16 %v3313, %v3313
      %v3378 = vpack.c.b16 %v3314, %v3314
      %v3379 = vpack.c.b16 %v3315, %v3315
      %v3380 = vpack.c.b16 %v3316, %v3316
      %v3381 = vpack.c.b16 %v3317, %v3317
      %v3382 = vpack.c.b16 %v3318, %v3318
      %v3383 = vpack.c.b16 %v3319, %v3319
      %v3384 = vpack.c.b16 %v3320, %v3320
      %v3385 = vpack.c.b16 %v3321, %v3321
      %v3386 = vpack.c.b16 %v3322, %v3322
      %v3387 = vpack.c.b16 %v3323, %v3323
      %v3388 = vpack.c.b16 %v3324, %v3324
      %v3389 = vpack.c.b16 %v3325, %v3325
      %v3390 = vpack.c.b16 %v3326, %v3326
      %v3391 = vpack.c.b16 %v3327, %v3327
      %v3392 = vpack.c.b16 %v3328, %v3328
      %v3393 = vpack.c.b16 %v3329, %v3329
      %v3394 = vpack.c.b16 %v3330, %v3330
      %v3395 = vpack.c.b16 %v3331, %v3331
      %v3396 = vpack.c.b16 %v3332, %v3332
      %v3397 = vpack.c.b16 %v3333, %v3333
      %v3398 = vpack.c.b16 %v3334, %v3334
      %v3399 = vpack.c.b16 %v3335, %v3335
      %v3400 = vpack.c.b16 %v3336, %v3336
      %v3401 = vpack.c.b16 %v3337, %v3337
      %v3402 = vpack.c.b16 %v3338, %v3338
      %v3403 = vpack.c.b16 %v3339, %v3339
      %v3404 = vpack.c.b16 %v3340, %v3340
      %v3405 = vpack.c.b16 %v3341, %v3341
      %v3406 = vpack.c.b16 %v3342, %v3342
      %v3407 = vpack.c.b16 %v3343, %v3343
      %v3408 = vpack.c.b16 %v3344, %v3344
      %v3409 = vpack.c.b16 %v3345, %v3345
      %v3410 = vpack.c.b16 %v3346, %v3346
      %v3411 = vpack.c.b16 %v3347, %v3347
      %v3412 = vpack.c.b16 %v3348, %v3348
      %v3413 = vpack.c.b16 %v3349, %v3349
      %v3414 = vpack.c.b16 %v3350, %v3350
      %v3415 = vpack.c.b16 %v3351, %v3351
      %v3416 = vpack.c.b16 %v3352, %v3352
      %v3417 = vpack.c.b16 %v3353, %v3353
      %v3418 = vpack.c.b16 %v3354, %v3354
      %v3419 = vpack.c.b16 %v3355, %v3355
      %v3420 = vpack.c.b16 %v3356, %v3356
      %v3421 = vpack.c.b16 %v3357, %v3357
      %v3422 = vpack.c.b16 %v3358, %v3358
      %v3423 = vpack.c.b16 %v3359, %v3359
      %3488 = vst [vmem:[%s194] sm:$0xf] %v3360
      %3489 = vst [vmem:[%s194 + $0x4] sm:$0xf] %v3361
      %3490 = vst [vmem:[%s194 + $0x8] sm:$0xf] %v3362
      %3491 = vst [vmem:[%s194 + $0xc] sm:$0xf] %v3363
      %3492 = vst [vmem:[%s194 + $0x10] sm:$0xf] %v3364
      %3493 = vst [vmem:[%s194 + $0x14] sm:$0xf] %v3365
      %3494 = vst [vmem:[%s194 + $0x18] sm:$0xf] %v3366
      %3495 = vst [vmem:[%s194 + $0x1c] sm:$0xf] %v3367
      %3496 = vst [vmem:[%s194 + $0x20] sm:$0xf] %v3368
      %3497 = vst [vmem:[%s194 + $0x24] sm:$0xf] %v3369
      %3498 = vst [vmem:[%s194 + $0x28] sm:$0xf] %v3370
      %3499 = vst [vmem:[%s194 + $0x2c] sm:$0xf] %v3371
      %3500 = vst [vmem:[%s194 + $0x30] sm:$0xf] %v3372
      %3501 = vst [vmem:[%s194 + $0x34] sm:$0xf] %v3373
      %3502 = vst [vmem:[%s194 + $0x38] sm:$0xf] %v3374
      %3503 = vst [vmem:[%s194 + $0x3c] sm:$0xf] %v3375
      %3504 = vst [vmem:[%s194 + $0x40] sm:$0xf] %v3376
      %3505 = vst [vmem:[%s194 + $0x44] sm:$0xf] %v3377
      %3506 = vst [vmem:[%s194 + $0x48] sm:$0xf] %v3378
      %3507 = vst [vmem:[%s194 + $0x4c] sm:$0xf] %v3379
      %3508 = vst [vmem:[%s194 + $0x50] sm:$0xf] %v3380
      %3509 = vst [vmem:[%s194 + $0x54] sm:$0xf] %v3381
      %3510 = vst [vmem:[%s194 + $0x58] sm:$0xf] %v3382
      %3511 = vst [vmem:[%s194 + $0x5c] sm:$0xf] %v3383
      %3512 = vst [vmem:[%s194 + $0x60] sm:$0xf] %v3384
      %3513 = vst [vmem:[%s194 + $0x64] sm:$0xf] %v3385
      %3514 = vst [vmem:[%s194 + $0x68] sm:$0xf] %v3386
      %3515 = vst [vmem:[%s194 + $0x6c] sm:$0xf] %v3387
      %3516 = vst [vmem:[%s194 + $0x70] sm:$0xf] %v3388
      %3517 = vst [vmem:[%s194 + $0x74] sm:$0xf] %v3389
      %3518 = vst [vmem:[%s194 + $0x78] sm:$0xf] %v3390
      %3519 = vst [vmem:[%s194 + $0x7c] sm:$0xf] %v3391
      %3520 = vst [vmem:[%s194 + $0x80] sm:$0xf] %v3392
      %3521 = vst [vmem:[%s194 + $0x84] sm:$0xf] %v3393
      %3522 = vst [vmem:[%s194 + $0x88] sm:$0xf] %v3394
      %3523 = vst [vmem:[%s194 + $0x8c] sm:$0xf] %v3395
      %3524 = vst [vmem:[%s194 + $0x90] sm:$0xf] %v3396
      %3525 = vst [vmem:[%s194 + $0x94] sm:$0xf] %v3397
      %3526 = vst [vmem:[%s194 + $0x98] sm:$0xf] %v3398
      %3527 = vst [vmem:[%s194 + $0x9c] sm:$0xf] %v3399
      %3528 = vst [vmem:[%s194 + $0xa0] sm:$0xf] %v3400
      %3529 = vst [vmem:[%s194 + $0xa4] sm:$0xf] %v3401
      %3530 = vst [vmem:[%s194 + $0xa8] sm:$0xf] %v3402
      %3531 = vst [vmem:[%s194 + $0xac] sm:$0xf] %v3403
      %3532 = vst [vmem:[%s194 + $0xb0] sm:$0xf] %v3404
      %3533 = vst [vmem:[%s194 + $0xb4] sm:$0xf] %v3405
      %3534 = vst [vmem:[%s194 + $0xb8] sm:$0xf] %v3406
      %3535 = vst [vmem:[%s194 + $0xbc] sm:$0xf] %v3407
      %3536 = vst [vmem:[%s194 + $0xc0] sm:$0xf] %v3408
      %3537 = vst [vmem:[%s194 + $0xc4] sm:$0xf] %v3409
      %3538 = vst [vmem:[%s194 + $0xc8] sm:$0xf] %v3410
      %3539 = vst [vmem:[%s194 + $0xcc] sm:$0xf] %v3411
      %3540 = vst [vmem:[%s194 + $0xd0] sm:$0xf] %v3412
      %3541 = vst [vmem:[%s194 + $0xd4] sm:$0xf] %v3413
      %3542 = vst [vmem:[%s194 + $0xd8] sm:$0xf] %v3414
      %3543 = vst [vmem:[%s194 + $0xdc] sm:$0xf] %v3415
      %3544 = vst [vmem:[%s194 + $0xe0] sm:$0xf] %v3416
      %3545 = vst [vmem:[%s194 + $0xe4] sm:$0xf] %v3417
      %3546 = vst [vmem:[%s194 + $0xe8] sm:$0xf] %v3418
      %3547 = vst [vmem:[%s194 + $0xec] sm:$0xf] %v3419
      %3548 = vst [vmem:[%s194 + $0xf0] sm:$0xf] %v3420
      %3549 = vst [vmem:[%s194 + $0xf4] sm:$0xf] %v3421
      %3550 = vst [vmem:[%s194 + $0xf8] sm:$0xf] %v3422
      %3551 = vst [vmem:[%s194 + $0xfc] sm:$0xf] %v3423
      %s3552 = smul.u32 16, %s19
      %p3553 = scmp.lt.s32.totalorder %s18, 1
      %s3554 = scalar_select %p3553, %s18, 1
      %p3555 = scmp.lt.s32.totalorder %s3552, 31
      %s3556 = scalar_select %p3555, %s3552, 31
      %s3557 = smul.addr %s3556, 4
      %s3558 = smul.addr %s3554, 128
      %s3559 = sadd.s32 %s3557, %s3558
      %s3560 = smul.addr %s3559, 4
      %s3561 = scalar_lea.vmem %s3, %s3560
      // Predicated region
      $region33: #{analysis_prior_net.3} parent=31 // pred_check
        %p3562 = pneg %p114
      $region34: #{analysis_prior_net.3} parent=31 // pred_check_branch
        %3564 = sbr.rel (%p3562) target = $region36
      $region35: #{analysis_prior_net.3} parent=31 // pred_region
        %s3565 = smul.u32 16, %s19
      $region36: #{analysis_prior_net.3} parent=31 // pred_fallthru
        _
    $region32: #{analysis_prior_net.3} parent=5 // pred_fallthru
      _
    %p3566 = scmp.le.s32.totalorder 2, %s9
    // Predicated region
    $region37: #{analysis_prior_net.3} parent=5 // pred_check
      %p3567 = pneg %p3566
    $region38: #{analysis_prior_net.3} parent=5 // pred_check_branch
      %3569 = sbr.rel (%p3567) target = $region40
    $region39: #{analysis_prior_net.3} parent=5 // pred_region
      %s3570 = ssub.s32 %s9, 2
      // Predicated region
      $region41: #{analysis_prior_net.3} parent=39 // pred_check
        %p3571 = pneg %p120
      $region42: #{analysis_prior_net.3} parent=39 // pred_check_branch
        %3573 = sbr.rel (%p3571) target = $region44
      $region43: #{analysis_prior_net.3} parent=39 // pred_region
        %s3574 = smul.u32 16, %s21
        %p3575 = scmp.lt.s32.totalorder %s20, 1
        %s3576 = scalar_select %p3575, %s20, 1
        %p3577 = scmp.lt.s32.totalorder %s3574, 31
        %s3578 = scalar_select %p3577, %s3574, 31
        %s3579 = smul.addr %s3578, 4
        %s3580 = smul.addr %s3576, 128
        %s3581 = sadd.s32 %s3579, %s3580
        %s3582 = smul.addr %s3581, 4
        %s3583 = scalar_lea.vmem %s3, %s3582
      $region44: #{analysis_prior_net.3} parent=39 // pred_fallthru
        _
    $region40: #{analysis_prior_net.3} parent=5 // pred_fallthru
      _
  $region6: #{analysis_prior_net.3} parent=0 // loop_footer
    %s13 = sadd.s32 1, %s9
  $region7: #{analysis_prior_net.3} parent=0 // loop_footer_branch
    %8 = sbr.rel target = $region3
  $region8: #{analysis_prior_net.3} parent=0 // loop_exit
    _

// kernel: analysis_prior_net.4
$region0: #{analysis_prior_net.4}
  #allocation0 [shape = 'u32[]', space=smem, size = 0x4, offset = 0x4, fixed_abs, tag = 'smem constant byte address 0x4 - core index']
  #allocation1 [shape = 'u32[144,128]{1,0:T(1,128)}', space=vmem, size = 0x12000, scoped, tag = 'internal scratch']
  %s0 = inlined_call_operand.vmem [shape: bf16[2,18,18,32], index: 0, kind: input, shape index: {}]
  %s1 = inlined_call_operand.vmem [shape: bf16[288,128], index: 1, kind: input, shape index: {}]
  %s2 = inlined_call_operand.vmem [shape: f32[1,128], index: 2, kind: input, shape index: {}]
  %s3 = inlined_call_operand.vmem [shape: bf16[2,16,16,128], index: 3, kind: output, shape index: {}]
  %s4 = sld [smem:[#allocation0]]
  $region45: #{analysis_prior_net.4} parent=0
    _
  %s6 = ssub.s32 1, %s4
  %s7 = scalar_select 0, %s6, %s4
  loop: start=0, step=1, limit=4
  $region2: #{analysis_prior_net.4} parent=0 // loop_pre_header
    _
  $region3: #{analysis_prior_net.4} parent=0 // loop_header
    %s9 = sphi 0, %s13
    %p10 = scmp.ge.s32.totalorder %s9, 4
    %s16 = sphi 0, %s28
    %s17 = sphi 0, %s24
    %s18 = sphi 0, %s16
    %s19 = sphi 0, %s17
    %s20 = sphi 0, %s18
    %s21 = sphi 0, %s19
    %s31 = sphi 0, %s33
    %s34 = sphi 0, %s31
    %s35 = sphi 0, %s34
    %s51 = sphi 0, %s35
    %s55 = sphi 0, %s55
    %s57 = sphi 0, %s55
    %s58 = sphi 0, %s57
    %s72 = sphi 0, %s58
    %s76 = sphi 0, %s76
    %s78 = sphi 0, %s76
    %s79 = sphi 0, %s78
    %s93 = sphi 0, %s79
    %s101 = sphi 0, %s103
    %s104 = sphi 0, %s101
    %s105 = sphi 0, %s104
    %s121 = sphi 0, %s105
  $region4: #{analysis_prior_net.4} parent=0 // loop_header_branch
    %12 = sbr.rel (%p10) target = $region8
  $region5: #{analysis_prior_net.4} parent=0 // loop_body
    %s14 = ssub.s32 %s9, 1
    %s15 = ssub.s32 %s9, 2
    %s22 = sadd.s32 1, %s17
    %p23 = scmp.ge.s32.totalorder %s22, 1
    %s24 = scalar_select %p23, 0, %s22
    %s25 = sadd.s32 1, %s16
    %s26 = scalar_select %p23, %s25, %s16
    %p27 = scmp.ge.s32.totalorder %s26, 2
    %s28 = scalar_select %p27, 0, %s26
    %s29 = ssub.s32 %s16, %s28
    %p30 = scmp.eq.s32.totalorder %s29, 0
    %s32 = sadd.s32 %s31, 1
    %s33 = scalar_select %p30, %s31, %s32
    %p36 = pneg %p30
    %p37 = scmp.eq.s32.totalorder %s9, 1
    %p38 = por %p36, %p37
    %p39 = scmp.ne.s32.totalorder %s31, %s34
    %p40 = scmp.eq.s32.totalorder %s9, 0
    %p41 = por %p39, %p40
    %p42 = scmp.ne.s32.totalorder %s31, %s34
    %p43 = scmp.eq.s32.totalorder %s14, 1
    %p44 = por %p42, %p43
    %p45 = scmp.ne.s32.totalorder %s34, %s35
    %p46 = scmp.eq.s32.totalorder %s14, 0
    %p47 = por %p45, %p46
    %p48 = scmp.ne.s32.totalorder %s34, %s35
    %p49 = scmp.eq.s32.totalorder %s15, 1
    %p50 = por %p48, %p49
    %p52 = scmp.ne.s32.totalorder %s35, %s51
    %p53 = scmp.eq.s32.totalorder %s15, 0
    %p54 = por %p52, %p53
    %s56 = sadd.s32 %s55, 1
    %p59 = scmp.eq.s32.totalorder %s9, 1
    %p60 = scmp.ne.s32.totalorder %s55, %s57
    %p61 = scmp.eq.s32.totalorder %s9, 0
    %p62 = por %p60, %p61
    %p63 = scmp.ne.s32.totalorder %s55, %s57
    %p64 = scmp.eq.s32.totalorder %s14, 1
    %p65 = por %p63, %p64
    %p66 = scmp.ne.s32.totalorder %s57, %s58
    %p67 = scmp.eq.s32.totalorder %s14, 0
    %p68 = por %p66, %p67
    %p69 = scmp.ne.s32.totalorder %s57, %s58
    %p70 = scmp.eq.s32.totalorder %s15, 1
    %p71 = por %p69, %p70
    %p73 = scmp.ne.s32.totalorder %s58, %s72
    %p74 = scmp.eq.s32.totalorder %s15, 0
    %p75 = por %p73, %p74
    %s77 = sadd.s32 %s76, 1
    %p80 = scmp.eq.s32.totalorder %s9, 1
    %p81 = scmp.ne.s32.totalorder %s76, %s78
    %p82 = scmp.eq.s32.totalorder %s9, 0
    %p83 = por %p81, %p82
    %p84 = scmp.ne.s32.totalorder %s76, %s78
    %p85 = scmp.eq.s32.totalorder %s14, 1
    %p86 = por %p84, %p85
    %p87 = scmp.ne.s32.totalorder %s78, %s79
    %p88 = scmp.eq.s32.totalorder %s14, 0
    %p89 = por %p87, %p88
    %p90 = scmp.ne.s32.totalorder %s78, %s79
    %p91 = scmp.eq.s32.totalorder %s15, 1
    %p92 = por %p90, %p91
    %p94 = scmp.ne.s32.totalorder %s79, %s93
    %p95 = scmp.eq.s32.totalorder %s15, 0
    %p96 = por %p94, %p95
    %s97 = ssub.s32 %s16, %s28
    %s98 = ssub.s32 %s17, %s24
    %s99 = sor.u32 %s97, %s98
    %p100 = scmp.eq.s32.totalorder %s99, 0
    %s102 = sadd.s32 %s101, 1
    %s103 = scalar_select %p100, %s101, %s102
    %p106 = pneg %p100
    %p107 = scmp.eq.s32.totalorder %s9, 1
    %p108 = por %p106, %p107
    %p109 = scmp.ne.s32.totalorder %s101, %s104
    %p110 = scmp.eq.s32.totalorder %s9, 0
    %p111 = por %p109, %p110
    %p112 = scmp.ne.s32.totalorder %s101, %s104
    %p113 = scmp.eq.s32.totalorder %s14, 1
    %p114 = por %p112, %p113
    %p115 = scmp.ne.s32.totalorder %s104, %s105
    %p116 = scmp.eq.s32.totalorder %s14, 0
    %p117 = por %p115, %p116
    %p118 = scmp.ne.s32.totalorder %s104, %s105
    %p119 = scmp.eq.s32.totalorder %s15, 1
    %p120 = por %p118, %p119
    %p122 = scmp.ne.s32.totalorder %s105, %s121
    %p123 = scmp.eq.s32.totalorder %s15, 0
    %p124 = por %p122, %p123
    %p125 = scmp.le.s32.totalorder 1, %s9
    %p126 = scmp.lt.s32.totalorder %s9, 3
    %p127 = pnand %p125, %p126
    %p128 = pneg %p127
    // Predicated region
    $region9: #{analysis_prior_net.4} parent=5 // pred_check
      _
    $region10: #{analysis_prior_net.4} parent=5 // pred_check_branch
      %130 = sbr.rel (%p127) target = $region12
    $region11: #{analysis_prior_net.4} parent=5 // pred_region
      %s131 = ssub.s32 %s9, 1
      // Predicated region
      $region13: #{analysis_prior_net.4} parent=11 // pred_check
        %p132 = pneg %p68
      $region14: #{analysis_prior_net.4} parent=11 // pred_check_branch
        %134 = sbr.rel (%p132) target = $region16
      $region15: #{analysis_prior_net.4} parent=11 // pred_region
        _
      $region16: #{analysis_prior_net.4} parent=11 // pred_fallthru
        _
      // Predicated region
      $region17: #{analysis_prior_net.4} parent=11 // pred_check
        %p135 = pneg %p89
      $region18: #{analysis_prior_net.4} parent=11 // pred_check_branch
        %137 = sbr.rel (%p135) target = $region20
      $region19: #{analysis_prior_net.4} parent=11 // pred_region
        _
      $region20: #{analysis_prior_net.4} parent=11 // pred_fallthru
        _
    $region12: #{analysis_prior_net.4} parent=5 // pred_fallthru
      _
    %p138 = scmp.lt.s32.totalorder %s9, 2
    // Predicated region
    $region21: #{analysis_prior_net.4} parent=5 // pred_check
      %p139 = pneg %p138
    $region22: #{analysis_prior_net.4} parent=5 // pred_check_branch
      %141 = sbr.rel (%p139) target = $region24
    $region23: #{analysis_prior_net.4} parent=5 // pred_region
      // Predicated region
      $region25: #{analysis_prior_net.4} parent=23 // pred_check
        %p142 = pneg %p41
      $region26: #{analysis_prior_net.4} parent=23 // pred_check_branch
        %144 = sbr.rel (%p142) target = $region28
      $region27: #{analysis_prior_net.4} parent=23 // pred_region
        %p145 = scmp.lt.s32.totalorder %s16, 1
        %s146 = scalar_select %p145, %s16, 1
        %s147 = smul.addr %s146, 54
        %s148 = smul.addr %s147, 4
        %s149 = scalar_lea.vmem %s0, %s148
      $region28: #{analysis_prior_net.4} parent=23 // pred_fallthru
        _
    $region24: #{analysis_prior_net.4} parent=5 // pred_fallthru
      _
    %p150 = scmp.le.s32.totalorder 1, %s9
    %p151 = scmp.lt.s32.totalorder %s9, 3
    %p152 = pnand %p150, %p151
    %p153 = pneg %p152
    // Predicated region
    $region29: #{analysis_prior_net.4} parent=5 // pred_check
      _
    $region30: #{analysis_prior_net.4} parent=5 // pred_check_branch
      %155 = sbr.rel (%p152) target = $region32
    $region31: #{analysis_prior_net.4} parent=5 // pred_region
      %s156 = ssub.s32 %s9, 1
      %p157 = scmp.lt.s32.totalorder %s18, 1
      %s158 = scalar_select %p157, %s18, 1
      %s159 = smul.addr %s158, 54
      %s160 = smul.addr %s159, 4
      %s161 = scalar_lea.vmem %s0, %s160
      %p162 = pneg %p47
      %p163 = pneg %p44
      %p164 = pneg %p68
      %p165 = pneg %p65
      %p166 = pneg %p89
      %p167 = pneg %p86
      %p168 = pneg %p117
      %p169 = pneg %p114
      %s170 = smul.u32 16, %s19
      %p171 = scmp.lt.s32.totalorder %s18, 1
      %s172 = scalar_select %p171, %s18, 1
      %p173 = scmp.lt.s32.totalorder %s170, 15
      %s174 = scalar_select %p173, %s170, 15
      %s175 = smul.addr %s174, 2
      %s176 = smul.addr %s172, 32
      %s177 = sadd.s32 %s175, %s176
      %s178 = smul.addr %s177, 4
      %s179 = scalar_lea.vmem %s3, %s178
      %p180 = scmp.lt.s32.totalorder %s18, 1
      %s181 = scalar_select %p180, %s18, 1
      %s182 = smul.addr %s181, 54
      %s183 = smul.addr %s182, 4
      %s184 = scalar_lea.vmem %s0, %s183
      %s185 = smul.u32 16, %s19
      %p186 = scmp.lt.s32.totalorder %s18, 1
      %s187 = scalar_select %p186, %s18, 1
      %p188 = scmp.lt.s32.totalorder %s185, 15
      %s189 = scalar_select %p188, %s185, 15
      %s190 = smul.addr %s189, 2
      %s191 = smul.addr %s187, 32
      %s192 = sadd.s32 %s190, %s191
      %s193 = smul.addr %s192, 4
      %s194 = scalar_lea.vmem %s3, %s193
      %s195 = smul.u32 16, %s19
      %s197 = smul.u32 %s19, 16
      %s198 = smul.u32 %s197, 3
      %s199 = smul.addr %s198, 4
      %s200 = scalar_lea.vmem %s184, %s199
      %v201 = vld [vmem:[%s200] sm:$0xf]
      %v202 = vld [vmem:[%s200 + $0x4] sm:$0xf]
      %v203 = vld [vmem:[%s200 + $0x8] sm:$0x1]
      %v204 = vld [vmem:[%s200 + $0xc] sm:$0xf]
      %v205 = vld [vmem:[%s200 + $0x10] sm:$0xf]
      %v206 = vld [vmem:[%s200 + $0x14] sm:$0x1]
      %v207 = vld [vmem:[%s200 + $0x18] sm:$0xf]
      %v208 = vld [vmem:[%s200 + $0x1c] sm:$0xf]
      %v209 = vld [vmem:[%s200 + $0x20] sm:$0x1]
      %v210 = vld [vmem:[%s200 + $0x24] sm:$0xf]
      %v211 = vld [vmem:[%s200 + $0x28] sm:$0xf]
      %v212 = vld [vmem:[%s200 + $0x2c] sm:$0x1]
      %v213 = vld [vmem:[%s200 + $0x30] sm:$0xf]
      %v214 = vld [vmem:[%s200 + $0x34] sm:$0xf]
      %v215 = vld [vmem:[%s200 + $0x38] sm:$0x1]
      %v216 = vld [vmem:[%s200 + $0x3c] sm:$0xf]
      %v217 = vld [vmem:[%s200 + $0x40] sm:$0xf]
      %v218 = vld [vmem:[%s200 + $0x44] sm:$0x1]
      %v219 = vld [vmem:[%s200 + $0x48] sm:$0xf]
      %v220 = vld [vmem:[%s200 + $0x4c] sm:$0xf]
      %v221 = vld [vmem:[%s200 + $0x50] sm:$0x1]
      %v222 = vld [vmem:[%s200 + $0x54] sm:$0xf]
      %v223 = vld [vmem:[%s200 + $0x58] sm:$0xf]
      %v224 = vld [vmem:[%s200 + $0x5c] sm:$0x1]
      %v225 = vld [vmem:[%s200 + $0x60] sm:$0xf]
      %v226 = vld [vmem:[%s200 + $0x64] sm:$0xf]
      %v227 = vld [vmem:[%s200 + $0x68] sm:$0x1]
      %v228 = vld [vmem:[%s200 + $0x6c] sm:$0xf]
      %v229 = vld [vmem:[%s200 + $0x70] sm:$0xf]
      %v230 = vld [vmem:[%s200 + $0x74] sm:$0x1]
      %v231 = vld [vmem:[%s200 + $0x78] sm:$0xf]
      %v232 = vld [vmem:[%s200 + $0x7c] sm:$0xf]
      %v233 = vld [vmem:[%s200 + $0x80] sm:$0x1]
      %v234 = vld [vmem:[%s200 + $0x84] sm:$0xf]
      %v235 = vld [vmem:[%s200 + $0x88] sm:$0xf]
      %v236 = vld [vmem:[%s200 + $0x8c] sm:$0x1]
      %v237 = vld [vmem:[%s200 + $0x90] sm:$0xf]
      %v238 = vld [vmem:[%s200 + $0x94] sm:$0xf]
      %v239 = vld [vmem:[%s200 + $0x98] sm:$0x1]
      %v240 = vld [vmem:[%s200 + $0x9c] sm:$0xf]
      %v241 = vld [vmem:[%s200 + $0xa0] sm:$0xf]
      %v242 = vld [vmem:[%s200 + $0xa4] sm:$0x1]
      %v243 = vld [vmem:[%s200 + $0xa8] sm:$0xf]
      %v244 = vld [vmem:[%s200 + $0xac] sm:$0xf]
      %v245 = vld [vmem:[%s200 + $0xb0] sm:$0x1]
      %v246 = vld [vmem:[%s200 + $0xb4] sm:$0xf]
      %v247 = vld [vmem:[%s200 + $0xb8] sm:$0xf]
      %v248 = vld [vmem:[%s200 + $0xbc] sm:$0x1]
      %v249 = vld [vmem:[%s200 + $0xc0] sm:$0xf]
      %v250 = vld [vmem:[%s200 + $0xc4] sm:$0xf]
      %v251 = vld [vmem:[%s200 + $0xc8] sm:$0x1]
      %v252 = vld [vmem:[%s200 + $0xcc] sm:$0xf]
      %v253 = vld [vmem:[%s200 + $0xd0] sm:$0xf]
      %v254 = vld [vmem:[%s200 + $0xd4] sm:$0x1]
      %vm255 = vsmask.f32 3328
      %vm256 = vsmask.f32 7440
      %vm257 = vmor %vm255, %vm256
      %v259 = vshrl.u32 %v201, 16
      %v261 = vrot.slane %v259, 4
      %v262 = vshll.u32 %v201, 16
      %v264 = vrot.slane %v262, 5
      %v265 = vor.u32 %v261, %v264
      %v266 = vrot.slane %v265, 4
      %v268 = vshll.u32 %v202, 16
      %v270 = vrot.slane %v268, 5
      %v271 = vsel %vm257, %v266, %v270
      %v272 = vshrl.u32 %v202, 16
      %v274 = vrot.slane %v272, 4
      %v275 = vor.u32 %v274, %v270
      %v276 = vrot.slane %v275, 4
      %v278 = vshll.u32 %v203, 16
      %v280 = vrot.slane %v278, 5
      %v281 = vsel %vm257, %v276, %v280
      %v283 = vshrl.u32 %v204, 16
      %v285 = vrot.slane %v283, 4
      %v286 = vshll.u32 %v204, 16
      %v288 = vrot.slane %v286, 5
      %v289 = vor.u32 %v285, %v288
      %v290 = vrot.slane %v289, 4
      %v292 = vshll.u32 %v205, 16
      %v294 = vrot.slane %v292, 5
      %v295 = vsel %vm257, %v290, %v294
      %v296 = vshrl.u32 %v205, 16
      %v298 = vrot.slane %v296, 4
      %v299 = vor.u32 %v298, %v294
      %v300 = vrot.slane %v299, 4
      %v302 = vshll.u32 %v206, 16
      %v304 = vrot.slane %v302, 5
      %v305 = vsel %vm257, %v300, %v304
      %v307 = vshrl.u32 %v207, 16
      %v309 = vrot.slane %v307, 4
      %v310 = vshll.u32 %v207, 16
      %v312 = vrot.slane %v310, 5
      %v313 = vor.u32 %v309, %v312
      %v314 = vrot.slane %v313, 4
      %v316 = vshll.u32 %v208, 16
      %v318 = vrot.slane %v316, 5
      %v319 = vsel %vm257, %v314, %v318
      %v320 = vshrl.u32 %v208, 16
      %v322 = vrot.slane %v320, 4
      %v323 = vor.u32 %v322, %v318
      %v324 = vrot.slane %v323, 4
      %v326 = vshll.u32 %v209, 16
      %v328 = vrot.slane %v326, 5
      %v329 = vsel %vm257, %v324, %v328
      %v331 = vshrl.u32 %v210, 16
      %v333 = vrot.slane %v331, 4
      %v334 = vshll.u32 %v210, 16
      %v336 = vrot.slane %v334, 5
      %v337 = vor.u32 %v333, %v336
      %v338 = vrot.slane %v337, 4
      %v340 = vshll.u32 %v211, 16
      %v342 = vrot.slane %v340, 5
      %v343 = vsel %vm257, %v338, %v342
      %v344 = vshrl.u32 %v211, 16
      %v346 = vrot.slane %v344, 4
      %v347 = vor.u32 %v346, %v342
      %v348 = vrot.slane %v347, 4
      %v350 = vshll.u32 %v212, 16
      %v352 = vrot.slane %v350, 5
      %v353 = vsel %vm257, %v348, %v352
      %v355 = vshrl.u32 %v213, 16
      %v357 = vrot.slane %v355, 4
      %v358 = vshll.u32 %v213, 16
      %v360 = vrot.slane %v358, 5
      %v361 = vor.u32 %v357, %v360
      %v362 = vrot.slane %v361, 4
      %v364 = vshll.u32 %v214, 16
      %v366 = vrot.slane %v364, 5
      %v367 = vsel %vm257, %v362, %v366
      %v368 = vshrl.u32 %v214, 16
      %v370 = vrot.slane %v368, 4
      %v371 = vor.u32 %v370, %v366
      %v372 = vrot.slane %v371, 4
      %v374 = vshll.u32 %v215, 16
      %v376 = vrot.slane %v374, 5
      %v377 = vsel %vm257, %v372, %v376
      %v379 = vshrl.u32 %v216, 16
      %v381 = vrot.slane %v379, 4
      %v382 = vshll.u32 %v216, 16
      %v384 = vrot.slane %v382, 5
      %v385 = vor.u32 %v381, %v384
      %v386 = vrot.slane %v385, 4
      %v388 = vshll.u32 %v217, 16
      %v390 = vrot.slane %v388, 5
      %v391 = vsel %vm257, %v386, %v390
      %v392 = vshrl.u32 %v217, 16
      %v394 = vrot.slane %v392, 4
      %v395 = vor.u32 %v394, %v390
      %v396 = vrot.slane %v395, 4
      %v398 = vshll.u32 %v218, 16
      %v400 = vrot.slane %v398, 5
      %v401 = vsel %vm257, %v396, %v400
      %v403 = vshrl.u32 %v219, 16
      %v405 = vrot.slane %v403, 4
      %v406 = vshll.u32 %v219, 16
      %v408 = vrot.slane %v406, 5
      %v409 = vor.u32 %v405, %v408
      %v410 = vrot.slane %v409, 4
      %v412 = vshll.u32 %v220, 16
      %v414 = vrot.slane %v412, 5
      %v415 = vsel %vm257, %v410, %v414
      %v416 = vshrl.u32 %v220, 16
      %v418 = vrot.slane %v416, 4
      %v419 = vor.u32 %v418, %v414
      %v420 = vrot.slane %v419, 4
      %v422 = vshll.u32 %v221, 16
      %v424 = vrot.slane %v422, 5
      %v425 = vsel %vm257, %v420, %v424
      %v427 = vshrl.u32 %v222, 16
      %v429 = vrot.slane %v427, 4
      %v430 = vshll.u32 %v222, 16
      %v432 = vrot.slane %v430, 5
      %v433 = vor.u32 %v429, %v432
      %v434 = vrot.slane %v433, 4
      %v436 = vshll.u32 %v223, 16
      %v438 = vrot.slane %v436, 5
      %v439 = vsel %vm257, %v434, %v438
      %v440 = vshrl.u32 %v223, 16
      %v442 = vrot.slane %v440, 4
      %v443 = vor.u32 %v442, %v438
      %v444 = vrot.slane %v443, 4
      %v446 = vshll.u32 %v224, 16
      %v448 = vrot.slane %v446, 5
      %v449 = vsel %vm257, %v444, %v448
      %v451 = vshrl.u32 %v225, 16
      %v453 = vrot.slane %v451, 4
      %v454 = vshll.u32 %v225, 16
      %v456 = vrot.slane %v454, 5
      %v457 = vor.u32 %v453, %v456
      %v458 = vrot.slane %v457, 4
      %v460 = vshll.u32 %v226, 16
      %v462 = vrot.slane %v460, 5
      %v463 = vsel %vm257, %v458, %v462
      %v464 = vshrl.u32 %v226, 16
      %v466 = vrot.slane %v464, 4
      %v467 = vor.u32 %v466, %v462
      %v468 = vrot.slane %v467, 4
      %v470 = vshll.u32 %v227, 16
      %v472 = vrot.slane %v470, 5
      %v473 = vsel %vm257, %v468, %v472
      %v475 = vshrl.u32 %v228, 16
      %v477 = vrot.slane %v475, 4
      %v478 = vshll.u32 %v228, 16
      %v480 = vrot.slane %v478, 5
      %v481 = vor.u32 %v477, %v480
      %v482 = vrot.slane %v481, 4
      %v484 = vshll.u32 %v229, 16
      %v486 = vrot.slane %v484, 5
      %v487 = vsel %vm257, %v482, %v486
      %v488 = vshrl.u32 %v229, 16
      %v490 = vrot.slane %v488, 4
      %v491 = vor.u32 %v490, %v486
      %v492 = vrot.slane %v491, 4
      %v494 = vshll.u32 %v230, 16
      %v496 = vrot.slane %v494, 5
      %v497 = vsel %vm257, %v492, %v496
      %v499 = vshrl.u32 %v231, 16
      %v501 = vrot.slane %v499, 4
      %v502 = vshll.u32 %v231, 16
      %v504 = vrot.slane %v502, 5
      %v505 = vor.u32 %v501, %v504
      %v506 = vrot.slane %v505, 4
      %v508 = vshll.u32 %v232, 16
      %v510 = vrot.slane %v508, 5
      %v511 = vsel %vm257, %v506, %v510
      %v512 = vshrl.u32 %v232, 16
      %v514 = vrot.slane %v512, 4
      %v515 = vor.u32 %v514, %v510
      %v516 = vrot.slane %v515, 4
      %v518 = vshll.u32 %v233, 16
      %v520 = vrot.slane %v518, 5
      %v521 = vsel %vm257, %v516, %v520
      %v523 = vshrl.u32 %v234, 16
      %v525 = vrot.slane %v523, 4
      %v526 = vshll.u32 %v234, 16
      %v528 = vrot.slane %v526, 5
      %v529 = vor.u32 %v525, %v528
      %v530 = vrot.slane %v529, 4
      %v532 = vshll.u32 %v235, 16
      %v534 = vrot.slane %v532, 5
      %v535 = vsel %vm257, %v530, %v534
      %v536 = vshrl.u32 %v235, 16
      %v538 = vrot.slane %v536, 4
      %v539 = vor.u32 %v538, %v534
      %v540 = vrot.slane %v539, 4
      %v542 = vshll.u32 %v236, 16
      %v544 = vrot.slane %v542, 5
      %v545 = vsel %vm257, %v540, %v544
      %v547 = vshrl.u32 %v237, 16
      %v549 = vrot.slane %v547, 4
      %v550 = vshll.u32 %v237, 16
      %v552 = vrot.slane %v550, 5
      %v553 = vor.u32 %v549, %v552
      %v554 = vrot.slane %v553, 4
      %v556 = vshll.u32 %v238, 16
      %v558 = vrot.slane %v556, 5
      %v559 = vsel %vm257, %v554, %v558
      %v560 = vshrl.u32 %v238, 16
      %v562 = vrot.slane %v560, 4
      %v563 = vor.u32 %v562, %v558
      %v564 = vrot.slane %v563, 4
      %v566 = vshll.u32 %v239, 16
      %v568 = vrot.slane %v566, 5
      %v569 = vsel %vm257, %v564, %v568
      %v571 = vshrl.u32 %v240, 16
      %v573 = vrot.slane %v571, 4
      %v574 = vshll.u32 %v240, 16
      %v576 = vrot.slane %v574, 5
      %v577 = vor.u32 %v573, %v576
      %v578 = vrot.slane %v577, 4
      %v580 = vshll.u32 %v241, 16
      %v582 = vrot.slane %v580, 5
      %v583 = vsel %vm257, %v578, %v582
      %v584 = vshrl.u32 %v241, 16
      %v586 = vrot.slane %v584, 4
      %v587 = vor.u32 %v586, %v582
      %v588 = vrot.slane %v587, 4
      %v590 = vshll.u32 %v242, 16
      %v592 = vrot.slane %v590, 5
      %v593 = vsel %vm257, %v588, %v592
      %v595 = vshrl.u32 %v243, 16
      %v597 = vrot.slane %v595, 4
      %v598 = vshll.u32 %v243, 16
      %v600 = vrot.slane %v598, 5
      %v601 = vor.u32 %v597, %v600
      %v602 = vrot.slane %v601, 4
      %v604 = vshll.u32 %v244, 16
      %v606 = vrot.slane %v604, 5
      %v607 = vsel %vm257, %v602, %v606
      %v608 = vshrl.u32 %v244, 16
      %v610 = vrot.slane %v608, 4
      %v611 = vor.u32 %v610, %v606
      %v612 = vrot.slane %v611, 4
      %v614 = vshll.u32 %v245, 16
      %v616 = vrot.slane %v614, 5
      %v617 = vsel %vm257, %v612, %v616
      %v619 = vshrl.u32 %v246, 16
      %v621 = vrot.slane %v619, 4
      %v622 = vshll.u32 %v246, 16
      %v624 = vrot.slane %v622, 5
      %v625 = vor.u32 %v621, %v624
      %v626 = vrot.slane %v625, 4
      %v628 = vshll.u32 %v247, 16
      %v630 = vrot.slane %v628, 5
      %v631 = vsel %vm257, %v626, %v630
      %v632 = vshrl.u32 %v247, 16
      %v634 = vrot.slane %v632, 4
      %v635 = vor.u32 %v634, %v630
      %v636 = vrot.slane %v635, 4
      %v638 = vshll.u32 %v248, 16
      %v640 = vrot.slane %v638, 5
      %v641 = vsel %vm257, %v636, %v640
      %vm690 = vcmask 1042432
      %vm691 = vcmask 1046532
      %vm692 = vmor %vm690, %vm691
      %v693 = vrot.slane %v201, 5
      %v694 = vrot.slane %v693, 4
      %v695 = vrot.slane %v202, 5
      %v696 = vsel %vm692, %v694, %v695
      %v697 = vrot.slane %v695, 4
      %v698 = vrot.slane %v203, 5
      %v699 = vsel %vm692, %v697, %v698
      %v700 = vrot.slane %v204, 5
      %v701 = vrot.slane %v700, 4
      %v702 = vrot.slane %v205, 5
      %v703 = vsel %vm692, %v701, %v702
      %v704 = vrot.slane %v702, 4
      %v705 = vrot.slane %v206, 5
      %v706 = vsel %vm692, %v704, %v705
      %v707 = vrot.slane %v207, 5
      %v708 = vrot.slane %v707, 4
      %v709 = vrot.slane %v208, 5
      %v710 = vsel %vm692, %v708, %v709
      %v711 = vrot.slane %v709, 4
      %v712 = vrot.slane %v209, 5
      %v713 = vsel %vm692, %v711, %v712
      %v714 = vrot.slane %v210, 5
      %v715 = vrot.slane %v714, 4
      %v716 = vrot.slane %v211, 5
      %v717 = vsel %vm692, %v715, %v716
      %v718 = vrot.slane %v716, 4
      %v719 = vrot.slane %v212, 5
      %v720 = vsel %vm692, %v718, %v719
      %v721 = vrot.slane %v213, 5
      %v722 = vrot.slane %v721, 4
      %v723 = vrot.slane %v214, 5
      %v724 = vsel %vm692, %v722, %v723
      %v725 = vrot.slane %v723, 4
      %v726 = vrot.slane %v215, 5
      %v727 = vsel %vm692, %v725, %v726
      %v728 = vrot.slane %v216, 5
      %v729 = vrot.slane %v728, 4
      %v730 = vrot.slane %v217, 5
      %v731 = vsel %vm692, %v729, %v730
      %v732 = vrot.slane %v730, 4
      %v733 = vrot.slane %v218, 5
      %v734 = vsel %vm692, %v732, %v733
      %v735 = vrot.slane %v219, 5
      %v736 = vrot.slane %v735, 4
      %v737 = vrot.slane %v220, 5
      %v738 = vsel %vm692, %v736, %v737
      %v739 = vrot.slane %v737, 4
      %v740 = vrot.slane %v221, 5
      %v741 = vsel %vm692, %v739, %v740
      %v742 = vrot.slane %v222, 5
      %v743 = vrot.slane %v742, 4
      %v744 = vrot.slane %v223, 5
      %v745 = vsel %vm692, %v743, %v744
      %v746 = vrot.slane %v744, 4
      %v747 = vrot.slane %v224, 5
      %v748 = vsel %vm692, %v746, %v747
      %v749 = vrot.slane %v225, 5
      %v750 = vrot.slane %v749, 4
      %v751 = vrot.slane %v226, 5
      %v752 = vsel %vm692, %v750, %v751
      %v753 = vrot.slane %v751, 4
      %v754 = vrot.slane %v227, 5
      %v755 = vsel %vm692, %v753, %v754
      %v756 = vrot.slane %v228, 5
      %v757 = vrot.slane %v756, 4
      %v758 = vrot.slane %v229, 5
      %v759 = vsel %vm692, %v757, %v758
      %v760 = vrot.slane %v758, 4
      %v761 = vrot.slane %v230, 5
      %v762 = vsel %vm692, %v760, %v761
      %v763 = vrot.slane %v231, 5
      %v764 = vrot.slane %v763, 4
      %v765 = vrot.slane %v232, 5
      %v766 = vsel %vm692, %v764, %v765
      %v767 = vrot.slane %v765, 4
      %v768 = vrot.slane %v233, 5
      %v769 = vsel %vm692, %v767, %v768
      %v770 = vrot.slane %v234, 5
      %v771 = vrot.slane %v770, 4
      %v772 = vrot.slane %v235, 5
      %v773 = vsel %vm692, %v771, %v772
      %v774 = vrot.slane %v772, 4
      %v775 = vrot.slane %v236, 5
      %v776 = vsel %vm692, %v774, %v775
      %v777 = vrot.slane %v237, 5
      %v778 = vrot.slane %v777, 4
      %v779 = vrot.slane %v238, 5
      %v780 = vsel %vm692, %v778, %v779
      %v781 = vrot.slane %v779, 4
      %v782 = vrot.slane %v239, 5
      %v783 = vsel %vm692, %v781, %v782
      %v784 = vrot.slane %v240, 5
      %v785 = vrot.slane %v784, 4
      %v786 = vrot.slane %v241, 5
      %v787 = vsel %vm692, %v785, %v786
      %v788 = vrot.slane %v786, 4
      %v789 = vrot.slane %v242, 5
      %v790 = vsel %vm692, %v788, %v789
      %v791 = vrot.slane %v243, 5
      %v792 = vrot.slane %v791, 4
      %v793 = vrot.slane %v244, 5
      %v794 = vsel %vm692, %v792, %v793
      %v795 = vrot.slane %v793, 4
      %v796 = vrot.slane %v245, 5
      %v797 = vsel %vm692, %v795, %v796
      %v798 = vrot.slane %v246, 5
      %v799 = vrot.slane %v798, 4
      %v800 = vrot.slane %v247, 5
      %v801 = vsel %vm692, %v799, %v800
      %v802 = vrot.slane %v800, 4
      %v803 = vrot.slane %v248, 5
      %v804 = vsel %vm692, %v802, %v803
      %v806 = vshrl.u32 %v249, 16
      %v808 = vrot.slane %v806, 4
      %v809 = vshll.u32 %v249, 16
      %v811 = vrot.slane %v809, 5
      %v812 = vor.u32 %v808, %v811
      %v813 = vrot.slane %v812, 4
      %v815 = vshll.u32 %v250, 16
      %v817 = vrot.slane %v815, 5
      %v818 = vsel %vm257, %v813, %v817
      %v819 = vshrl.u32 %v250, 16
      %v821 = vrot.slane %v819, 4
      %v822 = vor.u32 %v821, %v817
      %v823 = vrot.slane %v822, 4
      %v825 = vshll.u32 %v251, 16
      %v827 = vrot.slane %v825, 5
      %v828 = vsel %vm257, %v823, %v827
      %v832 = vrot.slane %v249, 5
      %v833 = vrot.slane %v832, 4
      %v834 = vrot.slane %v250, 5
      %v835 = vsel %vm692, %v833, %v834
      %v836 = vrot.slane %v834, 4
      %v837 = vrot.slane %v251, 5
      %v838 = vsel %vm692, %v836, %v837
      %v840 = vshrl.u32 %v252, 16
      %v842 = vrot.slane %v840, 4
      %v843 = vshll.u32 %v252, 16
      %v845 = vrot.slane %v843, 5
      %v846 = vor.u32 %v842, %v845
      %v847 = vrot.slane %v846, 4
      %v849 = vshll.u32 %v253, 16
      %v851 = vrot.slane %v849, 5
      %v852 = vsel %vm257, %v847, %v851
      %v853 = vshrl.u32 %v253, 16
      %v855 = vrot.slane %v853, 4
      %v856 = vor.u32 %v855, %v851
      %v857 = vrot.slane %v856, 4
      %v859 = vshll.u32 %v254, 16
      %v861 = vrot.slane %v859, 5
      %v862 = vsel %vm257, %v857, %v861
      %v866 = vrot.slane %v252, 5
      %v867 = vrot.slane %v866, 4
      %v868 = vrot.slane %v253, 5
      %v869 = vsel %vm692, %v867, %v868
      %v870 = vrot.slane %v868, 4
      %v871 = vrot.slane %v254, 5
      %v872 = vsel %vm692, %v870, %v871
      %v873 = vunpack.c.l.b16 %v201
      %v874 = vunpack.c.l.b16 %v202
      %v875 = vunpack.c.l.b16 %v204
      %v876 = vunpack.c.l.b16 %v205
      %v877 = vunpack.c.l.b16 %v207
      %v878 = vunpack.c.l.b16 %v208
      %v879 = vunpack.c.l.b16 %v210
      %v880 = vunpack.c.l.b16 %v211
      %v881 = vunpack.c.l.b16 %v213
      %v882 = vunpack.c.l.b16 %v214
      %v883 = vunpack.c.l.b16 %v216
      %v884 = vunpack.c.l.b16 %v217
      %v885 = vunpack.c.l.b16 %v219
      %v886 = vunpack.c.l.b16 %v220
      %v887 = vunpack.c.l.b16 %v222
      %v888 = vunpack.c.l.b16 %v223
      %v889 = vunpack.c.l.b16 %v225
      %v890 = vunpack.c.l.b16 %v226
      %v891 = vunpack.c.l.b16 %v228
      %v892 = vunpack.c.l.b16 %v229
      %v893 = vunpack.c.l.b16 %v231
      %v894 = vunpack.c.l.b16 %v232
      %v895 = vunpack.c.l.b16 %v234
      %v896 = vunpack.c.l.b16 %v235
      %v897 = vunpack.c.l.b16 %v237
      %v898 = vunpack.c.l.b16 %v238
      %v899 = vunpack.c.l.b16 %v240
      %v900 = vunpack.c.l.b16 %v241
      %v901 = vunpack.c.l.b16 %v243
      %v902 = vunpack.c.l.b16 %v244
      %v903 = vunpack.c.l.b16 %v246
      %v904 = vunpack.c.l.b16 %v247
      %v905 = vpack.c.b16 %v874, %v873
      %v906 = vpack.c.b16 %v876, %v875
      %v907 = vpack.c.b16 %v878, %v877
      %v908 = vpack.c.b16 %v880, %v879
      %v909 = vpack.c.b16 %v882, %v881
      %v910 = vpack.c.b16 %v884, %v883
      %v911 = vpack.c.b16 %v886, %v885
      %v912 = vpack.c.b16 %v888, %v887
      %v913 = vpack.c.b16 %v890, %v889
      %v914 = vpack.c.b16 %v892, %v891
      %v915 = vpack.c.b16 %v894, %v893
      %v916 = vpack.c.b16 %v896, %v895
      %v917 = vpack.c.b16 %v898, %v897
      %v918 = vpack.c.b16 %v900, %v899
      %v919 = vpack.c.b16 %v902, %v901
      %v920 = vpack.c.b16 %v904, %v903
      %v921 = vunpack.c.l.b16 %v271
      %v922 = vunpack.c.l.b16 %v281
      %v923 = vunpack.c.l.b16 %v295
      %v924 = vunpack.c.l.b16 %v305
      %v925 = vunpack.c.l.b16 %v319
      %v926 = vunpack.c.l.b16 %v329
      %v927 = vunpack.c.l.b16 %v343
      %v928 = vunpack.c.l.b16 %v353
      %v929 = vunpack.c.l.b16 %v367
      %v930 = vunpack.c.l.b16 %v377
      %v931 = vunpack.c.l.b16 %v391
      %v932 = vunpack.c.l.b16 %v401
      %v933 = vunpack.c.l.b16 %v415
      %v934 = vunpack.c.l.b16 %v425
      %v935 = vunpack.c.l.b16 %v439
      %v936 = vunpack.c.l.b16 %v449
      %v937 = vunpack.c.l.b16 %v463
      %v938 = vunpack.c.l.b16 %v473
      %v939 = vunpack.c.l.b16 %v487
      %v940 = vunpack.c.l.b16 %v497
      %v941 = vunpack.c.l.b16 %v511
      %v942 = vunpack.c.l.b16 %v521
      %v943 = vunpack.c.l.b16 %v535
      %v944 = vunpack.c.l.b16 %v545
      %v945 = vunpack.c.l.b16 %v559
      %v946 = vunpack.c.l.b16 %v569
      %v947 = vunpack.c.l.b16 %v583
      %v948 = vunpack.c.l.b16 %v593
      %v949 = vunpack.c.l.b16 %v607
      %v950 = vunpack.c.l.b16 %v617
      %v951 = vunpack.c.l.b16 %v631
      %v952 = vunpack.c.l.b16 %v641
      %v953 = vpack.c.b16 %v922, %v921
      %v954 = vpack.c.b16 %v924, %v923
      %v955 = vpack.c.b16 %v926, %v925
      %v956 = vpack.c.b16 %v928, %v927
      %v957 = vpack.c.b16 %v930, %v929
      %v958 = vpack.c.b16 %v932, %v931
      %v959 = vpack.c.b16 %v934, %v933
      %v960 = vpack.c.b16 %v936, %v935
      %v961 = vpack.c.b16 %v938, %v937
      %v962 = vpack.c.b16 %v940, %v939
      %v963 = vpack.c.b16 %v942, %v941
      %v964 = vpack.c.b16 %v944, %v943
      %v965 = vpack.c.b16 %v946, %v945
      %v966 = vpack.c.b16 %v948, %v947
      %v967 = vpack.c.b16 %v950, %v949
      %v968 = vpack.c.b16 %v952, %v951
      %969 = vrot.lane.b32.xlu0 %v953, 32
      %v970 = vpop.permute.xlu0 %969
      %971 = vrot.lane.b32.xlu0 %v954, 32
      %v972 = vpop.permute.xlu0 %971
      %973 = vrot.lane.b32.xlu0 %v955, 32
      %v974 = vpop.permute.xlu0 %973
      %975 = vrot.lane.b32.xlu0 %v956, 32
      %v976 = vpop.permute.xlu0 %975
      %977 = vrot.lane.b32.xlu0 %v957, 32
      %v978 = vpop.permute.xlu0 %977
      %979 = vrot.lane.b32.xlu0 %v958, 32
      %v980 = vpop.permute.xlu0 %979
      %981 = vrot.lane.b32.xlu0 %v959, 32
      %v982 = vpop.permute.xlu0 %981
      %983 = vrot.lane.b32.xlu0 %v960, 32
      %v984 = vpop.permute.xlu0 %983
      %985 = vrot.lane.b32.xlu0 %v961, 32
      %v986 = vpop.permute.xlu0 %985
      %987 = vrot.lane.b32.xlu0 %v962, 32
      %v988 = vpop.permute.xlu0 %987
      %989 = vrot.lane.b32.xlu0 %v963, 32
      %v990 = vpop.permute.xlu0 %989
      %991 = vrot.lane.b32.xlu0 %v964, 32
      %v992 = vpop.permute.xlu0 %991
      %993 = vrot.lane.b32.xlu0 %v965, 32
      %v994 = vpop.permute.xlu0 %993
      %995 = vrot.lane.b32.xlu0 %v966, 32
      %v996 = vpop.permute.xlu0 %995
      %997 = vrot.lane.b32.xlu0 %v967, 32
      %v998 = vpop.permute.xlu0 %997
      %999 = vrot.lane.b32.xlu0 %v968, 32
      %v1000 = vpop.permute.xlu0 %999
      %v1001 = vunpack.c.l.b16 %v696
      %v1002 = vunpack.c.l.b16 %v699
      %v1003 = vunpack.c.l.b16 %v703
      %v1004 = vunpack.c.l.b16 %v706
      %v1005 = vunpack.c.l.b16 %v710
      %v1006 = vunpack.c.l.b16 %v713
      %v1007 = vunpack.c.l.b16 %v717
      %v1008 = vunpack.c.l.b16 %v720
      %v1009 = vunpack.c.l.b16 %v724
      %v1010 = vunpack.c.l.b16 %v727
      %v1011 = vunpack.c.l.b16 %v731
      %v1012 = vunpack.c.l.b16 %v734
      %v1013 = vunpack.c.l.b16 %v738
      %v1014 = vunpack.c.l.b16 %v741
      %v1015 = vunpack.c.l.b16 %v745
      %v1016 = vunpack.c.l.b16 %v748
      %v1017 = vunpack.c.l.b16 %v752
      %v1018 = vunpack.c.l.b16 %v755
      %v1019 = vunpack.c.l.b16 %v759
      %v1020 = vunpack.c.l.b16 %v762
      %v1021 = vunpack.c.l.b16 %v766
      %v1022 = vunpack.c.l.b16 %v769
      %v1023 = vunpack.c.l.b16 %v773
      %v1024 = vunpack.c.l.b16 %v776
      %v1025 = vunpack.c.l.b16 %v780
      %v1026 = vunpack.c.l.b16 %v783
      %v1027 = vunpack.c.l.b16 %v787
      %v1028 = vunpack.c.l.b16 %v790
      %v1029 = vunpack.c.l.b16 %v794
      %v1030 = vunpack.c.l.b16 %v797
      %v1031 = vunpack.c.l.b16 %v801
      %v1032 = vunpack.c.l.b16 %v804
      %v1033 = vpack.c.b16 %v1002, %v1001
      %v1034 = vpack.c.b16 %v1004, %v1003
      %v1035 = vpack.c.b16 %v1006, %v1005
      %v1036 = vpack.c.b16 %v1008, %v1007
      %v1037 = vpack.c.b16 %v1010, %v1009
      %v1038 = vpack.c.b16 %v1012, %v1011
      %v1039 = vpack.c.b16 %v1014, %v1013
      %v1040 = vpack.c.b16 %v1016, %v1015
      %v1041 = vpack.c.b16 %v1018, %v1017
      %v1042 = vpack.c.b16 %v1020, %v1019
      %v1043 = vpack.c.b16 %v1022, %v1021
      %v1044 = vpack.c.b16 %v1024, %v1023
      %v1045 = vpack.c.b16 %v1026, %v1025
      %v1046 = vpack.c.b16 %v1028, %v1027
      %v1047 = vpack.c.b16 %v1030, %v1029
      %v1048 = vpack.c.b16 %v1032, %v1031
      %1049 = vrot.lane.b32.xlu0 %v1033, 64
      %v1050 = vpop.permute.xlu0 %1049
      %1051 = vrot.lane.b32.xlu0 %v1034, 64
      %v1052 = vpop.permute.xlu0 %1051
      %1053 = vrot.lane.b32.xlu0 %v1035, 64
      %v1054 = vpop.permute.xlu0 %1053
      %1055 = vrot.lane.b32.xlu0 %v1036, 64
      %v1056 = vpop.permute.xlu0 %1055
      %1057 = vrot.lane.b32.xlu0 %v1037, 64
      %v1058 = vpop.permute.xlu0 %1057
      %1059 = vrot.lane.b32.xlu0 %v1038, 64
      %v1060 = vpop.permute.xlu0 %1059
      %1061 = vrot.lane.b32.xlu0 %v1039, 64
      %v1062 = vpop.permute.xlu0 %1061
      %1063 = vrot.lane.b32.xlu0 %v1040, 64
      %v1064 = vpop.permute.xlu0 %1063
      %1065 = vrot.lane.b32.xlu0 %v1041, 64
      %v1066 = vpop.permute.xlu0 %1065
      %1067 = vrot.lane.b32.xlu0 %v1042, 64
      %v1068 = vpop.permute.xlu0 %1067
      %1069 = vrot.lane.b32.xlu0 %v1043, 64
      %v1070 = vpop.permute.xlu0 %1069
      %1071 = vrot.lane.b32.xlu0 %v1044, 64
      %v1072 = vpop.permute.xlu0 %1071
      %1073 = vrot.lane.b32.xlu0 %v1045, 64
      %v1074 = vpop.permute.xlu0 %1073
      %1075 = vrot.lane.b32.xlu0 %v1046, 64
      %v1076 = vpop.permute.xlu0 %1075
      %1077 = vrot.lane.b32.xlu0 %v1047, 64
      %v1078 = vpop.permute.xlu0 %1077
      %1079 = vrot.lane.b32.xlu0 %v1048, 64
      %v1080 = vpop.permute.xlu0 %1079
      %v1081 = vunpack.c.l.b16 %v249
      %v1082 = vunpack.c.l.b16 %v250
      %v1083 = vpack.c.b16 %v1082, %v1081
      %1084 = vrot.lane.b32.xlu0 %v906, 96
      %v1085 = vpop.permute.xlu0 %1084
      %1086 = vrot.lane.b32.xlu0 %v907, 96
      %v1087 = vpop.permute.xlu0 %1086
      %1088 = vrot.lane.b32.xlu0 %v908, 96
      %v1089 = vpop.permute.xlu0 %1088
      %1090 = vrot.lane.b32.xlu0 %v909, 96
      %v1091 = vpop.permute.xlu0 %1090
      %1092 = vrot.lane.b32.xlu0 %v910, 96
      %v1093 = vpop.permute.xlu0 %1092
      %1094 = vrot.lane.b32.xlu0 %v911, 96
      %v1095 = vpop.permute.xlu0 %1094
      %1096 = vrot.lane.b32.xlu0 %v912, 96
      %v1097 = vpop.permute.xlu0 %1096
      %1098 = vrot.lane.b32.xlu0 %v913, 96
      %v1099 = vpop.permute.xlu0 %1098
      %1100 = vrot.lane.b32.xlu0 %v914, 96
      %v1101 = vpop.permute.xlu0 %1100
      %1102 = vrot.lane.b32.xlu0 %v915, 96
      %v1103 = vpop.permute.xlu0 %1102
      %1104 = vrot.lane.b32.xlu0 %v916, 96
      %v1105 = vpop.permute.xlu0 %1104
      %1106 = vrot.lane.b32.xlu0 %v917, 96
      %v1107 = vpop.permute.xlu0 %1106
      %1108 = vrot.lane.b32.xlu0 %v918, 96
      %v1109 = vpop.permute.xlu0 %1108
      %1110 = vrot.lane.b32.xlu0 %v919, 96
      %v1111 = vpop.permute.xlu0 %1110
      %1112 = vrot.lane.b32.xlu0 %v920, 96
      %v1113 = vpop.permute.xlu0 %1112
      %1114 = vrot.lane.b32.xlu0 %v1083, 96
      %v1115 = vpop.permute.xlu0 %1114
      %v1116 = vunpack.c.l.b16 %v818
      %v1117 = vunpack.c.l.b16 %v828
      %v1118 = vpack.c.b16 %v1117, %v1116
      %v1119 = vunpack.c.l.b16 %v835
      %v1120 = vunpack.c.l.b16 %v838
      %v1121 = vpack.c.b16 %v1120, %v1119
      %1122 = vrot.lane.b32.xlu0 %v1034, 32
      %v1123 = vpop.permute.xlu0 %1122
      %1124 = vrot.lane.b32.xlu0 %v1035, 32
      %v1125 = vpop.permute.xlu0 %1124
      %1126 = vrot.lane.b32.xlu0 %v1036, 32
      %v1127 = vpop.permute.xlu0 %1126
      %1128 = vrot.lane.b32.xlu0 %v1037, 32
      %v1129 = vpop.permute.xlu0 %1128
      %1130 = vrot.lane.b32.xlu0 %v1038, 32
      %v1131 = vpop.permute.xlu0 %1130
      %1132 = vrot.lane.b32.xlu0 %v1039, 32
      %v1133 = vpop.permute.xlu0 %1132
      %1134 = vrot.lane.b32.xlu0 %v1040, 32
      %v1135 = vpop.permute.xlu0 %1134
      %1136 = vrot.lane.b32.xlu0 %v1041, 32
      %v1137 = vpop.permute.xlu0 %1136
      %1138 = vrot.lane.b32.xlu0 %v1042, 32
      %v1139 = vpop.permute.xlu0 %1138
      %1140 = vrot.lane.b32.xlu0 %v1043, 32
      %v1141 = vpop.permute.xlu0 %1140
      %1142 = vrot.lane.b32.xlu0 %v1044, 32
      %v1143 = vpop.permute.xlu0 %1142
      %1144 = vrot.lane.b32.xlu0 %v1045, 32
      %v1145 = vpop.permute.xlu0 %1144
      %1146 = vrot.lane.b32.xlu0 %v1046, 32
      %v1147 = vpop.permute.xlu0 %1146
      %1148 = vrot.lane.b32.xlu0 %v1047, 32
      %v1149 = vpop.permute.xlu0 %1148
      %1150 = vrot.lane.b32.xlu0 %v1048, 32
      %v1151 = vpop.permute.xlu0 %1150
      %1152 = vrot.lane.b32.xlu0 %v1121, 32
      %v1153 = vpop.permute.xlu0 %1152
      %v1154 = vunpack.c.l.b16 %v252
      %v1155 = vunpack.c.l.b16 %v253
      %v1156 = vpack.c.b16 %v1155, %v1154
      %1157 = vrot.lane.b32.xlu0 %v907, 64
      %v1158 = vpop.permute.xlu0 %1157
      %1159 = vrot.lane.b32.xlu0 %v908, 64
      %v1160 = vpop.permute.xlu0 %1159
      %1161 = vrot.lane.b32.xlu0 %v909, 64
      %v1162 = vpop.permute.xlu0 %1161
      %1163 = vrot.lane.b32.xlu0 %v910, 64
      %v1164 = vpop.permute.xlu0 %1163
      %1165 = vrot.lane.b32.xlu0 %v911, 64
      %v1166 = vpop.permute.xlu0 %1165
      %1167 = vrot.lane.b32.xlu0 %v912, 64
      %v1168 = vpop.permute.xlu0 %1167
      %1169 = vrot.lane.b32.xlu0 %v913, 64
      %v1170 = vpop.permute.xlu0 %1169
      %1171 = vrot.lane.b32.xlu0 %v914, 64
      %v1172 = vpop.permute.xlu0 %1171
      %1173 = vrot.lane.b32.xlu0 %v915, 64
      %v1174 = vpop.permute.xlu0 %1173
      %1175 = vrot.lane.b32.xlu0 %v916, 64
      %v1176 = vpop.permute.xlu0 %1175
      %1177 = vrot.lane.b32.xlu0 %v917, 64
      %v1178 = vpop.permute.xlu0 %1177
      %1179 = vrot.lane.b32.xlu0 %v918, 64
      %v1180 = vpop.permute.xlu0 %1179
      %1181 = vrot.lane.b32.xlu0 %v919, 64
      %v1182 = vpop.permute.xlu0 %1181
      %1183 = vrot.lane.b32.xlu0 %v920, 64
      %v1184 = vpop.permute.xlu0 %1183
      %1185 = vrot.lane.b32.xlu0 %v1083, 64
      %v1186 = vpop.permute.xlu0 %1185
      %1187 = vrot.lane.b32.xlu0 %v1156, 64
      %v1188 = vpop.permute.xlu0 %1187
      %v1189 = vunpack.c.l.b16 %v852
      %v1190 = vunpack.c.l.b16 %v862
      %v1191 = vpack.c.b16 %v1190, %v1189
      %1192 = vrot.lane.b32.xlu0 %v955, 96
      %v1193 = vpop.permute.xlu0 %1192
      %1194 = vrot.lane.b32.xlu0 %v956, 96
      %v1195 = vpop.permute.xlu0 %1194
      %1196 = vrot.lane.b32.xlu0 %v957, 96
      %v1197 = vpop.permute.xlu0 %1196
      %1198 = vrot.lane.b32.xlu0 %v958, 96
      %v1199 = vpop.permute.xlu0 %1198
      %1200 = vrot.lane.b32.xlu0 %v959, 96
      %v1201 = vpop.permute.xlu0 %1200
      %1202 = vrot.lane.b32.xlu0 %v960, 96
      %v1203 = vpop.permute.xlu0 %1202
      %1204 = vrot.lane.b32.xlu0 %v961, 96
      %v1205 = vpop.permute.xlu0 %1204
      %1206 = vrot.lane.b32.xlu0 %v962, 96
      %v1207 = vpop.permute.xlu0 %1206
      %1208 = vrot.lane.b32.xlu0 %v963, 96
      %v1209 = vpop.permute.xlu0 %1208
      %1210 = vrot.lane.b32.xlu0 %v964, 96
      %v1211 = vpop.permute.xlu0 %1210
      %1212 = vrot.lane.b32.xlu0 %v965, 96
      %v1213 = vpop.permute.xlu0 %1212
      %1214 = vrot.lane.b32.xlu0 %v966, 96
      %v1215 = vpop.permute.xlu0 %1214
      %1216 = vrot.lane.b32.xlu0 %v967, 96
      %v1217 = vpop.permute.xlu0 %1216
      %1218 = vrot.lane.b32.xlu0 %v968, 96
      %v1219 = vpop.permute.xlu0 %1218
      %1220 = vrot.lane.b32.xlu0 %v1118, 96
      %v1221 = vpop.permute.xlu0 %1220
      %1222 = vrot.lane.b32.xlu0 %v1191, 96
      %v1223 = vpop.permute.xlu0 %1222
      %v1224 = vunpack.c.l.b16 %v869
      %v1225 = vunpack.c.l.b16 %v872
      %v1226 = vpack.c.b16 %v1225, %v1224
      %vm1227 = vcmask 261120
      %v1230 = vsel %vm1227, %v905, %v970
      %v1233 = vsel %vm1227, %v906, %v972
      %v1236 = vsel %vm1227, %v907, %v974
      %v1239 = vsel %vm1227, %v908, %v976
      %v1242 = vsel %vm1227, %v909, %v978
      %v1245 = vsel %vm1227, %v910, %v980
      %v1248 = vsel %vm1227, %v911, %v982
      %v1251 = vsel %vm1227, %v912, %v984
      %v1254 = vsel %vm1227, %v913, %v986
      %v1257 = vsel %vm1227, %v914, %v988
      %v1260 = vsel %vm1227, %v915, %v990
      %v1263 = vsel %vm1227, %v916, %v992
      %v1266 = vsel %vm1227, %v917, %v994
      %v1269 = vsel %vm1227, %v918, %v996
      %v1272 = vsel %vm1227, %v919, %v998
      %v1275 = vsel %vm1227, %v920, %v1000
      %vm1276 = vcmask 523264
      %v1278 = vsel %vm1276, %v1230, %v1050
      %v1280 = vsel %vm1276, %v1233, %v1052
      %v1282 = vsel %vm1276, %v1236, %v1054
      %v1284 = vsel %vm1276, %v1239, %v1056
      %v1286 = vsel %vm1276, %v1242, %v1058
      %v1288 = vsel %vm1276, %v1245, %v1060
      %v1290 = vsel %vm1276, %v1248, %v1062
      %v1292 = vsel %vm1276, %v1251, %v1064
      %v1294 = vsel %vm1276, %v1254, %v1066
      %v1296 = vsel %vm1276, %v1257, %v1068
      %v1298 = vsel %vm1276, %v1260, %v1070
      %v1300 = vsel %vm1276, %v1263, %v1072
      %v1302 = vsel %vm1276, %v1266, %v1074
      %v1304 = vsel %vm1276, %v1269, %v1076
      %v1306 = vsel %vm1276, %v1272, %v1078
      %v1308 = vsel %vm1276, %v1275, %v1080
      %vm1309 = vcmask 785408
      %v1311 = vsel %vm1309, %v1278, %v1085
      %v1314 = vsel %vm1309, %v1280, %v1087
      %v1317 = vsel %vm1309, %v1282, %v1089
      %v1320 = vsel %vm1309, %v1284, %v1091
      %v1323 = vsel %vm1309, %v1286, %v1093
      %v1326 = vsel %vm1309, %v1288, %v1095
      %v1329 = vsel %vm1309, %v1290, %v1097
      %v1332 = vsel %vm1309, %v1292, %v1099
      %v1335 = vsel %vm1309, %v1294, %v1101
      %v1338 = vsel %vm1309, %v1296, %v1103
      %v1341 = vsel %vm1309, %v1298, %v1105
      %v1344 = vsel %vm1309, %v1300, %v1107
      %v1347 = vsel %vm1309, %v1302, %v1109
      %v1350 = vsel %vm1309, %v1304, %v1111
      %v1353 = vsel %vm1309, %v1306, %v1113
      %v1356 = vsel %vm1309, %v1308, %v1115
      %v1360 = vsel %vm1227, %v954, %v1123
      %v1363 = vsel %vm1227, %v955, %v1125
      %v1366 = vsel %vm1227, %v956, %v1127
      %v1369 = vsel %vm1227, %v957, %v1129
      %v1372 = vsel %vm1227, %v958, %v1131
      %v1375 = vsel %vm1227, %v959, %v1133
      %v1378 = vsel %vm1227, %v960, %v1135
      %v1381 = vsel %vm1227, %v961, %v1137
      %v1384 = vsel %vm1227, %v962, %v1139
      %v1387 = vsel %vm1227, %v963, %v1141
      %v1390 = vsel %vm1227, %v964, %v1143
      %v1393 = vsel %vm1227, %v965, %v1145
      %v1396 = vsel %vm1227, %v966, %v1147
      %v1399 = vsel %vm1227, %v967, %v1149
      %v1402 = vsel %vm1227, %v968, %v1151
      %v1405 = vsel %vm1227, %v1118, %v1153
      %v1407 = vsel %vm1276, %v1360, %v1158
      %v1409 = vsel %vm1276, %v1363, %v1160
      %v1411 = vsel %vm1276, %v1366, %v1162
      %v1413 = vsel %vm1276, %v1369, %v1164
      %v1415 = vsel %vm1276, %v1372, %v1166
      %v1417 = vsel %vm1276, %v1375, %v1168
      %v1419 = vsel %vm1276, %v1378, %v1170
      %v1421 = vsel %vm1276, %v1381, %v1172
      %v1423 = vsel %vm1276, %v1384, %v1174
      %v1425 = vsel %vm1276, %v1387, %v1176
      %v1427 = vsel %vm1276, %v1390, %v1178
      %v1429 = vsel %vm1276, %v1393, %v1180
      %v1431 = vsel %vm1276, %v1396, %v1182
      %v1433 = vsel %vm1276, %v1399, %v1184
      %v1435 = vsel %vm1276, %v1402, %v1186
      %v1437 = vsel %vm1276, %v1405, %v1188
      %v1439 = vsel %vm1309, %v1407, %v1193
      %v1442 = vsel %vm1309, %v1409, %v1195
      %v1445 = vsel %vm1309, %v1411, %v1197
      %v1448 = vsel %vm1309, %v1413, %v1199
      %v1451 = vsel %vm1309, %v1415, %v1201
      %v1454 = vsel %vm1309, %v1417, %v1203
      %v1457 = vsel %vm1309, %v1419, %v1205
      %v1460 = vsel %vm1309, %v1421, %v1207
      %v1463 = vsel %vm1309, %v1423, %v1209
      %v1466 = vsel %vm1309, %v1425, %v1211
      %v1469 = vsel %vm1309, %v1427, %v1213
      %v1472 = vsel %vm1309, %v1429, %v1215
      %v1475 = vsel %vm1309, %v1431, %v1217
      %v1478 = vsel %vm1309, %v1433, %v1219
      %v1481 = vsel %vm1309, %v1435, %v1221
      %v1484 = vsel %vm1309, %v1437, %v1223
      %v1486 = vld [vmem:[%s1] sm:$0xf]
      %v1487 = vld [vmem:[%s1 + $0x4] sm:$0xf]
      %v1488 = vld [vmem:[%s1 + $0x8] sm:$0xf]
      %v1489 = vld [vmem:[%s1 + $0xc] sm:$0xf]
      %v1490 = vld [vmem:[%s1 + $0x10] sm:$0xf]
      %v1491 = vld [vmem:[%s1 + $0x14] sm:$0xf]
      %v1492 = vld [vmem:[%s1 + $0x18] sm:$0xf]
      %v1493 = vld [vmem:[%s1 + $0x1c] sm:$0xf]
      %v1494 = vld [vmem:[%s1 + $0x20] sm:$0xf]
      %v1495 = vld [vmem:[%s1 + $0x24] sm:$0xf]
      %v1496 = vld [vmem:[%s1 + $0x28] sm:$0xf]
      %v1497 = vld [vmem:[%s1 + $0x2c] sm:$0xf]
      %v1498 = vld [vmem:[%s1 + $0x30] sm:$0xf]
      %v1499 = vld [vmem:[%s1 + $0x34] sm:$0xf]
      %v1500 = vld [vmem:[%s1 + $0x38] sm:$0xf]
      %v1501 = vld [vmem:[%s1 + $0x3c] sm:$0xf]
      %v1502 = vld [vmem:[%s1 + $0x40] sm:$0xf]
      %v1503 = vld [vmem:[%s1 + $0x44] sm:$0xf]
      %v1504 = vld [vmem:[%s1 + $0x48] sm:$0xf]
      %v1505 = vld [vmem:[%s1 + $0x4c] sm:$0xf]
      %v1506 = vld [vmem:[%s1 + $0x50] sm:$0xf]
      %v1507 = vld [vmem:[%s1 + $0x54] sm:$0xf]
      %v1508 = vld [vmem:[%s1 + $0x58] sm:$0xf]
      %v1509 = vld [vmem:[%s1 + $0x5c] sm:$0xf]
      %v1510 = vld [vmem:[%s1 + $0x60] sm:$0xf]
      %v1511 = vld [vmem:[%s1 + $0x64] sm:$0xf]
      %v1512 = vld [vmem:[%s1 + $0x68] sm:$0xf]
      %v1513 = vld [vmem:[%s1 + $0x6c] sm:$0xf]
      %v1514 = vld [vmem:[%s1 + $0x70] sm:$0xf]
      %v1515 = vld [vmem:[%s1 + $0x74] sm:$0xf]
      %v1516 = vld [vmem:[%s1 + $0x78] sm:$0xf]
      %v1517 = vld [vmem:[%s1 + $0x7c] sm:$0xf]
      %v1518 = vld [vmem:[%s1 + $0x80] sm:$0xf]
      %v1519 = vld [vmem:[%s1 + $0x84] sm:$0xf]
      %v1520 = vld [vmem:[%s1 + $0x88] sm:$0xf]
      %v1521 = vld [vmem:[%s1 + $0x8c] sm:$0xf]
      %v1522 = vld [vmem:[%s2] sm:$0x1]
      %v1524 = vlaneseq
      %v1525 = vshrl.u32 %v1524, 7
      %v1526 = vsub.s32 0, %v1525
      %v1527 = vrot.slane %v1522, %v1526
      %v1565 = vunpack.c.l.b16 %v1486
      %v1566 = vunpack.c.l.b16 %v1487
      %v1567 = vunpack.c.l.b16 %v1488
      %v1568 = vunpack.c.l.b16 %v1489
      %v1569 = vunpack.c.l.b16 %v1490
      %v1570 = vunpack.c.l.b16 %v1491
      %v1571 = vunpack.c.l.b16 %v1492
      %v1572 = vunpack.c.l.b16 %v1493
      %v1573 = vunpack.c.l.b16 %v1494
      %v1574 = vunpack.c.l.b16 %v1495
      %v1575 = vunpack.c.l.b16 %v1496
      %v1576 = vunpack.c.l.b16 %v1497
      %v1577 = vunpack.c.l.b16 %v1498
      %v1578 = vunpack.c.l.b16 %v1499
      %v1579 = vunpack.c.l.b16 %v1500
      %v1580 = vunpack.c.l.b16 %v1501
      %v1581 = vunpack.c.l.b16 %v1502
      %v1582 = vunpack.c.l.b16 %v1503
      %v1583 = vunpack.c.l.b16 %v1504
      %v1584 = vunpack.c.l.b16 %v1505
      %v1585 = vunpack.c.l.b16 %v1506
      %v1586 = vunpack.c.l.b16 %v1507
      %v1587 = vunpack.c.l.b16 %v1508
      %v1588 = vunpack.c.l.b16 %v1509
      %v1589 = vunpack.c.l.b16 %v1510
      %v1590 = vunpack.c.l.b16 %v1511
      %v1591 = vunpack.c.l.b16 %v1512
      %v1592 = vunpack.c.l.b16 %v1513
      %v1593 = vunpack.c.l.b16 %v1514
      %v1594 = vunpack.c.l.b16 %v1515
      %v1595 = vunpack.c.l.b16 %v1516
      %v1596 = vunpack.c.l.b16 %v1517
      %v1597 = vunpack.c.l.b16 %v1518
      %v1598 = vunpack.c.l.b16 %v1519
      %v1599 = vunpack.c.l.b16 %v1520
      %v1600 = vunpack.c.l.b16 %v1521
      %v1601 = vpack.c.b16 %v1566, %v1565
      %v1602 = vpack.c.b16 %v1568, %v1567
      %v1603 = vpack.c.b16 %v1570, %v1569
      %v1604 = vpack.c.b16 %v1572, %v1571
      %v1605 = vpack.c.b16 %v1574, %v1573
      %v1606 = vpack.c.b16 %v1576, %v1575
      %v1607 = vpack.c.b16 %v1578, %v1577
      %v1608 = vpack.c.b16 %v1580, %v1579
      %v1609 = vpack.c.b16 %v1582, %v1581
      %v1610 = vpack.c.b16 %v1584, %v1583
      %v1611 = vpack.c.b16 %v1586, %v1585
      %v1612 = vpack.c.b16 %v1588, %v1587
      %v1613 = vpack.c.b16 %v1590, %v1589
      %v1614 = vpack.c.b16 %v1592, %v1591
      %v1615 = vpack.c.b16 %v1594, %v1593
      %v1616 = vpack.c.b16 %v1596, %v1595
      %v1617 = vpack.c.b16 %v1598, %v1597
      %v1618 = vpack.c.b16 %v1600, %v1599
      %v1638 = vsel %vm1227, %v1035, 0
      %v1641 = vsel %vm1227, %v1036, 0
      %v1644 = vsel %vm1227, %v1037, 0
      %v1647 = vsel %vm1227, %v1038, 0
      %v1650 = vsel %vm1227, %v1039, 0
      %v1653 = vsel %vm1227, %v1040, 0
      %v1656 = vsel %vm1227, %v1041, 0
      %v1659 = vsel %vm1227, %v1042, 0
      %v1662 = vsel %vm1227, %v1043, 0
      %v1665 = vsel %vm1227, %v1044, 0
      %v1668 = vsel %vm1227, %v1045, 0
      %v1671 = vsel %vm1227, %v1046, 0
      %v1674 = vsel %vm1227, %v1047, 0
      %v1677 = vsel %vm1227, %v1048, 0
      %v1680 = vsel %vm1227, %v1121, 0
      %v1683 = vsel %vm1227, %v1226, 0
      %1685 = vmatprep.subr.bf16.mxu0 0
      %1686 = vmatpush1.bf16.msra.mxu0 %v1601
      %1687 = vmatprep.subr.bf16.mxu0 0
      %1688 = vmatpush1.bf16.msra.mxu0 %v1602
      %1689 = vmatprep.subr.bf16.mxu0 0
      %1690 = vmatpush1.bf16.msra.mxu0 %v1603
      %1691 = vmatprep.subr.bf16.mxu0 0
      %1692 = vmatpush1.bf16.msra.mxu0 %v1604
      %1693 = vmatprep.subr.bf16.mxu0 0
      %1694 = vmatpush1.bf16.msra.mxu0 %v1605
      %1695 = vmatprep.subr.bf16.mxu0 0
      %1696 = vmatpush1.bf16.msra.mxu0 %v1606
      %1697 = vmatprep.subr.bf16.mxu0 0
      %1698 = vmatpush1.bf16.msra.mxu0 %v1607
      %1699 = vmatprep.subr.bf16.mxu0 0
      %1700 = vmatpush1.bf16.msra.mxu0 %v1608
      %1701 = vmatprep.subr.bf16.mxu0 0
      %1702 = vmatpush1.bf16.msra.mxu0 %v1609
      %1703 = vmatprep.subr.bf16.mxu0 0
      %1704 = vmatpush1.bf16.msra.mxu0 %v1610
      %1705 = vmatprep.subr.bf16.mxu0 0
      %1706 = vmatpush1.bf16.msra.mxu0 %v1611
      %1707 = vmatprep.subr.bf16.mxu0 0
      %1708 = vmatpush1.bf16.msra.mxu0 %v1612
      %1709 = vmatprep.subr.bf16.mxu0 0
      %1710 = vmatpush1.bf16.msra.mxu0 %v1613
      %1711 = vmatprep.subr.bf16.mxu0 0
      %1712 = vmatpush1.bf16.msra.mxu0 %v1614
      %1713 = vmatprep.subr.bf16.mxu0 0
      %1714 = vmatpush1.bf16.msra.mxu0 %v1615
      %1715 = vmatprep.subr.bf16.mxu0 0
      %1716 = vmatpush1.bf16.msra.mxu0 %v1616
      %1717 = vmatprep.mubr.bf16.mxu0 %v1439
      %1718 = vmatmul.mubr.bf16.gmra.mrb[0].mxu0 %v1311
      %v1719 = vpop.f32.mrb[0].mxu0
      %v1720 = vadd.f32 %v1527, %v1719
      %v1721 = vpop.f32.mrb[0].mxu0
      %v1722 = vpop.f32.mrb[0].mxu0
      %v1723 = vadd.f32 %v1527, %v1722
      %v1724 = vpop.f32.mrb[0].mxu0
      %1725 = vmatprep.mubr.bf16.mxu0 %v1442
      %1726 = vmatmul.mubr.bf16.gmra.mrb[0].mxu0 %v1314
      %v1727 = vpop.f32.mrb[0].mxu0
      %v1728 = vadd.f32 %v1527, %v1727
      %v1729 = vpop.f32.mrb[0].mxu0
      %v1730 = vpop.f32.mrb[0].mxu0
      %v1731 = vadd.f32 %v1527, %v1730
      %v1732 = vpop.f32.mrb[0].mxu0
      %1733 = vmatprep.mubr.bf16.mxu0 %v1445
      %1734 = vmatmul.mubr.bf16.gmra.mrb[0].mxu0 %v1317
      %v1735 = vpop.f32.mrb[0].mxu0
      %v1736 = vadd.f32 %v1527, %v1735
      %v1737 = vpop.f32.mrb[0].mxu0
      %v1738 = vpop.f32.mrb[0].mxu0
      %v1739 = vadd.f32 %v1527, %v1738
      %v1740 = vpop.f32.mrb[0].mxu0
      %1741 = vmatprep.mubr.bf16.mxu0 %v1448
      %1742 = vmatmul.mubr.bf16.gmra.mrb[0].mxu0 %v1320
      %v1743 = vpop.f32.mrb[0].mxu0
      %v1744 = vadd.f32 %v1527, %v1743
      %v1745 = vpop.f32.mrb[0].mxu0
      %v1746 = vpop.f32.mrb[0].mxu0
      %v1747 = vadd.f32 %v1527, %v1746
      %v1748 = vpop.f32.mrb[0].mxu0
      %1749 = vmatprep.mubr.bf16.mxu0 %v1451
      %1750 = vmatmul.mubr.bf16.gmra.mrb[0].mxu0 %v1323
      %v1751 = vpop.f32.mrb[0].mxu0
      %v1752 = vadd.f32 %v1527, %v1751
      %v1753 = vpop.f32.mrb[0].mxu0
      %v1754 = vpop.f32.mrb[0].mxu0
      %v1755 = vadd.f32 %v1527, %v1754
      %v1756 = vpop.f32.mrb[0].mxu0
      %1757 = vmatprep.mubr.bf16.mxu0 %v1454
      %1758 = vmatmul.mubr.bf16.gmra.mrb[0].mxu0 %v1326
      %v1759 = vpop.f32.mrb[0].mxu0
      %v1760 = vadd.f32 %v1527, %v1759
      %v1761 = vpop.f32.mrb[0].mxu0
      %v1762 = vpop.f32.mrb[0].mxu0
      %v1763 = vadd.f32 %v1527, %v1762
      %v1764 = vpop.f32.mrb[0].mxu0
      %1765 = vmatprep.mubr.bf16.mxu0 %v1457
      %1766 = vmatmul.mubr.bf16.gmra.mrb[0].mxu0 %v1329
      %v1767 = vpop.f32.mrb[0].mxu0
      %v1768 = vadd.f32 %v1527, %v1767
      %v1769 = vpop.f32.mrb[0].mxu0
      %v1770 = vpop.f32.mrb[0].mxu0
      %v1771 = vadd.f32 %v1527, %v1770
      %v1772 = vpop.f32.mrb[0].mxu0
      %1773 = vmatprep.mubr.bf16.mxu0 %v1460
      %1774 = vmatmul.mubr.bf16.gmra.mrb[0].mxu0 %v1332
      %v1775 = vpop.f32.mrb[0].mxu0
      %v1776 = vadd.f32 %v1527, %v1775
      %v1777 = vpop.f32.mrb[0].mxu0
      %v1778 = vpop.f32.mrb[0].mxu0
      %v1779 = vadd.f32 %v1527, %v1778
      %v1780 = vpop.f32.mrb[0].mxu0
      %1781 = vmatprep.mubr.bf16.mxu0 %v1463
      %1782 = vmatmul.mubr.bf16.gmra.mrb[0].mxu0 %v1335
      %v1783 = vpop.f32.mrb[0].mxu0
      %v1784 = vadd.f32 %v1527, %v1783
      %v1785 = vpop.f32.mrb[0].mxu0
      %v1786 = vpop.f32.mrb[0].mxu0
      %v1787 = vadd.f32 %v1527, %v1786
      %v1788 = vpop.f32.mrb[0].mxu0
      %1789 = vmatprep.mubr.bf16.mxu0 %v1466
      %1790 = vmatmul.mubr.bf16.gmra.mrb[0].mxu0 %v1338
      %v1791 = vpop.f32.mrb[0].mxu0
      %v1792 = vadd.f32 %v1527, %v1791
      %v1793 = vpop.f32.mrb[0].mxu0
      %v1794 = vpop.f32.mrb[0].mxu0
      %v1795 = vadd.f32 %v1527, %v1794
      %v1796 = vpop.f32.mrb[0].mxu0
      %1797 = vmatprep.mubr.bf16.mxu0 %v1469
      %1798 = vmatmul.mubr.bf16.gmra.mrb[0].mxu0 %v1341
      %v1799 = vpop.f32.mrb[0].mxu0
      %v1800 = vadd.f32 %v1527, %v1799
      %v1801 = vpop.f32.mrb[0].mxu0
      %v1802 = vpop.f32.mrb[0].mxu0
      %v1803 = vadd.f32 %v1527, %v1802
      %v1804 = vpop.f32.mrb[0].mxu0
      %1805 = vmatprep.mubr.bf16.mxu0 %v1472
      %1806 = vmatmul.mubr.bf16.gmra.mrb[0].mxu0 %v1344
      %v1807 = vpop.f32.mrb[0].mxu0
      %v1808 = vadd.f32 %v1527, %v1807
      %v1809 = vpop.f32.mrb[0].mxu0
      %v1810 = vpop.f32.mrb[0].mxu0
      %v1811 = vadd.f32 %v1527, %v1810
      %v1812 = vpop.f32.mrb[0].mxu0
      %1813 = vmatprep.mubr.bf16.mxu0 %v1475
      %1814 = vmatmul.mubr.bf16.gmra.mrb[0].mxu0 %v1347
      %v1815 = vpop.f32.mrb[0].mxu0
      %v1816 = vadd.f32 %v1527, %v1815
      %v1817 = vpop.f32.mrb[0].mxu0
      %v1818 = vpop.f32.mrb[0].mxu0
      %v1819 = vadd.f32 %v1527, %v1818
      %v1820 = vpop.f32.mrb[0].mxu0
      %1821 = vmatprep.mubr.bf16.mxu0 %v1478
      %1822 = vmatmul.mubr.bf16.gmra.mrb[0].mxu0 %v1350
      %v1823 = vpop.f32.mrb[0].mxu0
      %v1824 = vadd.f32 %v1527, %v1823
      %v1825 = vpop.f32.mrb[0].mxu0
      %v1826 = vpop.f32.mrb[0].mxu0
      %v1827 = vadd.f32 %v1527, %v1826
      %v1828 = vpop.f32.mrb[0].mxu0
      %1829 = vmatprep.mubr.bf16.mxu0 %v1481
      %1830 = vmatmul.mubr.bf16.gmra.mrb[0].mxu0 %v1353
      %v1831 = vpop.f32.mrb[0].mxu0
      %v1832 = vadd.f32 %v1527, %v1831
      %v1833 = vpop.f32.mrb[0].mxu0
      %v1834 = vpop.f32.mrb[0].mxu0
      %v1835 = vadd.f32 %v1527, %v1834
      %v1836 = vpop.f32.mrb[0].mxu0
      %1837 = vmatprep.mubr.bf16.mxu0 %v1484
      %1838 = vmatmul.mubr.bf16.gmra.mrb[0].mxu0 %v1356
      %v1839 = vpop.f32.mrb[0].mxu0
      %v1840 = vadd.f32 %v1527, %v1839
      %v1841 = vpop.f32.mrb[0].mxu0
      %v1842 = vpop.f32.mrb[0].mxu0
      %v1843 = vadd.f32 %v1527, %v1842
      %v1844 = vpop.f32.mrb[0].mxu0
      %1845 = vdwg.mxu0
      %1846 = vmatprep.subr.bf16.mxu0 0
      %1847 = vmatpush1.bf16.msra.mxu0 %v1617
      %1848 = vmatprep.subr.bf16.mxu0 0
      %1849 = vmatpush1.bf16.msra.mxu0 %v1618
      %1850 = vmatprep.subr.bf16.mxu0 0
      %1851 = vmatpush1.bf16.msra.mxu0 0
      %1852 = vmatprep.subr.bf16.mxu0 0
      %1853 = vmatpush1.bf16.msra.mxu0 0
      %1854 = vmatprep.subr.bf16.mxu0 0
      %1855 = vmatpush1.bf16.msra.mxu0 0
      %1856 = vmatprep.subr.bf16.mxu0 0
      %1857 = vmatpush1.bf16.msra.mxu0 0
      %1858 = vmatprep.subr.bf16.mxu0 0
      %1859 = vmatpush1.bf16.msra.mxu0 0
      %1860 = vmatprep.subr.bf16.mxu0 0
      %1861 = vmatpush1.bf16.msra.mxu0 0
      %1862 = vmatprep.subr.bf16.mxu0 0
      %1863 = vmatpush1.bf16.msra.mxu0 0
      %1864 = vmatprep.subr.bf16.mxu0 0
      %1865 = vmatpush1.bf16.msra.mxu0 0
      %1866 = vmatprep.subr.bf16.mxu0 0
      %1867 = vmatpush1.bf16.msra.mxu0 0
      %1868 = vmatprep.subr.bf16.mxu0 0
      %1869 = vmatpush1.bf16.msra.mxu0 0
      %1870 = vmatprep.subr.bf16.mxu0 0
      %1871 = vmatpush1.bf16.msra.mxu0 0
      %1872 = vmatprep.subr.bf16.mxu0 0
      %1873 = vmatpush1.bf16.msra.mxu0 0
      %1874 = vmatprep.subr.bf16.mxu0 0
      %1875 = vmatpush1.bf16.msra.mxu0 0
      %1876 = vmatprep.subr.bf16.mxu0 0
      %1877 = vmatpush1.bf16.msra.mxu0 0
      %1878 = vmatprep.mubr.bf16.mxu0 0
      %1879 = vmatmul.mubr.bf16.gmra.mrb[0].mxu0 %v1638
      %v1880 = vpop.f32.mrb[0].mxu0
      %v1881 = vadd.f32 %v1720, %v1880
      %v1882 = vpop.f32.mrb[0].mxu0
      %v1883 = vpop.f32.mrb[0].mxu0
      %v1884 = vadd.f32 %v1723, %v1883
      %v1885 = vpop.f32.mrb[0].mxu0
      %1886 = vmatprep.mubr.bf16.mxu0 0
      %1887 = vmatmul.mubr.bf16.gmra.mrb[0].mxu0 %v1641
      %v1888 = vpop.f32.mrb[0].mxu0
      %v1889 = vadd.f32 %v1728, %v1888
      %v1890 = vpop.f32.mrb[0].mxu0
      %v1891 = vpop.f32.mrb[0].mxu0
      %v1892 = vadd.f32 %v1731, %v1891
      %v1893 = vpop.f32.mrb[0].mxu0
      %1894 = vmatprep.mubr.bf16.mxu0 0
      %1895 = vmatmul.mubr.bf16.gmra.mrb[0].mxu0 %v1644
      %v1896 = vpop.f32.mrb[0].mxu0
      %v1897 = vadd.f32 %v1736, %v1896
      %v1898 = vpop.f32.mrb[0].mxu0
      %v1899 = vpop.f32.mrb[0].mxu0
      %v1900 = vadd.f32 %v1739, %v1899
      %v1901 = vpop.f32.mrb[0].mxu0
      %1902 = vmatprep.mubr.bf16.mxu0 0
      %1903 = vmatmul.mubr.bf16.gmra.mrb[0].mxu0 %v1647
      %v1904 = vpop.f32.mrb[0].mxu0
      %v1905 = vadd.f32 %v1744, %v1904
      %v1906 = vpop.f32.mrb[0].mxu0
      %v1907 = vpop.f32.mrb[0].mxu0
      %v1908 = vadd.f32 %v1747, %v1907
      %v1909 = vpop.f32.mrb[0].mxu0
      %1910 = vmatprep.mubr.bf16.mxu0 0
      %1911 = vmatmul.mubr.bf16.gmra.mrb[0].mxu0 %v1650
      %v1912 = vpop.f32.mrb[0].mxu0
      %v1913 = vadd.f32 %v1752, %v1912
      %v1914 = vpop.f32.mrb[0].mxu0
      %v1915 = vpop.f32.mrb[0].mxu0
      %v1916 = vadd.f32 %v1755, %v1915
      %v1917 = vpop.f32.mrb[0].mxu0
      %1918 = vmatprep.mubr.bf16.mxu0 0
      %1919 = vmatmul.mubr.bf16.gmra.mrb[0].mxu0 %v1653
      %v1920 = vpop.f32.mrb[0].mxu0
      %v1921 = vadd.f32 %v1760, %v1920
      %v1922 = vpop.f32.mrb[0].mxu0
      %v1923 = vpop.f32.mrb[0].mxu0
      %v1924 = vadd.f32 %v1763, %v1923
      %v1925 = vpop.f32.mrb[0].mxu0
      %1926 = vmatprep.mubr.bf16.mxu0 0
      %1927 = vmatmul.mubr.bf16.gmra.mrb[0].mxu0 %v1656
      %v1928 = vpop.f32.mrb[0].mxu0
      %v1929 = vadd.f32 %v1768, %v1928
      %v1930 = vpop.f32.mrb[0].mxu0
      %v1931 = vpop.f32.mrb[0].mxu0
      %v1932 = vadd.f32 %v1771, %v1931
      %v1933 = vpop.f32.mrb[0].mxu0
      %1934 = vmatprep.mubr.bf16.mxu0 0
      %1935 = vmatmul.mubr.bf16.gmra.mrb[0].mxu0 %v1659
      %v1936 = vpop.f32.mrb[0].mxu0
      %v1937 = vadd.f32 %v1776, %v1936
      %v1938 = vpop.f32.mrb[0].mxu0
      %v1939 = vpop.f32.mrb[0].mxu0
      %v1940 = vadd.f32 %v1779, %v1939
      %v1941 = vpop.f32.mrb[0].mxu0
      %1942 = vmatprep.mubr.bf16.mxu0 0
      %1943 = vmatmul.mubr.bf16.gmra.mrb[0].mxu0 %v1662
      %v1944 = vpop.f32.mrb[0].mxu0
      %v1945 = vadd.f32 %v1784, %v1944
      %v1946 = vpop.f32.mrb[0].mxu0
      %v1947 = vpop.f32.mrb[0].mxu0
      %v1948 = vadd.f32 %v1787, %v1947
      %v1949 = vpop.f32.mrb[0].mxu0
      %1950 = vmatprep.mubr.bf16.mxu0 0
      %1951 = vmatmul.mubr.bf16.gmra.mrb[0].mxu0 %v1665
      %v1952 = vpop.f32.mrb[0].mxu0
      %v1953 = vadd.f32 %v1792, %v1952
      %v1954 = vpop.f32.mrb[0].mxu0
      %v1955 = vpop.f32.mrb[0].mxu0
      %v1956 = vadd.f32 %v1795, %v1955
      %v1957 = vpop.f32.mrb[0].mxu0
      %1958 = vmatprep.mubr.bf16.mxu0 0
      %1959 = vmatmul.mubr.bf16.gmra.mrb[0].mxu0 %v1668
      %v1960 = vpop.f32.mrb[0].mxu0
      %v1961 = vadd.f32 %v1800, %v1960
      %v1962 = vpop.f32.mrb[0].mxu0
      %v1963 = vpop.f32.mrb[0].mxu0
      %v1964 = vadd.f32 %v1803, %v1963
      %v1965 = vpop.f32.mrb[0].mxu0
      %1966 = vmatprep.mubr.bf16.mxu0 0
      %1967 = vmatmul.mubr.bf16.gmra.mrb[0].mxu0 %v1671
      %v1968 = vpop.f32.mrb[0].mxu0
      %v1969 = vadd.f32 %v1808, %v1968
      %v1970 = vpop.f32.mrb[0].mxu0
      %v1971 = vpop.f32.mrb[0].mxu0
      %v1972 = vadd.f32 %v1811, %v1971
      %v1973 = vpop.f32.mrb[0].mxu0
      %1974 = vmatprep.mubr.bf16.mxu0 0
      %1975 = vmatmul.mubr.bf16.gmra.mrb[0].mxu0 %v1674
      %v1976 = vpop.f32.mrb[0].mxu0
      %v1977 = vadd.f32 %v1816, %v1976
      %v1978 = vpop.f32.mrb[0].mxu0
      %v1979 = vpop.f32.mrb[0].mxu0
      %v1980 = vadd.f32 %v1819, %v1979
      %v1981 = vpop.f32.mrb[0].mxu0
      %1982 = vmatprep.mubr.bf16.mxu0 0
      %1983 = vmatmul.mubr.bf16.gmra.mrb[0].mxu0 %v1677
      %v1984 = vpop.f32.mrb[0].mxu0
      %v1985 = vadd.f32 %v1824, %v1984
      %v1986 = vpop.f32.mrb[0].mxu0
      %v1987 = vpop.f32.mrb[0].mxu0
      %v1988 = vadd.f32 %v1827, %v1987
      %v1989 = vpop.f32.mrb[0].mxu0
      %1990 = vmatprep.mubr.bf16.mxu0 0
      %1991 = vmatmul.mubr.bf16.gmra.mrb[0].mxu0 %v1680
      %v1992 = vpop.f32.mrb[0].mxu0
      %v1993 = vadd.f32 %v1832, %v1992
      %v1994 = vpop.f32.mrb[0].mxu0
      %v1995 = vpop.f32.mrb[0].mxu0
      %v1996 = vadd.f32 %v1835, %v1995
      %v1997 = vpop.f32.mrb[0].mxu0
      %1998 = vmatprep.mubr.bf16.mxu0 0
      %1999 = vmatmul.mubr.bf16.gmra.mrb[0].mxu0 %v1683
      %v2000 = vpop.f32.mrb[0].mxu0
      %v2001 = vadd.f32 %v1840, %v2000
      %v2002 = vpop.f32.mrb[0].mxu0
      %v2003 = vpop.f32.mrb[0].mxu0
      %v2004 = vadd.f32 %v1843, %v2003
      %v2005 = vpop.f32.mrb[0].mxu0
      %2006 = vdwg.mxu0
      %v2007 = vmax.f32 %v1881, 0.0
      %v2008 = vmax.f32 %v1884, 0.0
      %v2009 = vmax.f32 %v1889, 0.0
      %v2010 = vmax.f32 %v1892, 0.0
      %v2011 = vmax.f32 %v1897, 0.0
      %v2012 = vmax.f32 %v1900, 0.0
      %v2013 = vmax.f32 %v1905, 0.0
      %v2014 = vmax.f32 %v1908, 0.0
      %v2015 = vmax.f32 %v1913, 0.0
      %v2016 = vmax.f32 %v1916, 0.0
      %v2017 = vmax.f32 %v1921, 0.0
      %v2018 = vmax.f32 %v1924, 0.0
      %v2019 = vmax.f32 %v1929, 0.0
      %v2020 = vmax.f32 %v1932, 0.0
      %v2021 = vmax.f32 %v1937, 0.0
      %v2022 = vmax.f32 %v1940, 0.0
      %v2023 = vmax.f32 %v1945, 0.0
      %v2024 = vmax.f32 %v1948, 0.0
      %v2025 = vmax.f32 %v1953, 0.0
      %v2026 = vmax.f32 %v1956, 0.0
      %v2027 = vmax.f32 %v1961, 0.0
      %v2028 = vmax.f32 %v1964, 0.0
      %v2029 = vmax.f32 %v1969, 0.0
      %v2030 = vmax.f32 %v1972, 0.0
      %v2031 = vmax.f32 %v1977, 0.0
      %v2032 = vmax.f32 %v1980, 0.0
      %v2033 = vmax.f32 %v1985, 0.0
      %v2034 = vmax.f32 %v1988, 0.0
      %v2035 = vmax.f32 %v1993, 0.0
      %v2036 = vmax.f32 %v1996, 0.0
      %v2037 = vmax.f32 %v2001, 0.0
      %v2038 = vmax.f32 %v2004, 0.0
      %v2039 = vpack.c.bf16 %v2008, %v2007
      %v2040 = vpack.c.bf16 %v2010, %v2009
      %v2041 = vpack.c.bf16 %v2012, %v2011
      %v2042 = vpack.c.bf16 %v2014, %v2013
      %v2043 = vpack.c.bf16 %v2016, %v2015
      %v2044 = vpack.c.bf16 %v2018, %v2017
      %v2045 = vpack.c.bf16 %v2020, %v2019
      %v2046 = vpack.c.bf16 %v2022, %v2021
      %v2047 = vpack.c.bf16 %v2024, %v2023
      %v2048 = vpack.c.bf16 %v2026, %v2025
      %v2049 = vpack.c.bf16 %v2028, %v2027
      %v2050 = vpack.c.bf16 %v2030, %v2029
      %v2051 = vpack.c.bf16 %v2032, %v2031
      %v2052 = vpack.c.bf16 %v2034, %v2033
      %v2053 = vpack.c.bf16 %v2036, %v2035
      %v2054 = vpack.c.bf16 %v2038, %v2037
      %v2071 = vunpack.c.l.b16 %v2039
      %v2072 = vunpack.c.h.b16 %v2039
      %v2073 = vunpack.c.l.b16 %v2040
      %v2074 = vunpack.c.h.b16 %v2040
      %v2075 = vunpack.c.l.b16 %v2041
      %v2076 = vunpack.c.h.b16 %v2041
      %v2077 = vunpack.c.l.b16 %v2042
      %v2078 = vunpack.c.h.b16 %v2042
      %v2079 = vunpack.c.l.b16 %v2043
      %v2080 = vunpack.c.h.b16 %v2043
      %v2081 = vunpack.c.l.b16 %v2044
      %v2082 = vunpack.c.h.b16 %v2044
      %v2083 = vunpack.c.l.b16 %v2045
      %v2084 = vunpack.c.h.b16 %v2045
      %v2085 = vunpack.c.l.b16 %v2046
      %v2086 = vunpack.c.h.b16 %v2046
      %v2087 = vunpack.c.l.b16 %v2047
      %v2088 = vunpack.c.h.b16 %v2047
      %v2089 = vunpack.c.l.b16 %v2048
      %v2090 = vunpack.c.h.b16 %v2048
      %v2091 = vunpack.c.l.b16 %v2049
      %v2092 = vunpack.c.h.b16 %v2049
      %v2093 = vunpack.c.l.b16 %v2050
      %v2094 = vunpack.c.h.b16 %v2050
      %v2095 = vunpack.c.l.b16 %v2051
      %v2096 = vunpack.c.h.b16 %v2051
      %v2097 = vunpack.c.l.b16 %v2052
      %v2098 = vunpack.c.h.b16 %v2052
      %v2099 = vunpack.c.l.b16 %v2053
      %v2100 = vunpack.c.h.b16 %v2053
      %v2101 = vunpack.c.l.b16 %v2054
      %v2102 = vunpack.c.h.b16 %v2054
      %v2103 = vpack.c.b16 %v2071, %v2071
      %v2104 = vpack.c.b16 %v2072, %v2072
      %v2105 = vpack.c.b16 %v2073, %v2073
      %v2106 = vpack.c.b16 %v2074, %v2074
      %v2107 = vpack.c.b16 %v2075, %v2075
      %v2108 = vpack.c.b16 %v2076, %v2076
      %v2109 = vpack.c.b16 %v2077, %v2077
      %v2110 = vpack.c.b16 %v2078, %v2078
      %v2111 = vpack.c.b16 %v2079, %v2079
      %v2112 = vpack.c.b16 %v2080, %v2080
      %v2113 = vpack.c.b16 %v2081, %v2081
      %v2114 = vpack.c.b16 %v2082, %v2082
      %v2115 = vpack.c.b16 %v2083, %v2083
      %v2116 = vpack.c.b16 %v2084, %v2084
      %v2117 = vpack.c.b16 %v2085, %v2085
      %v2118 = vpack.c.b16 %v2086, %v2086
      %v2119 = vpack.c.b16 %v2087, %v2087
      %v2120 = vpack.c.b16 %v2088, %v2088
      %v2121 = vpack.c.b16 %v2089, %v2089
      %v2122 = vpack.c.b16 %v2090, %v2090
      %v2123 = vpack.c.b16 %v2091, %v2091
      %v2124 = vpack.c.b16 %v2092, %v2092
      %v2125 = vpack.c.b16 %v2093, %v2093
      %v2126 = vpack.c.b16 %v2094, %v2094
      %v2127 = vpack.c.b16 %v2095, %v2095
      %v2128 = vpack.c.b16 %v2096, %v2096
      %v2129 = vpack.c.b16 %v2097, %v2097
      %v2130 = vpack.c.b16 %v2098, %v2098
      %v2131 = vpack.c.b16 %v2099, %v2099
      %v2132 = vpack.c.b16 %v2100, %v2100
      %v2133 = vpack.c.b16 %v2101, %v2101
      %v2134 = vpack.c.b16 %v2102, %v2102
      %2167 = vst [vmem:[%s194] sm:$0xf] %v2103
      %2168 = vst [vmem:[%s194 + $0x4] sm:$0xf] %v2104
      %2169 = vst [vmem:[%s194 + $0x8] sm:$0xf] %v2105
      %2170 = vst [vmem:[%s194 + $0xc] sm:$0xf] %v2106
      %2171 = vst [vmem:[%s194 + $0x10] sm:$0xf] %v2107
      %2172 = vst [vmem:[%s194 + $0x14] sm:$0xf] %v2108
      %2173 = vst [vmem:[%s194 + $0x18] sm:$0xf] %v2109
      %2174 = vst [vmem:[%s194 + $0x1c] sm:$0xf] %v2110
      %2175 = vst [vmem:[%s194 + $0x20] sm:$0xf] %v2111
      %2176 = vst [vmem:[%s194 + $0x24] sm:$0xf] %v2112
      %2177 = vst [vmem:[%s194 + $0x28] sm:$0xf] %v2113
      %2178 = vst [vmem:[%s194 + $0x2c] sm:$0xf] %v2114
      %2179 = vst [vmem:[%s194 + $0x30] sm:$0xf] %v2115
      %2180 = vst [vmem:[%s194 + $0x34] sm:$0xf] %v2116
      %2181 = vst [vmem:[%s194 + $0x38] sm:$0xf] %v2117
      %2182 = vst [vmem:[%s194 + $0x3c] sm:$0xf] %v2118
      %2183 = vst [vmem:[%s194 + $0x40] sm:$0xf] %v2119
      %2184 = vst [vmem:[%s194 + $0x44] sm:$0xf] %v2120
      %2185 = vst [vmem:[%s194 + $0x48] sm:$0xf] %v2121
      %2186 = vst [vmem:[%s194 + $0x4c] sm:$0xf] %v2122
      %2187 = vst [vmem:[%s194 + $0x50] sm:$0xf] %v2123
      %2188 = vst [vmem:[%s194 + $0x54] sm:$0xf] %v2124
      %2189 = vst [vmem:[%s194 + $0x58] sm:$0xf] %v2125
      %2190 = vst [vmem:[%s194 + $0x5c] sm:$0xf] %v2126
      %2191 = vst [vmem:[%s194 + $0x60] sm:$0xf] %v2127
      %2192 = vst [vmem:[%s194 + $0x64] sm:$0xf] %v2128
      %2193 = vst [vmem:[%s194 + $0x68] sm:$0xf] %v2129
      %2194 = vst [vmem:[%s194 + $0x6c] sm:$0xf] %v2130
      %2195 = vst [vmem:[%s194 + $0x70] sm:$0xf] %v2131
      %2196 = vst [vmem:[%s194 + $0x74] sm:$0xf] %v2132
      %2197 = vst [vmem:[%s194 + $0x78] sm:$0xf] %v2133
      %2198 = vst [vmem:[%s194 + $0x7c] sm:$0xf] %v2134
      %s2199 = smul.u32 16, %s19
      %p2200 = scmp.lt.s32.totalorder %s18, 1
      %s2201 = scalar_select %p2200, %s18, 1
      %p2202 = scmp.lt.s32.totalorder %s2199, 15
      %s2203 = scalar_select %p2202, %s2199, 15
      %s2204 = smul.addr %s2203, 2
      %s2205 = smul.addr %s2201, 32
      %s2206 = sadd.s32 %s2204, %s2205
      %s2207 = smul.addr %s2206, 4
      %s2208 = scalar_lea.vmem %s3, %s2207
      // Predicated region
      $region33: #{analysis_prior_net.4} parent=31 // pred_check
        %p2209 = pneg %p114
      $region34: #{analysis_prior_net.4} parent=31 // pred_check_branch
        %2211 = sbr.rel (%p2209) target = $region36
      $region35: #{analysis_prior_net.4} parent=31 // pred_region
        %s2212 = smul.u32 16, %s19
      $region36: #{analysis_prior_net.4} parent=31 // pred_fallthru
        _
    $region32: #{analysis_prior_net.4} parent=5 // pred_fallthru
      _
    %p2213 = scmp.le.s32.totalorder 2, %s9
    // Predicated region
    $region37: #{analysis_prior_net.4} parent=5 // pred_check
      %p2214 = pneg %p2213
    $region38: #{analysis_prior_net.4} parent=5 // pred_check_branch
      %2216 = sbr.rel (%p2214) target = $region40
    $region39: #{analysis_prior_net.4} parent=5 // pred_region
      %s2217 = ssub.s32 %s9, 2
      // Predicated region
      $region41: #{analysis_prior_net.4} parent=39 // pred_check
        %p2218 = pneg %p120
      $region42: #{analysis_prior_net.4} parent=39 // pred_check_branch
        %2220 = sbr.rel (%p2218) target = $region44
      $region43: #{analysis_prior_net.4} parent=39 // pred_region
        %s2221 = smul.u32 16, %s21
        %p2222 = scmp.lt.s32.totalorder %s20, 1
        %s2223 = scalar_select %p2222, %s20, 1
        %p2224 = scmp.lt.s32.totalorder %s2221, 15
        %s2225 = scalar_select %p2224, %s2221, 15
        %s2226 = smul.addr %s2225, 2
        %s2227 = smul.addr %s2223, 32
        %s2228 = sadd.s32 %s2226, %s2227
        %s2229 = smul.addr %s2228, 4
        %s2230 = scalar_lea.vmem %s3, %s2229
      $region44: #{analysis_prior_net.4} parent=39 // pred_fallthru
        _
    $region40: #{analysis_prior_net.4} parent=5 // pred_fallthru
      _
  $region6: #{analysis_prior_net.4} parent=0 // loop_footer
    %s13 = sadd.s32 1, %s9
  $region7: #{analysis_prior_net.4} parent=0 // loop_footer_branch
    %8 = sbr.rel target = $region3
  $region8: #{analysis_prior_net.4} parent=0 // loop_exit
    _

// kernel: analysis_prior_net.5
$region0: #{analysis_prior_net.5}
  #allocation0 [shape = 'u32[]', space=smem, size = 0x4, offset = 0x4, fixed_abs, tag = 'smem constant byte address 0x4 - core index']
  #allocation1 [shape = 'u32[144,128]{1,0:T(1,128)}', space=vmem, size = 0x12000, scoped, tag = 'internal scratch']
  %s0 = inlined_call_operand.vmem [shape: bf16[2,10,10,32], index: 0, kind: input, shape index: {}]
  %s1 = inlined_call_operand.vmem [shape: bf16[288,128], index: 1, kind: input, shape index: {}]
  %s2 = inlined_call_operand.vmem [shape: f32[1,128], index: 2, kind: input, shape index: {}]
  %s3 = inlined_call_operand.vmem [shape: f32[2,8,8,128], index: 3, kind: output, shape index: {}]
  %s4 = sld [smem:[#allocation0]]
  $region45: #{analysis_prior_net.5} parent=0
    _
  %s6 = ssub.s32 1, %s4
  %s7 = scalar_select 0, %s6, %s4
  loop: start=0, step=1, limit=4
  $region2: #{analysis_prior_net.5} parent=0 // loop_pre_header
    _
  $region3: #{analysis_prior_net.5} parent=0 // loop_header
    %s9 = sphi 0, %s13
    %p10 = scmp.ge.s32.totalorder %s9, 4
    %s16 = sphi 0, %s28
    %s17 = sphi 0, %s24
    %s18 = sphi 0, %s16
    %s19 = sphi 0, %s17
    %s20 = sphi 0, %s18
    %s21 = sphi 0, %s19
    %s31 = sphi 0, %s33
    %s34 = sphi 0, %s31
    %s35 = sphi 0, %s34
    %s51 = sphi 0, %s35
    %s55 = sphi 0, %s55
    %s57 = sphi 0, %s55
    %s58 = sphi 0, %s57
    %s72 = sphi 0, %s58
    %s76 = sphi 0, %s76
    %s78 = sphi 0, %s76
    %s79 = sphi 0, %s78
    %s93 = sphi 0, %s79
    %s101 = sphi 0, %s103
    %s104 = sphi 0, %s101
    %s105 = sphi 0, %s104
    %s121 = sphi 0, %s105
  $region4: #{analysis_prior_net.5} parent=0 // loop_header_branch
    %12 = sbr.rel (%p10) target = $region8
  $region5: #{analysis_prior_net.5} parent=0 // loop_body
    %s14 = ssub.s32 %s9, 1
    %s15 = ssub.s32 %s9, 2
    %s22 = sadd.s32 1, %s17
    %p23 = scmp.ge.s32.totalorder %s22, 1
    %s24 = scalar_select %p23, 0, %s22
    %s25 = sadd.s32 1, %s16
    %s26 = scalar_select %p23, %s25, %s16
    %p27 = scmp.ge.s32.totalorder %s26, 2
    %s28 = scalar_select %p27, 0, %s26
    %s29 = ssub.s32 %s16, %s28
    %p30 = scmp.eq.s32.totalorder %s29, 0
    %s32 = sadd.s32 %s31, 1
    %s33 = scalar_select %p30, %s31, %s32
    %p36 = pneg %p30
    %p37 = scmp.eq.s32.totalorder %s9, 1
    %p38 = por %p36, %p37
    %p39 = scmp.ne.s32.totalorder %s31, %s34
    %p40 = scmp.eq.s32.totalorder %s9, 0
    %p41 = por %p39, %p40
    %p42 = scmp.ne.s32.totalorder %s31, %s34
    %p43 = scmp.eq.s32.totalorder %s14, 1
    %p44 = por %p42, %p43
    %p45 = scmp.ne.s32.totalorder %s34, %s35
    %p46 = scmp.eq.s32.totalorder %s14, 0
    %p47 = por %p45, %p46
    %p48 = scmp.ne.s32.totalorder %s34, %s35
    %p49 = scmp.eq.s32.totalorder %s15, 1
    %p50 = por %p48, %p49
    %p52 = scmp.ne.s32.totalorder %s35, %s51
    %p53 = scmp.eq.s32.totalorder %s15, 0
    %p54 = por %p52, %p53
    %s56 = sadd.s32 %s55, 1
    %p59 = scmp.eq.s32.totalorder %s9, 1
    %p60 = scmp.ne.s32.totalorder %s55, %s57
    %p61 = scmp.eq.s32.totalorder %s9, 0
    %p62 = por %p60, %p61
    %p63 = scmp.ne.s32.totalorder %s55, %s57
    %p64 = scmp.eq.s32.totalorder %s14, 1
    %p65 = por %p63, %p64
    %p66 = scmp.ne.s32.totalorder %s57, %s58
    %p67 = scmp.eq.s32.totalorder %s14, 0
    %p68 = por %p66, %p67
    %p69 = scmp.ne.s32.totalorder %s57, %s58
    %p70 = scmp.eq.s32.totalorder %s15, 1
    %p71 = por %p69, %p70
    %p73 = scmp.ne.s32.totalorder %s58, %s72
    %p74 = scmp.eq.s32.totalorder %s15, 0
    %p75 = por %p73, %p74
    %s77 = sadd.s32 %s76, 1
    %p80 = scmp.eq.s32.totalorder %s9, 1
    %p81 = scmp.ne.s32.totalorder %s76, %s78
    %p82 = scmp.eq.s32.totalorder %s9, 0
    %p83 = por %p81, %p82
    %p84 = scmp.ne.s32.totalorder %s76, %s78
    %p85 = scmp.eq.s32.totalorder %s14, 1
    %p86 = por %p84, %p85
    %p87 = scmp.ne.s32.totalorder %s78, %s79
    %p88 = scmp.eq.s32.totalorder %s14, 0
    %p89 = por %p87, %p88
    %p90 = scmp.ne.s32.totalorder %s78, %s79
    %p91 = scmp.eq.s32.totalorder %s15, 1
    %p92 = por %p90, %p91
    %p94 = scmp.ne.s32.totalorder %s79, %s93
    %p95 = scmp.eq.s32.totalorder %s15, 0
    %p96 = por %p94, %p95
    %s97 = ssub.s32 %s16, %s28
    %s98 = ssub.s32 %s17, %s24
    %s99 = sor.u32 %s97, %s98
    %p100 = scmp.eq.s32.totalorder %s99, 0
    %s102 = sadd.s32 %s101, 1
    %s103 = scalar_select %p100, %s101, %s102
    %p106 = pneg %p100
    %p107 = scmp.eq.s32.totalorder %s9, 1
    %p108 = por %p106, %p107
    %p109 = scmp.ne.s32.totalorder %s101, %s104
    %p110 = scmp.eq.s32.totalorder %s9, 0
    %p111 = por %p109, %p110
    %p112 = scmp.ne.s32.totalorder %s101, %s104
    %p113 = scmp.eq.s32.totalorder %s14, 1
    %p114 = por %p112, %p113
    %p115 = scmp.ne.s32.totalorder %s104, %s105
    %p116 = scmp.eq.s32.totalorder %s14, 0
    %p117 = por %p115, %p116
    %p118 = scmp.ne.s32.totalorder %s104, %s105
    %p119 = scmp.eq.s32.totalorder %s15, 1
    %p120 = por %p118, %p119
    %p122 = scmp.ne.s32.totalorder %s105, %s121
    %p123 = scmp.eq.s32.totalorder %s15, 0
    %p124 = por %p122, %p123
    %p125 = scmp.le.s32.totalorder 1, %s9
    %p126 = scmp.lt.s32.totalorder %s9, 3
    %p127 = pnand %p125, %p126
    %p128 = pneg %p127
    // Predicated region
    $region9: #{analysis_prior_net.5} parent=5 // pred_check
      _
    $region10: #{analysis_prior_net.5} parent=5 // pred_check_branch
      %130 = sbr.rel (%p127) target = $region12
    $region11: #{analysis_prior_net.5} parent=5 // pred_region
      %s131 = ssub.s32 %s9, 1
      // Predicated region
      $region13: #{analysis_prior_net.5} parent=11 // pred_check
        %p132 = pneg %p68
      $region14: #{analysis_prior_net.5} parent=11 // pred_check_branch
        %134 = sbr.rel (%p132) target = $region16
      $region15: #{analysis_prior_net.5} parent=11 // pred_region
        _
      $region16: #{analysis_prior_net.5} parent=11 // pred_fallthru
        _
      // Predicated region
      $region17: #{analysis_prior_net.5} parent=11 // pred_check
        %p135 = pneg %p89
      $region18: #{analysis_prior_net.5} parent=11 // pred_check_branch
        %137 = sbr.rel (%p135) target = $region20
      $region19: #{analysis_prior_net.5} parent=11 // pred_region
        _
      $region20: #{analysis_prior_net.5} parent=11 // pred_fallthru
        _
    $region12: #{analysis_prior_net.5} parent=5 // pred_fallthru
      _
    %p138 = scmp.lt.s32.totalorder %s9, 2
    // Predicated region
    $region21: #{analysis_prior_net.5} parent=5 // pred_check
      %p139 = pneg %p138
    $region22: #{analysis_prior_net.5} parent=5 // pred_check_branch
      %141 = sbr.rel (%p139) target = $region24
    $region23: #{analysis_prior_net.5} parent=5 // pred_region
      // Predicated region
      $region25: #{analysis_prior_net.5} parent=23 // pred_check
        %p142 = pneg %p41
      $region26: #{analysis_prior_net.5} parent=23 // pred_check_branch
        %144 = sbr.rel (%p142) target = $region28
      $region27: #{analysis_prior_net.5} parent=23 // pred_region
        %p145 = scmp.lt.s32.totalorder %s16, 1
        %s146 = scalar_select %p145, %s16, 1
        %s147 = smul.addr %s146, 20
        %s148 = smul.addr %s147, 4
        %s149 = scalar_lea.vmem %s0, %s148
      $region28: #{analysis_prior_net.5} parent=23 // pred_fallthru
        _
    $region24: #{analysis_prior_net.5} parent=5 // pred_fallthru
      _
    %p150 = scmp.le.s32.totalorder 1, %s9
    %p151 = scmp.lt.s32.totalorder %s9, 3
    %p152 = pnand %p150, %p151
    %p153 = pneg %p152
    // Predicated region
    $region29: #{analysis_prior_net.5} parent=5 // pred_check
      _
    $region30: #{analysis_prior_net.5} parent=5 // pred_check_branch
      %155 = sbr.rel (%p152) target = $region32
    $region31: #{analysis_prior_net.5} parent=5 // pred_region
      %s156 = ssub.s32 %s9, 1
      %p157 = scmp.lt.s32.totalorder %s18, 1
      %s158 = scalar_select %p157, %s18, 1
      %s159 = smul.addr %s158, 20
      %s160 = smul.addr %s159, 4
      %s161 = scalar_lea.vmem %s0, %s160
      %p162 = pneg %p47
      %p163 = pneg %p44
      %p164 = pneg %p68
      %p165 = pneg %p65
      %p166 = pneg %p89
      %p167 = pneg %p86
      %p168 = pneg %p117
      %p169 = pneg %p114
      %s170 = smul.u32 8, %s19
      %p171 = scmp.lt.s32.totalorder %s18, 1
      %s172 = scalar_select %p171, %s18, 1
      %p173 = scmp.lt.s32.totalorder %s170, 7
      %s174 = scalar_select %p173, %s170, 7
      %s175 = smul.addr %s172, 8
      %s176 = sadd.s32 %s174, %s175
      %s177 = smul.addr %s176, 8
      %s178 = scalar_lea.vmem %s3, %s177
      %p179 = scmp.lt.s32.totalorder %s18, 1
      %s180 = scalar_select %p179, %s18, 1
      %s181 = smul.addr %s180, 20
      %s182 = smul.addr %s181, 4
      %s183 = scalar_lea.vmem %s0, %s182
      %s184 = smul.u32 8, %s19
      %p185 = scmp.lt.s32.totalorder %s18, 1
      %s186 = scalar_select %p185, %s18, 1
      %p187 = scmp.lt.s32.totalorder %s184, 7
      %s188 = scalar_select %p187, %s184, 7
      %s189 = smul.addr %s186, 8
      %s190 = sadd.s32 %s188, %s189
      %s191 = smul.addr %s190, 8
      %s192 = scalar_lea.vmem %s3, %s191
      %s193 = smul.u32 8, %s19
      %s195 = smul.u32 %s19, 8
      %s196 = smul.u32 %s195, 2
      %s197 = smul.addr %s196, 4
      %s198 = scalar_lea.vmem %s183, %s197
      %v199 = vld [vmem:[%s198] sm:$0xf]
      %v200 = vld [vmem:[%s198 + $0x4] sm:$0x1]
      %v201 = vld [vmem:[%s198 + $0x8] sm:$0xf]
      %v202 = vld [vmem:[%s198 + $0xc] sm:$0x1]
      %v203 = vld [vmem:[%s198 + $0x10] sm:$0xf]
      %v204 = vld [vmem:[%s198 + $0x14] sm:$0x1]
      %v205 = vld [vmem:[%s198 + $0x18] sm:$0xf]
      %v206 = vld [vmem:[%s198 + $0x1c] sm:$0x1]
      %v207 = vld [vmem:[%s198 + $0x20] sm:$0xf]
      %v208 = vld [vmem:[%s198 + $0x24] sm:$0x1]
      %v209 = vld [vmem:[%s198 + $0x28] sm:$0xf]
      %v210 = vld [vmem:[%s198 + $0x2c] sm:$0x1]
      %v211 = vld [vmem:[%s198 + $0x30] sm:$0xf]
      %v212 = vld [vmem:[%s198 + $0x34] sm:$0x1]
      %v213 = vld [vmem:[%s198 + $0x38] sm:$0xf]
      %v214 = vld [vmem:[%s198 + $0x3c] sm:$0x1]
      %v215 = vld [vmem:[%s198 + $0x40] sm:$0xf]
      %v216 = vld [vmem:[%s198 + $0x44] sm:$0x1]
      %v217 = vld [vmem:[%s198 + $0x48] sm:$0xf]
      %v218 = vld [vmem:[%s198 + $0x4c] sm:$0x1]
      %vm219 = vsmask.f32 3328
      %vm220 = vsmask.f32 7440
      %vm221 = vmor %vm219, %vm220
      %v223 = vshrl.u32 %v199, 16
      %v225 = vrot.slane %v223, 4
      %v226 = vshll.u32 %v199, 16
      %v228 = vrot.slane %v226, 5
      %v229 = vor.u32 %v225, %v228
      %v230 = vrot.slane %v229, 4
      %v232 = vshll.u32 %v200, 16
      %v234 = vrot.slane %v232, 5
      %v235 = vsel %vm221, %v230, %v234
      %v237 = vshrl.u32 %v201, 16
      %v239 = vrot.slane %v237, 4
      %v240 = vshll.u32 %v201, 16
      %v242 = vrot.slane %v240, 5
      %v243 = vor.u32 %v239, %v242
      %v244 = vrot.slane %v243, 4
      %v246 = vshll.u32 %v202, 16
      %v248 = vrot.slane %v246, 5
      %v249 = vsel %vm221, %v244, %v248
      %v251 = vshrl.u32 %v203, 16
      %v253 = vrot.slane %v251, 4
      %v254 = vshll.u32 %v203, 16
      %v256 = vrot.slane %v254, 5
      %v257 = vor.u32 %v253, %v256
      %v258 = vrot.slane %v257, 4
      %v260 = vshll.u32 %v204, 16
      %v262 = vrot.slane %v260, 5
      %v263 = vsel %vm221, %v258, %v262
      %v265 = vshrl.u32 %v205, 16
      %v267 = vrot.slane %v265, 4
      %v268 = vshll.u32 %v205, 16
      %v270 = vrot.slane %v268, 5
      %v271 = vor.u32 %v267, %v270
      %v272 = vrot.slane %v271, 4
      %v274 = vshll.u32 %v206, 16
      %v276 = vrot.slane %v274, 5
      %v277 = vsel %vm221, %v272, %v276
      %v279 = vshrl.u32 %v207, 16
      %v281 = vrot.slane %v279, 4
      %v282 = vshll.u32 %v207, 16
      %v284 = vrot.slane %v282, 5
      %v285 = vor.u32 %v281, %v284
      %v286 = vrot.slane %v285, 4
      %v288 = vshll.u32 %v208, 16
      %v290 = vrot.slane %v288, 5
      %v291 = vsel %vm221, %v286, %v290
      %v293 = vshrl.u32 %v209, 16
      %v295 = vrot.slane %v293, 4
      %v296 = vshll.u32 %v209, 16
      %v298 = vrot.slane %v296, 5
      %v299 = vor.u32 %v295, %v298
      %v300 = vrot.slane %v299, 4
      %v302 = vshll.u32 %v210, 16
      %v304 = vrot.slane %v302, 5
      %v305 = vsel %vm221, %v300, %v304
      %v307 = vshrl.u32 %v211, 16
      %v309 = vrot.slane %v307, 4
      %v310 = vshll.u32 %v211, 16
      %v312 = vrot.slane %v310, 5
      %v313 = vor.u32 %v309, %v312
      %v314 = vrot.slane %v313, 4
      %v316 = vshll.u32 %v212, 16
      %v318 = vrot.slane %v316, 5
      %v319 = vsel %vm221, %v314, %v318
      %v321 = vshrl.u32 %v213, 16
      %v323 = vrot.slane %v321, 4
      %v324 = vshll.u32 %v213, 16
      %v326 = vrot.slane %v324, 5
      %v327 = vor.u32 %v323, %v326
      %v328 = vrot.slane %v327, 4
      %v330 = vshll.u32 %v214, 16
      %v332 = vrot.slane %v330, 5
      %v333 = vsel %vm221, %v328, %v332
      %vm350 = vcmask 1042432
      %vm351 = vcmask 1046532
      %vm352 = vmor %vm350, %vm351
      %v353 = vrot.slane %v199, 5
      %v354 = vrot.slane %v353, 4
      %v355 = vrot.slane %v200, 5
      %v356 = vsel %vm352, %v354, %v355
      %v357 = vrot.slane %v201, 5
      %v358 = vrot.slane %v357, 4
      %v359 = vrot.slane %v202, 5
      %v360 = vsel %vm352, %v358, %v359
      %v361 = vrot.slane %v203, 5
      %v362 = vrot.slane %v361, 4
      %v363 = vrot.slane %v204, 5
      %v364 = vsel %vm352, %v362, %v363
      %v365 = vrot.slane %v205, 5
      %v366 = vrot.slane %v365, 4
      %v367 = vrot.slane %v206, 5
      %v368 = vsel %vm352, %v366, %v367
      %v369 = vrot.slane %v207, 5
      %v370 = vrot.slane %v369, 4
      %v371 = vrot.slane %v208, 5
      %v372 = vsel %vm352, %v370, %v371
      %v373 = vrot.slane %v209, 5
      %v374 = vrot.slane %v373, 4
      %v375 = vrot.slane %v210, 5
      %v376 = vsel %vm352, %v374, %v375
      %v377 = vrot.slane %v211, 5
      %v378 = vrot.slane %v377, 4
      %v379 = vrot.slane %v212, 5
      %v380 = vsel %vm352, %v378, %v379
      %v381 = vrot.slane %v213, 5
      %v382 = vrot.slane %v381, 4
      %v383 = vrot.slane %v214, 5
      %v384 = vsel %vm352, %v382, %v383
      %v386 = vshrl.u32 %v215, 16
      %v388 = vrot.slane %v386, 4
      %v389 = vshll.u32 %v215, 16
      %v391 = vrot.slane %v389, 5
      %v392 = vor.u32 %v388, %v391
      %v393 = vrot.slane %v392, 4
      %v395 = vshll.u32 %v216, 16
      %v397 = vrot.slane %v395, 5
      %v398 = vsel %vm221, %v393, %v397
      %v401 = vrot.slane %v215, 5
      %v402 = vrot.slane %v401, 4
      %v403 = vrot.slane %v216, 5
      %v404 = vsel %vm352, %v402, %v403
      %v406 = vshrl.u32 %v217, 16
      %v408 = vrot.slane %v406, 4
      %v409 = vshll.u32 %v217, 16
      %v411 = vrot.slane %v409, 5
      %v412 = vor.u32 %v408, %v411
      %v413 = vrot.slane %v412, 4
      %v415 = vshll.u32 %v218, 16
      %v417 = vrot.slane %v415, 5
      %v418 = vsel %vm221, %v413, %v417
      %v421 = vrot.slane %v217, 5
      %v422 = vrot.slane %v421, 4
      %v423 = vrot.slane %v218, 5
      %v424 = vsel %vm352, %v422, %v423
      %v425 = vunpack.c.l.b16 %v199
      %v426 = vunpack.c.l.b16 %v201
      %v427 = vunpack.c.l.b16 %v203
      %v428 = vunpack.c.l.b16 %v205
      %v429 = vunpack.c.l.b16 %v207
      %v430 = vunpack.c.l.b16 %v209
      %v431 = vunpack.c.l.b16 %v211
      %v432 = vunpack.c.l.b16 %v213
      %v433 = vpack.c.b16 %v426, %v425
      %v434 = vpack.c.b16 %v428, %v427
      %v435 = vpack.c.b16 %v430, %v429
      %v436 = vpack.c.b16 %v432, %v431
      %v437 = vunpack.c.l.b16 %v235
      %v438 = vunpack.c.l.b16 %v249
      %v439 = vunpack.c.l.b16 %v263
      %v440 = vunpack.c.l.b16 %v277
      %v441 = vunpack.c.l.b16 %v291
      %v442 = vunpack.c.l.b16 %v305
      %v443 = vunpack.c.l.b16 %v319
      %v444 = vunpack.c.l.b16 %v333
      %v445 = vpack.c.b16 %v438, %v437
      %v446 = vpack.c.b16 %v440, %v439
      %v447 = vpack.c.b16 %v442, %v441
      %v448 = vpack.c.b16 %v444, %v443
      %449 = vrot.lane.b32.xlu0 %v445, 32
      %v450 = vpop.permute.xlu0 %449
      %451 = vrot.lane.b32.xlu0 %v446, 32
      %v452 = vpop.permute.xlu0 %451
      %453 = vrot.lane.b32.xlu0 %v447, 32
      %v454 = vpop.permute.xlu0 %453
      %455 = vrot.lane.b32.xlu0 %v448, 32
      %v456 = vpop.permute.xlu0 %455
      %v457 = vunpack.c.l.b16 %v356
      %v458 = vunpack.c.l.b16 %v360
      %v459 = vunpack.c.l.b16 %v364
      %v460 = vunpack.c.l.b16 %v368
      %v461 = vunpack.c.l.b16 %v372
      %v462 = vunpack.c.l.b16 %v376
      %v463 = vunpack.c.l.b16 %v380
      %v464 = vunpack.c.l.b16 %v384
      %v465 = vpack.c.b16 %v458, %v457
      %v466 = vpack.c.b16 %v460, %v459
      %v467 = vpack.c.b16 %v462, %v461
      %v468 = vpack.c.b16 %v464, %v463
      %469 = vrot.lane.b32.xlu0 %v465, 64
      %v470 = vpop.permute.xlu0 %469
      %471 = vrot.lane.b32.xlu0 %v466, 64
      %v472 = vpop.permute.xlu0 %471
      %473 = vrot.lane.b32.xlu0 %v467, 64
      %v474 = vpop.permute.xlu0 %473
      %475 = vrot.lane.b32.xlu0 %v468, 64
      %v476 = vpop.permute.xlu0 %475
      %v477 = vunpack.c.l.b16 %v215
      %v478 = vpack.c.b16 %v427, %v426
      %v479 = vpack.c.b16 %v429, %v428
      %v480 = vpack.c.b16 %v431, %v430
      %v481 = vpack.c.b16 %v477, %v432
      %482 = vrot.lane.b32.xlu0 %v478, 96
      %v483 = vpop.permute.xlu0 %482
      %484 = vrot.lane.b32.xlu0 %v479, 96
      %v485 = vpop.permute.xlu0 %484
      %486 = vrot.lane.b32.xlu0 %v480, 96
      %v487 = vpop.permute.xlu0 %486
      %488 = vrot.lane.b32.xlu0 %v481, 96
      %v489 = vpop.permute.xlu0 %488
      %v490 = vunpack.c.l.b16 %v398
      %v491 = vpack.c.b16 %v439, %v438
      %v492 = vpack.c.b16 %v441, %v440
      %v493 = vpack.c.b16 %v443, %v442
      %v494 = vpack.c.b16 %v490, %v444
      %v495 = vunpack.c.l.b16 %v404
      %v496 = vpack.c.b16 %v459, %v458
      %v497 = vpack.c.b16 %v461, %v460
      %v498 = vpack.c.b16 %v463, %v462
      %v499 = vpack.c.b16 %v495, %v464
      %500 = vrot.lane.b32.xlu0 %v496, 32
      %v501 = vpop.permute.xlu0 %500
      %502 = vrot.lane.b32.xlu0 %v497, 32
      %v503 = vpop.permute.xlu0 %502
      %504 = vrot.lane.b32.xlu0 %v498, 32
      %v505 = vpop.permute.xlu0 %504
      %506 = vrot.lane.b32.xlu0 %v499, 32
      %v507 = vpop.permute.xlu0 %506
      %v508 = vunpack.c.l.b16 %v217
      %v509 = vpack.c.b16 %v508, %v477
      %510 = vrot.lane.b32.xlu0 %v434, 64
      %v511 = vpop.permute.xlu0 %510
      %512 = vrot.lane.b32.xlu0 %v435, 64
      %v513 = vpop.permute.xlu0 %512
      %514 = vrot.lane.b32.xlu0 %v436, 64
      %v515 = vpop.permute.xlu0 %514
      %516 = vrot.lane.b32.xlu0 %v509, 64
      %v517 = vpop.permute.xlu0 %516
      %v518 = vunpack.c.l.b16 %v418
      %v519 = vpack.c.b16 %v518, %v490
      %520 = vrot.lane.b32.xlu0 %v446, 96
      %v521 = vpop.permute.xlu0 %520
      %522 = vrot.lane.b32.xlu0 %v447, 96
      %v523 = vpop.permute.xlu0 %522
      %524 = vrot.lane.b32.xlu0 %v448, 96
      %v525 = vpop.permute.xlu0 %524
      %526 = vrot.lane.b32.xlu0 %v519, 96
      %v527 = vpop.permute.xlu0 %526
      %v528 = vunpack.c.l.b16 %v424
      %v529 = vpack.c.b16 %v528, %v495
      %vm530 = vcmask 261120
      %v533 = vsel %vm530, %v433, %v450
      %v536 = vsel %vm530, %v434, %v452
      %v539 = vsel %vm530, %v435, %v454
      %v542 = vsel %vm530, %v436, %v456
      %vm543 = vcmask 523264
      %v545 = vsel %vm543, %v533, %v470
      %v547 = vsel %vm543, %v536, %v472
      %v549 = vsel %vm543, %v539, %v474
      %v551 = vsel %vm543, %v542, %v476
      %vm552 = vcmask 785408
      %v554 = vsel %vm552, %v545, %v483
      %v557 = vsel %vm552, %v547, %v485
      %v560 = vsel %vm552, %v549, %v487
      %v563 = vsel %vm552, %v551, %v489
      %v567 = vsel %vm530, %v491, %v501
      %v570 = vsel %vm530, %v492, %v503
      %v573 = vsel %vm530, %v493, %v505
      %v576 = vsel %vm530, %v494, %v507
      %v578 = vsel %vm543, %v567, %v511
      %v580 = vsel %vm543, %v570, %v513
      %v582 = vsel %vm543, %v573, %v515
      %v584 = vsel %vm543, %v576, %v517
      %v586 = vsel %vm552, %v578, %v521
      %v589 = vsel %vm552, %v580, %v523
      %v592 = vsel %vm552, %v582, %v525
      %v595 = vsel %vm552, %v584, %v527
      %v597 = vld [vmem:[%s1] sm:$0xf]
      %v598 = vld [vmem:[%s1 + $0x4] sm:$0xf]
      %v599 = vld [vmem:[%s1 + $0x8] sm:$0xf]
      %v600 = vld [vmem:[%s1 + $0xc] sm:$0xf]
      %v601 = vld [vmem:[%s1 + $0x10] sm:$0xf]
      %v602 = vld [vmem:[%s1 + $0x14] sm:$0xf]
      %v603 = vld [vmem:[%s1 + $0x18] sm:$0xf]
      %v604 = vld [vmem:[%s1 + $0x1c] sm:$0xf]
      %v605 = vld [vmem:[%s1 + $0x20] sm:$0xf]
      %v606 = vld [vmem:[%s1 + $0x24] sm:$0xf]
      %v607 = vld [vmem:[%s1 + $0x28] sm:$0xf]
      %v608 = vld [vmem:[%s1 + $0x2c] sm:$0xf]
      %v609 = vld [vmem:[%s1 + $0x30] sm:$0xf]
      %v610 = vld [vmem:[%s1 + $0x34] sm:$0xf]
      %v611 = vld [vmem:[%s1 + $0x38] sm:$0xf]
      %v612 = vld [vmem:[%s1 + $0x3c] sm:$0xf]
      %v613 = vld [vmem:[%s1 + $0x40] sm:$0xf]
      %v614 = vld [vmem:[%s1 + $0x44] sm:$0xf]
      %v615 = vld [vmem:[%s1 + $0x48] sm:$0xf]
      %v616 = vld [vmem:[%s1 + $0x4c] sm:$0xf]
      %v617 = vld [vmem:[%s1 + $0x50] sm:$0xf]
      %v618 = vld [vmem:[%s1 + $0x54] sm:$0xf]
      %v619 = vld [vmem:[%s1 + $0x58] sm:$0xf]
      %v620 = vld [vmem:[%s1 + $0x5c] sm:$0xf]
      %v621 = vld [vmem:[%s1 + $0x60] sm:$0xf]
      %v622 = vld [vmem:[%s1 + $0x64] sm:$0xf]
      %v623 = vld [vmem:[%s1 + $0x68] sm:$0xf]
      %v624 = vld [vmem:[%s1 + $0x6c] sm:$0xf]
      %v625 = vld [vmem:[%s1 + $0x70] sm:$0xf]
      %v626 = vld [vmem:[%s1 + $0x74] sm:$0xf]
      %v627 = vld [vmem:[%s1 + $0x78] sm:$0xf]
      %v628 = vld [vmem:[%s1 + $0x7c] sm:$0xf]
      %v629 = vld [vmem:[%s1 + $0x80] sm:$0xf]
      %v630 = vld [vmem:[%s1 + $0x84] sm:$0xf]
      %v631 = vld [vmem:[%s1 + $0x88] sm:$0xf]
      %v632 = vld [vmem:[%s1 + $0x8c] sm:$0xf]
      %v633 = vld [vmem:[%s2] sm:$0x1]
      %v635 = vlaneseq
      %v636 = vshrl.u32 %v635, 7
      %v637 = vsub.s32 0, %v636
      %v638 = vrot.slane %v633, %v637
      %v676 = vunpack.c.l.b16 %v597
      %v677 = vunpack.c.l.b16 %v598
      %v678 = vunpack.c.l.b16 %v599
      %v679 = vunpack.c.l.b16 %v600
      %v680 = vunpack.c.l.b16 %v601
      %v681 = vunpack.c.l.b16 %v602
      %v682 = vunpack.c.l.b16 %v603
      %v683 = vunpack.c.l.b16 %v604
      %v684 = vunpack.c.l.b16 %v605
      %v685 = vunpack.c.l.b16 %v606
      %v686 = vunpack.c.l.b16 %v607
      %v687 = vunpack.c.l.b16 %v608
      %v688 = vunpack.c.l.b16 %v609
      %v689 = vunpack.c.l.b16 %v610
      %v690 = vunpack.c.l.b16 %v611
      %v691 = vunpack.c.l.b16 %v612
      %v692 = vunpack.c.l.b16 %v613
      %v693 = vunpack.c.l.b16 %v614
      %v694 = vunpack.c.l.b16 %v615
      %v695 = vunpack.c.l.b16 %v616
      %v696 = vunpack.c.l.b16 %v617
      %v697 = vunpack.c.l.b16 %v618
      %v698 = vunpack.c.l.b16 %v619
      %v699 = vunpack.c.l.b16 %v620
      %v700 = vunpack.c.l.b16 %v621
      %v701 = vunpack.c.l.b16 %v622
      %v702 = vunpack.c.l.b16 %v623
      %v703 = vunpack.c.l.b16 %v624
      %v704 = vunpack.c.l.b16 %v625
      %v705 = vunpack.c.l.b16 %v626
      %v706 = vunpack.c.l.b16 %v627
      %v707 = vunpack.c.l.b16 %v628
      %v708 = vunpack.c.l.b16 %v629
      %v709 = vunpack.c.l.b16 %v630
      %v710 = vunpack.c.l.b16 %v631
      %v711 = vunpack.c.l.b16 %v632
      %v712 = vpack.c.b16 %v677, %v676
      %v713 = vpack.c.b16 %v679, %v678
      %v714 = vpack.c.b16 %v681, %v680
      %v715 = vpack.c.b16 %v683, %v682
      %v716 = vpack.c.b16 %v685, %v684
      %v717 = vpack.c.b16 %v687, %v686
      %v718 = vpack.c.b16 %v689, %v688
      %v719 = vpack.c.b16 %v691, %v690
      %v720 = vpack.c.b16 %v693, %v692
      %v721 = vpack.c.b16 %v695, %v694
      %v722 = vpack.c.b16 %v697, %v696
      %v723 = vpack.c.b16 %v699, %v698
      %v724 = vpack.c.b16 %v701, %v700
      %v725 = vpack.c.b16 %v703, %v702
      %v726 = vpack.c.b16 %v705, %v704
      %v727 = vpack.c.b16 %v707, %v706
      %v728 = vpack.c.b16 %v709, %v708
      %v729 = vpack.c.b16 %v711, %v710
      %v749 = vsel %vm530, %v466, 0
      %v752 = vsel %vm530, %v467, 0
      %v755 = vsel %vm530, %v468, 0
      %v758 = vsel %vm530, %v529, 0
      %760 = vmatprep.subr.bf16.mxu0 0
      %761 = vmatpush1.bf16.msra.mxu0 %v712
      %762 = vmatprep.subr.bf16.mxu0 0
      %763 = vmatpush1.bf16.msra.mxu0 %v713
      %764 = vmatprep.subr.bf16.mxu0 0
      %765 = vmatpush1.bf16.msra.mxu0 %v714
      %766 = vmatprep.subr.bf16.mxu0 0
      %767 = vmatpush1.bf16.msra.mxu0 %v715
      %768 = vmatprep.subr.bf16.mxu0 0
      %769 = vmatpush1.bf16.msra.mxu0 %v716
      %770 = vmatprep.subr.bf16.mxu0 0
      %771 = vmatpush1.bf16.msra.mxu0 %v717
      %772 = vmatprep.subr.bf16.mxu0 0
      %773 = vmatpush1.bf16.msra.mxu0 %v718
      %774 = vmatprep.subr.bf16.mxu0 0
      %775 = vmatpush1.bf16.msra.mxu0 %v719
      %776 = vmatprep.subr.bf16.mxu0 0
      %777 = vmatpush1.bf16.msra.mxu0 %v720
      %778 = vmatprep.subr.bf16.mxu0 0
      %779 = vmatpush1.bf16.msra.mxu0 %v721
      %780 = vmatprep.subr.bf16.mxu0 0
      %781 = vmatpush1.bf16.msra.mxu0 %v722
      %782 = vmatprep.subr.bf16.mxu0 0
      %783 = vmatpush1.bf16.msra.mxu0 %v723
      %784 = vmatprep.subr.bf16.mxu0 0
      %785 = vmatpush1.bf16.msra.mxu0 %v724
      %786 = vmatprep.subr.bf16.mxu0 0
      %787 = vmatpush1.bf16.msra.mxu0 %v725
      %788 = vmatprep.subr.bf16.mxu0 0
      %789 = vmatpush1.bf16.msra.mxu0 %v726
      %790 = vmatprep.subr.bf16.mxu0 0
      %791 = vmatpush1.bf16.msra.mxu0 %v727
      %792 = vmatprep.mubr.bf16.mxu0 %v586
      %793 = vmatmul.mubr.bf16.gmra.mrb[0].mxu0 %v554
      %v794 = vpop.f32.mrb[0].mxu0
      %v795 = vadd.f32 %v638, %v794
      %v796 = vpop.f32.mrb[0].mxu0
      %v797 = vpop.f32.mrb[0].mxu0
      %v798 = vadd.f32 %v638, %v797
      %v799 = vpop.f32.mrb[0].mxu0
      %800 = vmatprep.mubr.bf16.mxu0 %v589
      %801 = vmatmul.mubr.bf16.gmra.mrb[0].mxu0 %v557
      %v802 = vpop.f32.mrb[0].mxu0
      %v803 = vadd.f32 %v638, %v802
      %v804 = vpop.f32.mrb[0].mxu0
      %v805 = vpop.f32.mrb[0].mxu0
      %v806 = vadd.f32 %v638, %v805
      %v807 = vpop.f32.mrb[0].mxu0
      %808 = vmatprep.mubr.bf16.mxu0 %v592
      %809 = vmatmul.mubr.bf16.gmra.mrb[0].mxu0 %v560
      %v810 = vpop.f32.mrb[0].mxu0
      %v811 = vadd.f32 %v638, %v810
      %v812 = vpop.f32.mrb[0].mxu0
      %v813 = vpop.f32.mrb[0].mxu0
      %v814 = vadd.f32 %v638, %v813
      %v815 = vpop.f32.mrb[0].mxu0
      %816 = vmatprep.mubr.bf16.mxu0 %v595
      %817 = vmatmul.mubr.bf16.gmra.mrb[0].mxu0 %v563
      %v818 = vpop.f32.mrb[0].mxu0
      %v819 = vadd.f32 %v638, %v818
      %v820 = vpop.f32.mrb[0].mxu0
      %v821 = vpop.f32.mrb[0].mxu0
      %v822 = vadd.f32 %v638, %v821
      %v823 = vpop.f32.mrb[0].mxu0
      %824 = vdwg.mxu0
      %825 = vmatprep.subr.bf16.mxu0 0
      %826 = vmatpush1.bf16.msra.mxu0 %v728
      %827 = vmatprep.subr.bf16.mxu0 0
      %828 = vmatpush1.bf16.msra.mxu0 %v729
      %829 = vmatprep.subr.bf16.mxu0 0
      %830 = vmatpush1.bf16.msra.mxu0 0
      %831 = vmatprep.subr.bf16.mxu0 0
      %832 = vmatpush1.bf16.msra.mxu0 0
      %833 = vmatprep.subr.bf16.mxu0 0
      %834 = vmatpush1.bf16.msra.mxu0 0
      %835 = vmatprep.subr.bf16.mxu0 0
      %836 = vmatpush1.bf16.msra.mxu0 0
      %837 = vmatprep.subr.bf16.mxu0 0
      %838 = vmatpush1.bf16.msra.mxu0 0
      %839 = vmatprep.subr.bf16.mxu0 0
      %840 = vmatpush1.bf16.msra.mxu0 0
      %841 = vmatprep.subr.bf16.mxu0 0
      %842 = vmatpush1.bf16.msra.mxu0 0
      %843 = vmatprep.subr.bf16.mxu0 0
      %844 = vmatpush1.bf16.msra.mxu0 0
      %845 = vmatprep.subr.bf16.mxu0 0
      %846 = vmatpush1.bf16.msra.mxu0 0
      %847 = vmatprep.subr.bf16.mxu0 0
      %848 = vmatpush1.bf16.msra.mxu0 0
      %849 = vmatprep.subr.bf16.mxu0 0
      %850 = vmatpush1.bf16.msra.mxu0 0
      %851 = vmatprep.subr.bf16.mxu0 0
      %852 = vmatpush1.bf16.msra.mxu0 0
      %853 = vmatprep.subr.bf16.mxu0 0
      %854 = vmatpush1.bf16.msra.mxu0 0
      %855 = vmatprep.subr.bf16.mxu0 0
      %856 = vmatpush1.bf16.msra.mxu0 0
      %857 = vmatprep.mubr.bf16.mxu0 0
      %858 = vmatmul.mubr.bf16.gmra.mrb[0].mxu0 %v749
      %v859 = vpop.f32.mrb[0].mxu0
      %v860 = vadd.f32 %v795, %v859
      %v861 = vpop.f32.mrb[0].mxu0
      %v862 = vpop.f32.mrb[0].mxu0
      %v863 = vadd.f32 %v798, %v862
      %v864 = vpop.f32.mrb[0].mxu0
      %865 = vmatprep.mubr.bf16.mxu0 0
      %866 = vmatmul.mubr.bf16.gmra.mrb[0].mxu0 %v752
      %v867 = vpop.f32.mrb[0].mxu0
      %v868 = vadd.f32 %v803, %v867
      %v869 = vpop.f32.mrb[0].mxu0
      %v870 = vpop.f32.mrb[0].mxu0
      %v871 = vadd.f32 %v806, %v870
      %v872 = vpop.f32.mrb[0].mxu0
      %873 = vmatprep.mubr.bf16.mxu0 0
      %874 = vmatmul.mubr.bf16.gmra.mrb[0].mxu0 %v755
      %v875 = vpop.f32.mrb[0].mxu0
      %v876 = vadd.f32 %v811, %v875
      %v877 = vpop.f32.mrb[0].mxu0
      %v878 = vpop.f32.mrb[0].mxu0
      %v879 = vadd.f32 %v814, %v878
      %v880 = vpop.f32.mrb[0].mxu0
      %881 = vmatprep.mubr.bf16.mxu0 0
      %882 = vmatmul.mubr.bf16.gmra.mrb[0].mxu0 %v758
      %v883 = vpop.f32.mrb[0].mxu0
      %v884 = vadd.f32 %v819, %v883
      %v885 = vpop.f32.mrb[0].mxu0
      %v886 = vpop.f32.mrb[0].mxu0
      %v887 = vadd.f32 %v822, %v886
      %v888 = vpop.f32.mrb[0].mxu0
      %889 = vdwg.mxu0
      %890 = vst [vmem:[%s192] sm:$0xff] %v860
      %891 = vst [vmem:[%s192 + $0x8] sm:$0xff] %v863
      %892 = vst [vmem:[%s192 + $0x10] sm:$0xff] %v868
      %893 = vst [vmem:[%s192 + $0x18] sm:$0xff] %v871
      %894 = vst [vmem:[%s192 + $0x20] sm:$0xff] %v876
      %895 = vst [vmem:[%s192 + $0x28] sm:$0xff] %v879
      %896 = vst [vmem:[%s192 + $0x30] sm:$0xff] %v884
      %897 = vst [vmem:[%s192 + $0x38] sm:$0xff] %v887
      %s898 = smul.u32 8, %s19
      %p899 = scmp.lt.s32.totalorder %s18, 1
      %s900 = scalar_select %p899, %s18, 1
      %p901 = scmp.lt.s32.totalorder %s898, 7
      %s902 = scalar_select %p901, %s898, 7
      %s903 = smul.addr %s900, 8
      %s904 = sadd.s32 %s902, %s903
      %s905 = smul.addr %s904, 8
      %s906 = scalar_lea.vmem %s3, %s905
      // Predicated region
      $region33: #{analysis_prior_net.5} parent=31 // pred_check
        %p907 = pneg %p114
      $region34: #{analysis_prior_net.5} parent=31 // pred_check_branch
        %909 = sbr.rel (%p907) target = $region36
      $region35: #{analysis_prior_net.5} parent=31 // pred_region
        %s910 = smul.u32 8, %s19
      $region36: #{analysis_prior_net.5} parent=31 // pred_fallthru
        _
    $region32: #{analysis_prior_net.5} parent=5 // pred_fallthru
      _
    %p911 = scmp.le.s32.totalorder 2, %s9
    // Predicated region
    $region37: #{analysis_prior_net.5} parent=5 // pred_check
      %p912 = pneg %p911
    $region38: #{analysis_prior_net.5} parent=5 // pred_check_branch
      %914 = sbr.rel (%p912) target = $region40
    $region39: #{analysis_prior_net.5} parent=5 // pred_region
      %s915 = ssub.s32 %s9, 2
      // Predicated region
      $region41: #{analysis_prior_net.5} parent=39 // pred_check
        %p916 = pneg %p120
      $region42: #{analysis_prior_net.5} parent=39 // pred_check_branch
        %918 = sbr.rel (%p916) target = $region44
      $region43: #{analysis_prior_net.5} parent=39 // pred_region
        %s919 = smul.u32 8, %s21
        %p920 = scmp.lt.s32.totalorder %s20, 1
        %s921 = scalar_select %p920, %s20, 1
        %p922 = scmp.lt.s32.totalorder %s919, 7
        %s923 = scalar_select %p922, %s919, 7
        %s924 = smul.addr %s921, 8
        %s925 = sadd.s32 %s923, %s924
        %s926 = smul.addr %s925, 8
        %s927 = scalar_lea.vmem %s3, %s926
      $region44: #{analysis_prior_net.5} parent=39 // pred_fallthru
        _
    $region40: #{analysis_prior_net.5} parent=5 // pred_fallthru
      _
  $region6: #{analysis_prior_net.5} parent=0 // loop_footer
    %s13 = sadd.s32 1, %s9
  $region7: #{analysis_prior_net.5} parent=0 // loop_footer_branch
    %8 = sbr.rel target = $region3
  $region8: #{analysis_prior_net.5} parent=0 // loop_exit
    _

</llo_original>
